<compile_context>
chip_gen: v7x
topology: tpu7x:2x2x1
jax: 0.10.0
libtpu: 0.0.40
codegen_flags: <defaults>
</compile_context>

<pallas_src>
import functools
import math

import jax
import jax.numpy as jnp
import numpy as np
from jax.experimental import pallas as pl
from jax.experimental.pallas import tpu as pltpu

# ----------------------------------------------------------------------------
# Small config consistent with Encoder(input_size, d_model, num_heads, num_layers)
# (scaled down from d_model=512 / num_layers=6 for a fast synthetic test).
# ----------------------------------------------------------------------------
VOCAB = 100
D_MODEL = 128
NUM_HEADS = 8
HEAD_DIM = D_MODEL // NUM_HEADS
D_FF = 256
NUM_LAYERS = 2
MAX_SEQ_LEN = 64
BATCH = 2
SEQ = 16
LN_EPS = 1e-5


# ----------------------------------------------------------------------------
# Fused encoder kernel
# ----------------------------------------------------------------------------
def _layernorm(y, gamma, beta):
    mean = jnp.mean(y, axis=-1, keepdims=True)
    var = jnp.mean((y - mean) ** 2, axis=-1, keepdims=True)
    return (y - mean) * jax.lax.rsqrt(var + LN_EPS) * gamma + beta


def _encoder_kernel(emb_ref, pe_ref,
                    wqkv_ref, bqkv_ref, wo_ref, bo_ref, g1_ref, be1_ref,
                    w1_ref, b1_ref, w2_ref, b2_ref, g2_ref, be2_ref,
                    o_ref, x_scratch, *,
                    num_heads, head_dim, emb_scale, attn_scale):
    """One grid step = (batch element b, layer l).

    x_scratch carries the [seq, d_model] activation across the (sequential)
    layer axis; per-layer weights are selected by the layer grid index.
    """
    layer = pl.program_id(1)

    @pl.when(layer == 0)
    def _():
        # embedding * sqrt(d_model) + positional encoding.
        # (Reference indexes the PE table by *batch* and broadcasts over the
        #  sequence axis -- quirk preserved.)
        x_scratch[...] = emb_ref[0] * emb_scale + pe_ref[0]

    x = x_scratch[...]                       # [seq, d_model], f32
    d = x.shape[-1]

    # ---- multi-head self-attention ------------------------------------
    # Fused Q/K/V projection: one [seq, d] x [d, 3d] MXU pass.
    qkv = (jnp.dot(x, wqkv_ref[0], preferred_element_type=jnp.float32)
           + bqkv_ref[0])                    # [seq, 3d]

    head_outs = []
    for h in range(num_heads):               # static, unrolled head loop
        lo = h * head_dim
        qh = qkv[:, lo:lo + head_dim]
        kh = qkv[:, d + lo:d + lo + head_dim]
        vh = qkv[:, 2 * d + lo:2 * d + lo + head_dim]
        s = jax.lax.dot_general(
            qh, kh, (((1,), (1,)), ((), ())),
            preferred_element_type=jnp.float32) * attn_scale
        s = s - jnp.max(s, axis=-1, keepdims=True)
        e = jnp.exp(s)
        p = e * pl.reciprocal(jnp.sum(e, axis=-1, keepdims=True), approx=True)
        head_outs.append(jnp.dot(p, vh, preferred_element_type=jnp.float32))
    attn = jnp.concatenate(head_outs, axis=-1)   # [seq, d], lane-dense

    att = jnp.dot(attn, wo_ref[0], preferred_element_type=jnp.float32) + bo_ref[0]
    x = x + _layernorm(att, g1_ref[0], be1_ref[0])
    # TODO(synk): dropout_1 is identity (eval mode).

    # ---- feed-forward ---------------------------------------------------
    h1 = jnp.dot(x, w1_ref[0], preferred_element_type=jnp.float32) + b1_ref[0]
    h1 = jnp.maximum(h1, 0.0)
    ff = jnp.dot(h1, w2_ref[0], preferred_element_type=jnp.float32) + b2_ref[0]
    x = x + _layernorm(ff, g2_ref[0], be2_ref[0])
    # TODO(synk): dropout_2 is identity (eval mode).

    x_scratch[...] = x
    o_ref[0] = x


def _stacked_spec(arr):
    """BlockSpec that selects one layer's slice of a [L, ...] stacked weight."""
    nd = arr.ndim
    return pl.BlockSpec((1,) + arr.shape[1:],
                        lambda b, l, _nd=nd: (l,) + (0,) * (_nd - 1))


def encoder_pallas(emb, pe_slice, w):
    bs, seq, d = emb.shape
    num_layers = w["qkv_w"].shape[0]
    weights = (w["qkv_w"], w["qkv_b"], w["o_w"], w["o_b"],
               w["ln1_g"], w["ln1_b"], w["ff1_w"], w["ff1_b"],
               w["ff2_w"], w["ff2_b"], w["ln2_g"], w["ln2_b"])
    kern = functools.partial(
        _encoder_kernel, num_heads=NUM_HEADS, head_dim=HEAD_DIM,
        emb_scale=math.sqrt(D_MODEL), attn_scale=1.0 / math.sqrt(HEAD_DIM))

    x_spec = pl.BlockSpec((1, seq, d), lambda b, l: (b, 0, 0))
    pe_spec = pl.BlockSpec((1, 1, d), lambda b, l: (b, 0, 0))

    return pl.pallas_call(
        kern,
        out_shape=jax.ShapeDtypeStruct((bs, seq, d), jnp.float32),
        grid=(bs, num_layers),
        in_specs=[x_spec, pe_spec] + [_stacked_spec(a) for a in weights],
        out_specs=x_spec,
        scratch_shapes=[pltpu.VMEM((seq, d), jnp.float32)],
        compiler_params=pltpu.CompilerParams(
            dimension_semantics=("parallel", "arbitrary")),
    )(emb, pe_slice, *weights)


# ----------------------------------------------------------------------------
# Encoder forward (embedding gather + weight stacking in JAX, rest in Pallas)
# ----------------------------------------------------------------------------
def encoder_forward(params, tokens):
    bs, seq = tokens.shape
    emb = params["embedding"][tokens]                   # gather (plain JAX)
    # Reference computes pe[:batch] (shape [bs, 1, d]) and broadcasts over seq.
    pe_slice = params["pe"][:bs][:, None, :]

    layers = params["layers"]
    stacked = {
        "qkv_w": jnp.stack([jnp.concatenate([p["q_w"], p["k_w"], p["v_w"]], axis=1)
                            for p in layers]),
        "qkv_b": jnp.stack([jnp.concatenate([p["q_b"], p["k_b"], p["v_b"]], axis=1)
                            for p in layers]),
        "o_w": jnp.stack([p["o_w"] for p in layers]),
        "o_b": jnp.stack([p["o_b"] for p in layers]),
        "ln1_g": jnp.stack([p["ln1_g"] for p in layers]),
        "ln1_b": jnp.stack([p["ln1_b"] for p in layers]),
        "ff1_w": jnp.stack([p["ff1_w"] for p in layers]),
        "ff1_b": jnp.stack([p["ff1_b"] for p in layers]),
        "ff2_w": jnp.stack([p["ff2_w"] for p in layers]),
        "ff2_b": jnp.stack([p["ff2_b"] for p in layers]),
        "ln2_g": jnp.stack([p["ln2_g"] for p in layers]),
        "ln2_b": jnp.stack([p["ln2_b"] for p in layers]),
    }
    return encoder_pallas(emb, pe_slice, stacked)


# ----------------------------------------------------------------------------
# Parameter init + pure-JAX reference for checking
# ----------------------------------------------------------------------------
def make_pe_table(max_len, d_model):
    position = np.arange(max_len, dtype=np.float32)[:, None]
    div_term = np.exp(
        np.arange(0, d_model, 2, dtype=np.float32) * (-math.log(10000.0) / d_model)
    )
    pe = np.zeros((max_len, d_model), dtype=np.float32)
    pe[:, 0::2] = np.sin(position * div_term)
    pe[:, 1::2] = np.cos(position * div_term)
    return jnp.asarray(pe)


def init_params(key):
    keys = jax.random.split(key, 1 + NUM_LAYERS)
    emb = jax.random.normal(keys[0], (VOCAB, D_MODEL), jnp.float32)

    def lin_w(k, d_in, d_out):
        return jax.random.normal(k, (d_in, d_out), jnp.float32) / math.sqrt(d_in)

    def lin_b(k, d_out):
        return 0.02 * jax.random.normal(k, (1, d_out), jnp.float32)

    layers = []
    for l in range(NUM_LAYERS):
        lk = jax.random.split(keys[1 + l], 12)
        layers.append(
            {
                "q_w": lin_w(lk[0], D_MODEL, D_MODEL), "q_b": lin_b(lk[1], D_MODEL),
                "k_w": lin_w(lk[2], D_MODEL, D_MODEL), "k_b": lin_b(lk[3], D_MODEL),
                "v_w": lin_w(lk[4], D_MODEL, D_MODEL), "v_b": lin_b(lk[5], D_MODEL),
                "o_w": lin_w(lk[6], D_MODEL, D_MODEL), "o_b": lin_b(lk[7], D_MODEL),
                "ff1_w": lin_w(lk[8], D_MODEL, D_FF), "ff1_b": lin_b(lk[9], D_FF),
                "ff2_w": lin_w(lk[10], D_FF, D_MODEL), "ff2_b": lin_b(lk[11], D_MODEL),
                "ln1_g": jnp.ones((1, D_MODEL), jnp.float32),
                "ln1_b": jnp.zeros((1, D_MODEL), jnp.float32),
                "ln2_g": jnp.ones((1, D_MODEL), jnp.float32),
                "ln2_b": jnp.zeros((1, D_MODEL), jnp.float32),
            }
        )
    return {"embedding": emb, "pe": make_pe_table(MAX_SEQ_LEN, D_MODEL), "layers": layers}


def _ref_ln(y, g, b):
    mean = jnp.mean(y, axis=-1, keepdims=True)
    var = jnp.mean((y - mean) ** 2, axis=-1, keepdims=True)
    return (y - mean) / jnp.sqrt(var + LN_EPS) * g + b


def encoder_reference(params, tokens):
    hp = jax.lax.Precision.HIGHEST
    bs, seq = tokens.shape
    x = params["embedding"][tokens] * math.sqrt(D_MODEL)
    x = x + params["pe"][:bs][:, None, :]
    for p in params["layers"]:
        q = jnp.dot(x, p["q_w"], precision=hp) + p["q_b"]
        k = jnp.dot(x, p["k_w"], precision=hp) + p["k_b"]
        v = jnp.dot(x, p["v_w"], precision=hp) + p["v_b"]

        def heads(t):
            return t.reshape(bs, seq, NUM_HEADS, HEAD_DIM).transpose(0, 2, 1, 3)

        qh, kh, vh = heads(q), heads(k), heads(v)
        s = jnp.einsum("bhqd,bhkd->bhqk", qh, kh, precision=hp) / math.sqrt(HEAD_DIM)
        a = jax.nn.softmax(s, axis=-1)
        o = jnp.einsum("bhqk,bhkd->bhqd", a, vh, precision=hp)
        o = o.transpose(0, 2, 1, 3).reshape(bs, seq, D_MODEL)
        att = jnp.dot(o, p["o_w"], precision=hp) + p["o_b"]
        x = x + _ref_ln(att, p["ln1_g"], p["ln1_b"])
        h = jnp.maximum(jnp.dot(x, p["ff1_w"], precision=hp) + p["ff1_b"], 0.0)
        ff = jnp.dot(h, p["ff2_w"], precision=hp) + p["ff2_b"]
        x = x + _ref_ln(ff, p["ln2_g"], p["ln2_b"])
    return x


if __name__ == "__main__":
    key = jax.random.PRNGKey(0)
    params = init_params(key)
    tokens = jax.random.randint(
        jax.random.fold_in(key, 999), (BATCH, SEQ), 0, VOCAB, dtype=jnp.int32
    )

    out = jax.jit(encoder_forward)(params, tokens)
    out = jax.block_until_ready(out)

    ref = encoder_reference(params, tokens)
    # Tolerance covers MXU default-precision f32 matmuls + the EUP approx
    # reciprocal in softmax vs. the HIGHEST-precision reference.
    np.testing.assert_allclose(np.asarray(out), np.asarray(ref), rtol=1e-2, atol=1e-2)
    print("KERNEL_OK")
</pallas_src>

<mosaic_0001>
module attributes {stable_mosaic.version = 11 : i64} {
  func.func @_encoder_kernel(%arg0: i32, %arg1: i32, %arg2: memref<1x16x128xf32, #tpu.memory_space<vmem>>, %arg3: memref<1x1x128xf32, #tpu.memory_space<vmem>>, %arg4: memref<1x128x384xf32, #tpu.memory_space<vmem>>, %arg5: memref<1x1x384xf32, #tpu.memory_space<vmem>>, %arg6: memref<1x128x128xf32, #tpu.memory_space<vmem>>, %arg7: memref<1x1x128xf32, #tpu.memory_space<vmem>>, %arg8: memref<1x1x128xf32, #tpu.memory_space<vmem>>, %arg9: memref<1x1x128xf32, #tpu.memory_space<vmem>>, %arg10: memref<1x128x256xf32, #tpu.memory_space<vmem>>, %arg11: memref<1x1x256xf32, #tpu.memory_space<vmem>>, %arg12: memref<1x256x128xf32, #tpu.memory_space<vmem>>, %arg13: memref<1x1x128xf32, #tpu.memory_space<vmem>>, %arg14: memref<1x1x128xf32, #tpu.memory_space<vmem>>, %arg15: memref<1x1x128xf32, #tpu.memory_space<vmem>>, %arg16: memref<1x16x128xf32, #tpu.memory_space<vmem>>, %arg17: memref<16x128xf32, #tpu.memory_space<vmem>>) attributes {dimension_semantics = [#tpu.dimension_semantics<parallel>, #tpu.dimension_semantics<arbitrary>], iteration_bounds = array<i64: 2, 2>, scalar_prefetch = 0 : i64, scratch_operands = 1 : i64, tpu.core_type = #tpu.core_type<tc>, window_params = [{transform_indices = @transform_0, window_bounds = array<i64: 1, 16, 128>}, {transform_indices = @transform_1, window_bounds = array<i64: 1, 1, 128>}, {transform_indices = @transform_2, window_bounds = array<i64: 1, 128, 384>}, {transform_indices = @transform_3, window_bounds = array<i64: 1, 1, 384>}, {transform_indices = @transform_4, window_bounds = array<i64: 1, 128, 128>}, {transform_indices = @transform_5, window_bounds = array<i64: 1, 1, 128>}, {transform_indices = @transform_6, window_bounds = array<i64: 1, 1, 128>}, {transform_indices = @transform_7, window_bounds = array<i64: 1, 1, 128>}, {transform_indices = @transform_8, window_bounds = array<i64: 1, 128, 256>}, {transform_indices = @transform_9, window_bounds = array<i64: 1, 1, 256>}, {transform_indices = @transform_10, window_bounds = array<i64: 1, 256, 128>}, {transform_indices = @transform_11, window_bounds = array<i64: 1, 1, 128>}, {transform_indices = @transform_12, window_bounds = array<i64: 1, 1, 128>}, {transform_indices = @transform_13, window_bounds = array<i64: 1, 1, 128>}, {transform_indices = @transform_14, window_bounds = array<i64: 1, 16, 128>}]} {
    %c0_i32 = arith.constant 0 : i32
    %0 = arith.cmpi eq, %arg1, %c0_i32 : i32
    %1 = arith.extui %0 : i1 to i32
    %c0_i32_0 = arith.constant 0 : i32
    %2 = arith.cmpi ne, %1, %c0_i32_0 : i32
    scf.if %2 {
      %c0_97 = arith.constant 0 : index
      %c0_98 = arith.constant 0 : index
      %c0_99 = arith.constant 0 : index
      %229 = vector.load %arg2[%c0_97, %c0_98, %c0_99] : memref<1x16x128xf32, #tpu.memory_space<vmem>>, vector<1x16x128xf32>
      %230 = vector.shape_cast %229 : vector<1x16x128xf32> to vector<16x128xf32>
      %cst_100 = arith.constant 11.3137083 : f32
      %231 = vector.broadcast %cst_100 : f32 to vector<16x128xf32>
      %232 = arith.mulf %230, %231 : vector<16x128xf32>
      %c0_101 = arith.constant 0 : index
      %c0_102 = arith.constant 0 : index
      %c0_103 = arith.constant 0 : index
      %233 = vector.load %arg3[%c0_101, %c0_102, %c0_103] : memref<1x1x128xf32, #tpu.memory_space<vmem>>, vector<1x1x128xf32>
      %234 = vector.shape_cast %233 : vector<1x1x128xf32> to vector<1x128xf32>
      %235 = vector.broadcast %234 : vector<1x128xf32> to vector<16x128xf32>
      %236 = arith.addf %232, %235 : vector<16x128xf32>
      %c0_104 = arith.constant 0 : index
      %c0_105 = arith.constant 0 : index
      %237 = vector.load %arg17[%c0_104, %c0_105] : memref<16x128xf32, #tpu.memory_space<vmem>>, vector<16x128xf32>
      tpu.vector_store %arg17[%c0_104, %c0_105], %236 {strides = array<i32>} : memref<16x128xf32, #tpu.memory_space<vmem>>, vector<16x128xf32>,
    } else {
    }
    %c0 = arith.constant 0 : index
    %c0_1 = arith.constant 0 : index
    %3 = vector.load %arg17[%c0, %c0_1] : memref<16x128xf32, #tpu.memory_space<vmem>>, vector<16x128xf32>
    %c0_2 = arith.constant 0 : index
    %c0_3 = arith.constant 0 : index
    %c0_4 = arith.constant 0 : index
    %4 = vector.load %arg4[%c0_2, %c0_3, %c0_4] : memref<1x128x384xf32, #tpu.memory_space<vmem>>, vector<1x128x384xf32>
    %5 = vector.shape_cast %4 : vector<1x128x384xf32> to vector<128x384xf32>
    %cst = arith.constant dense<0.000000e+00> : vector<16x384xf32>
    %6 = tpu.matmul %3, %5, %cst {dimension_numbers = #tpu.dot_dimension_numbers<[1], [0], [0], [1], [0, 0, 1, 1], [], []>} : vector<16x128xf32>, vector<128x384xf32>, vector<16x384xf32> -> vector<16x384xf32>
    %c0_5 = arith.constant 0 : index
    %c0_6 = arith.constant 0 : index
    %c0_7 = arith.constant 0 : index
    %7 = vector.load %arg5[%c0_5, %c0_6, %c0_7] : memref<1x1x384xf32, #tpu.memory_space<vmem>>, vector<1x1x384xf32>
    %8 = vector.shape_cast %7 : vector<1x1x384xf32> to vector<1x384xf32>
    %9 = vector.broadcast %8 : vector<1x384xf32> to vector<16x384xf32>
    %10 = arith.addf %6, %9 : vector<16x384xf32>
    %11 = vector.extract_strided_slice %10 {offsets = [0, 0], sizes = [16, 16], strides = [1, 1]} : vector<16x384xf32> to vector<16x16xf32>
    %12 = vector.extract_strided_slice %10 {offsets = [0, 128], sizes = [16, 16], strides = [1, 1]} : vector<16x384xf32> to vector<16x16xf32>
    %13 = vector.extract_strided_slice %10 {offsets = [0, 256], sizes = [16, 16], strides = [1, 1]} : vector<16x384xf32> to vector<16x16xf32>
    %cst_8 = arith.constant dense<0.000000e+00> : vector<16x16xf32>
    %14 = tpu.matmul %11, %12, %cst_8 {dimension_numbers = #tpu.dot_dimension_numbers<[1], [1], [0], [0], [0, 0, 1, 0], [], []>} : vector<16x16xf32>, vector<16x16xf32>, vector<16x16xf32> -> vector<16x16xf32>
    %cst_9 = arith.constant 2.500000e-01 : f32
    %15 = vector.broadcast %cst_9 : f32 to vector<16x16xf32>
    %16 = arith.mulf %14, %15 : vector<16x16xf32>
    %cst_10 = arith.constant dense<0xFF800000> : vector<16xf32>
    %17 = vector.multi_reduction <maximumf>, %16, %cst_10 [1] : vector<16x16xf32> to vector<16xf32>
    %18 = vector.shape_cast %17 : vector<16xf32> to vector<16x1xf32>
    %19 = vector.broadcast %18 : vector<16x1xf32> to vector<16x16xf32>
    %20 = arith.subf %16, %19 : vector<16x16xf32>
    %21 = math.exp %20 : vector<16x16xf32>
    %cst_11 = arith.constant dense<0.000000e+00> : vector<16xf32>
    %22 = vector.multi_reduction <add>, %21, %cst_11 [1] : vector<16x16xf32> to vector<16xf32>
    %23 = vector.shape_cast %22 : vector<16xf32> to vector<16x1xf32>
    %24 = tpu.reciprocal %23 {approx = true} : vector<16x1xf32> -> vector<16x1xf32>
    %25 = vector.broadcast %24 : vector<16x1xf32> to vector<16x16xf32>
    %26 = arith.mulf %21, %25 : vector<16x16xf32>
    %cst_12 = arith.constant dense<0.000000e+00> : vector<16x16xf32>
    %27 = tpu.matmul %26, %13, %cst_12 {dimension_numbers = #tpu.dot_dimension_numbers<[1], [0], [0], [1], [0, 0, 1, 1], [], []>} : vector<16x16xf32>, vector<16x16xf32>, vector<16x16xf32> -> vector<16x16xf32>
    %28 = vector.extract_strided_slice %10 {offsets = [0, 16], sizes = [16, 16], strides = [1, 1]} : vector<16x384xf32> to vector<16x16xf32>
    %29 = vector.extract_strided_slice %10 {offsets = [0, 144], sizes = [16, 16], strides = [1, 1]} : vector<16x384xf32> to vector<16x16xf32>
    %30 = vector.extract_strided_slice %10 {offsets = [0, 272], sizes = [16, 16], strides = [1, 1]} : vector<16x384xf32> to vector<16x16xf32>
    %cst_13 = arith.constant dense<0.000000e+00> : vector<16x16xf32>
    %31 = tpu.matmul %28, %29, %cst_13 {dimension_numbers = #tpu.dot_dimension_numbers<[1], [1], [0], [0], [0, 0, 1, 0], [], []>} : vector<16x16xf32>, vector<16x16xf32>, vector<16x16xf32> -> vector<16x16xf32>
    %cst_14 = arith.constant 2.500000e-01 : f32
    %32 = vector.broadcast %cst_14 : f32 to vector<16x16xf32>
    %33 = arith.mulf %31, %32 : vector<16x16xf32>
    %cst_15 = arith.constant dense<0xFF800000> : vector<16xf32>
    %34 = vector.multi_reduction <maximumf>, %33, %cst_15 [1] : vector<16x16xf32> to vector<16xf32>
    %35 = vector.shape_cast %34 : vector<16xf32> to vector<16x1xf32>
    %36 = vector.broadcast %35 : vector<16x1xf32> to vector<16x16xf32>
    %37 = arith.subf %33, %36 : vector<16x16xf32>
    %38 = math.exp %37 : vector<16x16xf32>
    %cst_16 = arith.constant dense<0.000000e+00> : vector<16xf32>
    %39 = vector.multi_reduction <add>, %38, %cst_16 [1] : vector<16x16xf32> to vector<16xf32>
    %40 = vector.shape_cast %39 : vector<16xf32> to vector<16x1xf32>
    %41 = tpu.reciprocal %40 {approx = true} : vector<16x1xf32> -> vector<16x1xf32>
    %42 = vector.broadcast %41 : vector<16x1xf32> to vector<16x16xf32>
    %43 = arith.mulf %38, %42 : vector<16x16xf32>
    %cst_17 = arith.constant dense<0.000000e+00> : vector<16x16xf32>
    %44 = tpu.matmul %43, %30, %cst_17 {dimension_numbers = #tpu.dot_dimension_numbers<[1], [0], [0], [1], [0, 0, 1, 1], [], []>} : vector<16x16xf32>, vector<16x16xf32>, vector<16x16xf32> -> vector<16x16xf32>
    %45 = vector.extract_strided_slice %10 {offsets = [0, 32], sizes = [16, 16], strides = [1, 1]} : vector<16x384xf32> to vector<16x16xf32>
    %46 = vector.extract_strided_slice %10 {offsets = [0, 160], sizes = [16, 16], strides = [1, 1]} : vector<16x384xf32> to vector<16x16xf32>
    %47 = vector.extract_strided_slice %10 {offsets = [0, 288], sizes = [16, 16], strides = [1, 1]} : vector<16x384xf32> to vector<16x16xf32>
    %cst_18 = arith.constant dense<0.000000e+00> : vector<16x16xf32>
    %48 = tpu.matmul %45, %46, %cst_18 {dimension_numbers = #tpu.dot_dimension_numbers<[1], [1], [0], [0], [0, 0, 1, 0], [], []>} : vector<16x16xf32>, vector<16x16xf32>, vector<16x16xf32> -> vector<16x16xf32>
    %cst_19 = arith.constant 2.500000e-01 : f32
    %49 = vector.broadcast %cst_19 : f32 to vector<16x16xf32>
    %50 = arith.mulf %48, %49 : vector<16x16xf32>
    %cst_20 = arith.constant dense<0xFF800000> : vector<16xf32>
    %51 = vector.multi_reduction <maximumf>, %50, %cst_20 [1] : vector<16x16xf32> to vector<16xf32>
    %52 = vector.shape_cast %51 : vector<16xf32> to vector<16x1xf32>
    %53 = vector.broadcast %52 : vector<16x1xf32> to vector<16x16xf32>
    %54 = arith.subf %50, %53 : vector<16x16xf32>
    %55 = math.exp %54 : vector<16x16xf32>
    %cst_21 = arith.constant dense<0.000000e+00> : vector<16xf32>
    %56 = vector.multi_reduction <add>, %55, %cst_21 [1] : vector<16x16xf32> to vector<16xf32>
    %57 = vector.shape_cast %56 : vector<16xf32> to vector<16x1xf32>
    %58 = tpu.reciprocal %57 {approx = true} : vector<16x1xf32> -> vector<16x1xf32>
    %59 = vector.broadcast %58 : vector<16x1xf32> to vector<16x16xf32>
    %60 = arith.mulf %55, %59 : vector<16x16xf32>
    %cst_22 = arith.constant dense<0.000000e+00> : vector<16x16xf32>
    %61 = tpu.matmul %60, %47, %cst_22 {dimension_numbers = #tpu.dot_dimension_numbers<[1], [0], [0], [1], [0, 0, 1, 1], [], []>} : vector<16x16xf32>, vector<16x16xf32>, vector<16x16xf32> -> vector<16x16xf32>
    %62 = vector.extract_strided_slice %10 {offsets = [0, 48], sizes = [16, 16], strides = [1, 1]} : vector<16x384xf32> to vector<16x16xf32>
    %63 = vector.extract_strided_slice %10 {offsets = [0, 176], sizes = [16, 16], strides = [1, 1]} : vector<16x384xf32> to vector<16x16xf32>
    %64 = vector.extract_strided_slice %10 {offsets = [0, 304], sizes = [16, 16], strides = [1, 1]} : vector<16x384xf32> to vector<16x16xf32>
    %cst_23 = arith.constant dense<0.000000e+00> : vector<16x16xf32>
    %65 = tpu.matmul %62, %63, %cst_23 {dimension_numbers = #tpu.dot_dimension_numbers<[1], [1], [0], [0], [0, 0, 1, 0], [], []>} : vector<16x16xf32>, vector<16x16xf32>, vector<16x16xf32> -> vector<16x16xf32>
    %cst_24 = arith.constant 2.500000e-01 : f32
    %66 = vector.broadcast %cst_24 : f32 to vector<16x16xf32>
    %67 = arith.mulf %65, %66 : vector<16x16xf32>
    %cst_25 = arith.constant dense<0xFF800000> : vector<16xf32>
    %68 = vector.multi_reduction <maximumf>, %67, %cst_25 [1] : vector<16x16xf32> to vector<16xf32>
    %69 = vector.shape_cast %68 : vector<16xf32> to vector<16x1xf32>
    %70 = vector.broadcast %69 : vector<16x1xf32> to vector<16x16xf32>
    %71 = arith.subf %67, %70 : vector<16x16xf32>
    %72 = math.exp %71 : vector<16x16xf32>
    %cst_26 = arith.constant dense<0.000000e+00> : vector<16xf32>
    %73 = vector.multi_reduction <add>, %72, %cst_26 [1] : vector<16x16xf32> to vector<16xf32>
    %74 = vector.shape_cast %73 : vector<16xf32> to vector<16x1xf32>
    %75 = tpu.reciprocal %74 {approx = true} : vector<16x1xf32> -> vector<16x1xf32>
    %76 = vector.broadcast %75 : vector<16x1xf32> to vector<16x16xf32>
    %77 = arith.mulf %72, %76 : vector<16x16xf32>
    %cst_27 = arith.constant dense<0.000000e+00> : vector<16x16xf32>
    %78 = tpu.matmul %77, %64, %cst_27 {dimension_numbers = #tpu.dot_dimension_numbers<[1], [0], [0], [1], [0, 0, 1, 1], [], []>} : vector<16x16xf32>, vector<16x16xf32>, vector<16x16xf32> -> vector<16x16xf32>
    %79 = vector.extract_strided_slice %10 {offsets = [0, 64], sizes = [16, 16], strides = [1, 1]} : vector<16x384xf32> to vector<16x16xf32>
    %80 = vector.extract_strided_slice %10 {offsets = [0, 192], sizes = [16, 16], strides = [1, 1]} : vector<16x384xf32> to vector<16x16xf32>
    %81 = vector.extract_strided_slice %10 {offsets = [0, 320], sizes = [16, 16], strides = [1, 1]} : vector<16x384xf32> to vector<16x16xf32>
    %cst_28 = arith.constant dense<0.000000e+00> : vector<16x16xf32>
    %82 = tpu.matmul %79, %80, %cst_28 {dimension_numbers = #tpu.dot_dimension_numbers<[1], [1], [0], [0], [0, 0, 1, 0], [], []>} : vector<16x16xf32>, vector<16x16xf32>, vector<16x16xf32> -> vector<16x16xf32>
    %cst_29 = arith.constant 2.500000e-01 : f32
    %83 = vector.broadcast %cst_29 : f32 to vector<16x16xf32>
    %84 = arith.mulf %82, %83 : vector<16x16xf32>
    %cst_30 = arith.constant dense<0xFF800000> : vector<16xf32>
    %85 = vector.multi_reduction <maximumf>, %84, %cst_30 [1] : vector<16x16xf32> to vector<16xf32>
    %86 = vector.shape_cast %85 : vector<16xf32> to vector<16x1xf32>
    %87 = vector.broadcast %86 : vector<16x1xf32> to vector<16x16xf32>
    %88 = arith.subf %84, %87 : vector<16x16xf32>
    %89 = math.exp %88 : vector<16x16xf32>
    %cst_31 = arith.constant dense<0.000000e+00> : vector<16xf32>
    %90 = vector.multi_reduction <add>, %89, %cst_31 [1] : vector<16x16xf32> to vector<16xf32>
    %91 = vector.shape_cast %90 : vector<16xf32> to vector<16x1xf32>
    %92 = tpu.reciprocal %91 {approx = true} : vector<16x1xf32> -> vector<16x1xf32>
    %93 = vector.broadcast %92 : vector<16x1xf32> to vector<16x16xf32>
    %94 = arith.mulf %89, %93 : vector<16x16xf32>
    %cst_32 = arith.constant dense<0.000000e+00> : vector<16x16xf32>
    %95 = tpu.matmul %94, %81, %cst_32 {dimension_numbers = #tpu.dot_dimension_numbers<[1], [0], [0], [1], [0, 0, 1, 1], [], []>} : vector<16x16xf32>, vector<16x16xf32>, vector<16x16xf32> -> vector<16x16xf32>
    %96 = vector.extract_strided_slice %10 {offsets = [0, 80], sizes = [16, 16], strides = [1, 1]} : vector<16x384xf32> to vector<16x16xf32>
    %97 = vector.extract_strided_slice %10 {offsets = [0, 208], sizes = [16, 16], strides = [1, 1]} : vector<16x384xf32> to vector<16x16xf32>
    %98 = vector.extract_strided_slice %10 {offsets = [0, 336], sizes = [16, 16], strides = [1, 1]} : vector<16x384xf32> to vector<16x16xf32>
    %cst_33 = arith.constant dense<0.000000e+00> : vector<16x16xf32>
    %99 = tpu.matmul %96, %97, %cst_33 {dimension_numbers = #tpu.dot_dimension_numbers<[1], [1], [0], [0], [0, 0, 1, 0], [], []>} : vector<16x16xf32>, vector<16x16xf32>, vector<16x16xf32> -> vector<16x16xf32>
    %cst_34 = arith.constant 2.500000e-01 : f32
    %100 = vector.broadcast %cst_34 : f32 to vector<16x16xf32>
    %101 = arith.mulf %99, %100 : vector<16x16xf32>
    %cst_35 = arith.constant dense<0xFF800000> : vector<16xf32>
    %102 = vector.multi_reduction <maximumf>, %101, %cst_35 [1] : vector<16x16xf32> to vector<16xf32>
    %103 = vector.shape_cast %102 : vector<16xf32> to vector<16x1xf32>
    %104 = vector.broadcast %103 : vector<16x1xf32> to vector<16x16xf32>
    %105 = arith.subf %101, %104 : vector<16x16xf32>
    %106 = math.exp %105 : vector<16x16xf32>
    %cst_36 = arith.constant dense<0.000000e+00> : vector<16xf32>
    %107 = vector.multi_reduction <add>, %106, %cst_36 [1] : vector<16x16xf32> to vector<16xf32>
    %108 = vector.shape_cast %107 : vector<16xf32> to vector<16x1xf32>
    %109 = tpu.reciprocal %108 {approx = true} : vector<16x1xf32> -> vector<16x1xf32>
    %110 = vector.broadcast %109 : vector<16x1xf32> to vector<16x16xf32>
    %111 = arith.mulf %106, %110 : vector<16x16xf32>
    %cst_37 = arith.constant dense<0.000000e+00> : vector<16x16xf32>
    %112 = tpu.matmul %111, %98, %cst_37 {dimension_numbers = #tpu.dot_dimension_numbers<[1], [0], [0], [1], [0, 0, 1, 1], [], []>} : vector<16x16xf32>, vector<16x16xf32>, vector<16x16xf32> -> vector<16x16xf32>
    %113 = vector.extract_strided_slice %10 {offsets = [0, 96], sizes = [16, 16], strides = [1, 1]} : vector<16x384xf32> to vector<16x16xf32>
    %114 = vector.extract_strided_slice %10 {offsets = [0, 224], sizes = [16, 16], strides = [1, 1]} : vector<16x384xf32> to vector<16x16xf32>
    %115 = vector.extract_strided_slice %10 {offsets = [0, 352], sizes = [16, 16], strides = [1, 1]} : vector<16x384xf32> to vector<16x16xf32>
    %cst_38 = arith.constant dense<0.000000e+00> : vector<16x16xf32>
    %116 = tpu.matmul %113, %114, %cst_38 {dimension_numbers = #tpu.dot_dimension_numbers<[1], [1], [0], [0], [0, 0, 1, 0], [], []>} : vector<16x16xf32>, vector<16x16xf32>, vector<16x16xf32> -> vector<16x16xf32>
    %cst_39 = arith.constant 2.500000e-01 : f32
    %117 = vector.broadcast %cst_39 : f32 to vector<16x16xf32>
    %118 = arith.mulf %116, %117 : vector<16x16xf32>
    %cst_40 = arith.constant dense<0xFF800000> : vector<16xf32>
    %119 = vector.multi_reduction <maximumf>, %118, %cst_40 [1] : vector<16x16xf32> to vector<16xf32>
    %120 = vector.shape_cast %119 : vector<16xf32> to vector<16x1xf32>
    %121 = vector.broadcast %120 : vector<16x1xf32> to vector<16x16xf32>
    %122 = arith.subf %118, %121 : vector<16x16xf32>
    %123 = math.exp %122 : vector<16x16xf32>
    %cst_41 = arith.constant dense<0.000000e+00> : vector<16xf32>
    %124 = vector.multi_reduction <add>, %123, %cst_41 [1] : vector<16x16xf32> to vector<16xf32>
    %125 = vector.shape_cast %124 : vector<16xf32> to vector<16x1xf32>
    %126 = tpu.reciprocal %125 {approx = true} : vector<16x1xf32> -> vector<16x1xf32>
    %127 = vector.broadcast %126 : vector<16x1xf32> to vector<16x16xf32>
    %128 = arith.mulf %123, %127 : vector<16x16xf32>
    %cst_42 = arith.constant dense<0.000000e+00> : vector<16x16xf32>
    %129 = tpu.matmul %128, %115, %cst_42 {dimension_numbers = #tpu.dot_dimension_numbers<[1], [0], [0], [1], [0, 0, 1, 1], [], []>} : vector<16x16xf32>, vector<16x16xf32>, vector<16x16xf32> -> vector<16x16xf32>
    %130 = vector.extract_strided_slice %10 {offsets = [0, 112], sizes = [16, 16], strides = [1, 1]} : vector<16x384xf32> to vector<16x16xf32>
    %131 = vector.extract_strided_slice %10 {offsets = [0, 240], sizes = [16, 16], strides = [1, 1]} : vector<16x384xf32> to vector<16x16xf32>
    %132 = vector.extract_strided_slice %10 {offsets = [0, 368], sizes = [16, 16], strides = [1, 1]} : vector<16x384xf32> to vector<16x16xf32>
    %cst_43 = arith.constant dense<0.000000e+00> : vector<16x16xf32>
    %133 = tpu.matmul %130, %131, %cst_43 {dimension_numbers = #tpu.dot_dimension_numbers<[1], [1], [0], [0], [0, 0, 1, 0], [], []>} : vector<16x16xf32>, vector<16x16xf32>, vector<16x16xf32> -> vector<16x16xf32>
    %cst_44 = arith.constant 2.500000e-01 : f32
    %134 = vector.broadcast %cst_44 : f32 to vector<16x16xf32>
    %135 = arith.mulf %133, %134 : vector<16x16xf32>
    %cst_45 = arith.constant dense<0xFF800000> : vector<16xf32>
    %136 = vector.multi_reduction <maximumf>, %135, %cst_45 [1] : vector<16x16xf32> to vector<16xf32>
    %137 = vector.shape_cast %136 : vector<16xf32> to vector<16x1xf32>
    %138 = vector.broadcast %137 : vector<16x1xf32> to vector<16x16xf32>
    %139 = arith.subf %135, %138 : vector<16x16xf32>
    %140 = math.exp %139 : vector<16x16xf32>
    %cst_46 = arith.constant dense<0.000000e+00> : vector<16xf32>
    %141 = vector.multi_reduction <add>, %140, %cst_46 [1] : vector<16x16xf32> to vector<16xf32>
    %142 = vector.shape_cast %141 : vector<16xf32> to vector<16x1xf32>
    %143 = tpu.reciprocal %142 {approx = true} : vector<16x1xf32> -> vector<16x1xf32>
    %144 = vector.broadcast %143 : vector<16x1xf32> to vector<16x16xf32>
    %145 = arith.mulf %140, %144 : vector<16x16xf32>
    %cst_47 = arith.constant dense<0.000000e+00> : vector<16x16xf32>
    %146 = tpu.matmul %145, %132, %cst_47 {dimension_numbers = #tpu.dot_dimension_numbers<[1], [0], [0], [1], [0, 0, 1, 1], [], []>} : vector<16x16xf32>, vector<16x16xf32>, vector<16x16xf32> -> vector<16x16xf32>
    %147 = tpu.concatenate %27, %44, %61, %78, %95, %112, %129, %146 in 1 : vector<16x16xf32>, vector<16x16xf32>, vector<16x16xf32>, vector<16x16xf32>, vector<16x16xf32>, vector<16x16xf32>, vector<16x16xf32>, vector<16x16xf32> -> vector<16x128xf32>
    %c0_48 = arith.constant 0 : index
    %c0_49 = arith.constant 0 : index
    %c0_50 = arith.constant 0 : index
    %148 = vector.load %arg6[%c0_48, %c0_49, %c0_50] : memref<1x128x128xf32, #tpu.memory_space<vmem>>, vector<1x128x128xf32>
    %149 = vector.shape_cast %148 : vector<1x128x128xf32> to vector<128x128xf32>
    %cst_51 = arith.constant dense<0.000000e+00> : vector<16x128xf32>
    %150 = tpu.matmul %147, %149, %cst_51 {dimension_numbers = #tpu.dot_dimension_numbers<[1], [0], [0], [1], [0, 0, 1, 1], [], []>} : vector<16x128xf32>, vector<128x128xf32>, vector<16x128xf32> -> vector<16x128xf32>
    %c0_52 = arith.constant 0 : index
    %c0_53 = arith.constant 0 : index
    %c0_54 = arith.constant 0 : index
    %151 = vector.load %arg7[%c0_52, %c0_53, %c0_54] : memref<1x1x128xf32, #tpu.memory_space<vmem>>, vector<1x1x128xf32>
    %152 = vector.shape_cast %151 : vector<1x1x128xf32> to vector<1x128xf32>
    %153 = vector.broadcast %152 : vector<1x128xf32> to vector<16x128xf32>
    %154 = arith.addf %150, %153 : vector<16x128xf32>
    %c0_55 = arith.constant 0 : index
    %c0_56 = arith.constant 0 : index
    %c0_57 = arith.constant 0 : index
    %155 = vector.load %arg8[%c0_55, %c0_56, %c0_57] : memref<1x1x128xf32, #tpu.memory_space<vmem>>, vector<1x1x128xf32>
    %156 = vector.shape_cast %155 : vector<1x1x128xf32> to vector<1x128xf32>
    %c0_58 = arith.constant 0 : index
    %c0_59 = arith.constant 0 : index
    %c0_60 = arith.constant 0 : index
    %157 = vector.load %arg9[%c0_58, %c0_59, %c0_60] : memref<1x1x128xf32, #tpu.memory_space<vmem>>, vector<1x1x128xf32>
    %158 = vector.shape_cast %157 : vector<1x1x128xf32> to vector<1x128xf32>
    %cst_61 = arith.constant dense<0.000000e+00> : vector<16xf32>
    %159 = vector.multi_reduction <add>, %154, %cst_61 [1] : vector<16x128xf32> to vector<16xf32>
    %160 = vector.shape_cast %159 : vector<16xf32> to vector<16x1xf32>
    %cst_62 = arith.constant 1.280000e+02 : f32
    %161 = vector.broadcast %cst_62 : f32 to vector<16x1xf32>
    %162 = arith.divf %160, %161 : vector<16x1xf32>
    %163 = vector.broadcast %162 : vector<16x1xf32> to vector<16x128xf32>
    %164 = arith.subf %154, %163 : vector<16x128xf32>
    %165 = arith.mulf %164, %164 : vector<16x128xf32>
    %cst_63 = arith.constant dense<0.000000e+00> : vector<16xf32>
    %166 = vector.multi_reduction <add>, %165, %cst_63 [1] : vector<16x128xf32> to vector<16xf32>
    %167 = vector.shape_cast %166 : vector<16xf32> to vector<16x1xf32>
    %cst_64 = arith.constant 1.280000e+02 : f32
    %168 = vector.broadcast %cst_64 : f32 to vector<16x1xf32>
    %169 = arith.divf %167, %168 : vector<16x1xf32>
    %170 = vector.broadcast %162 : vector<16x1xf32> to vector<16x128xf32>
    %171 = arith.subf %154, %170 : vector<16x128xf32>
    %cst_65 = arith.constant 9.99999974E-6 : f32
    %172 = vector.broadcast %cst_65 : f32 to vector<16x1xf32>
    %173 = arith.addf %169, %172 : vector<16x1xf32>
    %174 = math.rsqrt %173 : vector<16x1xf32>
    %175 = vector.broadcast %174 : vector<16x1xf32> to vector<16x128xf32>
    %176 = arith.mulf %171, %175 : vector<16x128xf32>
    %177 = vector.broadcast %156 : vector<1x128xf32> to vector<16x128xf32>
    %178 = arith.mulf %176, %177 : vector<16x128xf32>
    %179 = vector.broadcast %158 : vector<1x128xf32> to vector<16x128xf32>
    %180 = arith.addf %178, %179 : vector<16x128xf32>
    %181 = arith.addf %3, %180 : vector<16x128xf32>
    %c0_66 = arith.constant 0 : index
    %c0_67 = arith.constant 0 : index
    %c0_68 = arith.constant 0 : index
    %182 = vector.load %arg10[%c0_66, %c0_67, %c0_68] : memref<1x128x256xf32, #tpu.memory_space<vmem>>, vector<1x128x256xf32>
    %183 = vector.shape_cast %182 : vector<1x128x256xf32> to vector<128x256xf32>
    %cst_69 = arith.constant dense<0.000000e+00> : vector<16x256xf32>
    %184 = tpu.matmul %181, %183, %cst_69 {dimension_numbers = #tpu.dot_dimension_numbers<[1], [0], [0], [1], [0, 0, 1, 1], [], []>} : vector<16x128xf32>, vector<128x256xf32>, vector<16x256xf32> -> vector<16x256xf32>
    %c0_70 = arith.constant 0 : index
    %c0_71 = arith.constant 0 : index
    %c0_72 = arith.constant 0 : index
    %185 = vector.load %arg11[%c0_70, %c0_71, %c0_72] : memref<1x1x256xf32, #tpu.memory_space<vmem>>, vector<1x1x256xf32>
    %186 = vector.shape_cast %185 : vector<1x1x256xf32> to vector<1x256xf32>
    %187 = vector.broadcast %186 : vector<1x256xf32> to vector<16x256xf32>
    %188 = arith.addf %184, %187 : vector<16x256xf32>
    %cst_73 = arith.constant 0.000000e+00 : f32
    %189 = vector.broadcast %cst_73 : f32 to vector<16x256xf32>
    %190 = arith.maximumf %188, %189 : vector<16x256xf32>
    %c0_74 = arith.constant 0 : index
    %c0_75 = arith.constant 0 : index
    %c0_76 = arith.constant 0 : index
    %191 = vector.load %arg12[%c0_74, %c0_75, %c0_76] : memref<1x256x128xf32, #tpu.memory_space<vmem>>, vector<1x256x128xf32>
    %192 = vector.shape_cast %191 : vector<1x256x128xf32> to vector<256x128xf32>
    %cst_77 = arith.constant dense<0.000000e+00> : vector<16x128xf32>
    %193 = tpu.matmul %190, %192, %cst_77 {dimension_numbers = #tpu.dot_dimension_numbers<[1], [0], [0], [1], [0, 0, 1, 1], [], []>} : vector<16x256xf32>, vector<256x128xf32>, vector<16x128xf32> -> vector<16x128xf32>
    %c0_78 = arith.constant 0 : index
    %c0_79 = arith.constant 0 : index
    %c0_80 = arith.constant 0 : index
    %194 = vector.load %arg13[%c0_78, %c0_79, %c0_80] : memref<1x1x128xf32, #tpu.memory_space<vmem>>, vector<1x1x128xf32>
    %195 = vector.shape_cast %194 : vector<1x1x128xf32> to vector<1x128xf32>
    %196 = vector.broadcast %195 : vector<1x128xf32> to vector<16x128xf32>
    %197 = arith.addf %193, %196 : vector<16x128xf32>
    %c0_81 = arith.constant 0 : index
    %c0_82 = arith.constant 0 : index
    %c0_83 = arith.constant 0 : index
    %198 = vector.load %arg14[%c0_81, %c0_82, %c0_83] : memref<1x1x128xf32, #tpu.memory_space<vmem>>, vector<1x1x128xf32>
    %199 = vector.shape_cast %198 : vector<1x1x128xf32> to vector<1x128xf32>
    %c0_84 = arith.constant 0 : index
    %c0_85 = arith.constant 0 : index
    %c0_86 = arith.constant 0 : index
    %200 = vector.load %arg15[%c0_84, %c0_85, %c0_86] : memref<1x1x128xf32, #tpu.memory_space<vmem>>, vector<1x1x128xf32>
    %201 = vector.shape_cast %200 : vector<1x1x128xf32> to vector<1x128xf32>
    %cst_87 = arith.constant dense<0.000000e+00> : vector<16xf32>
    %202 = vector.multi_reduction <add>, %197, %cst_87 [1] : vector<16x128xf32> to vector<16xf32>
    %203 = vector.shape_cast %202 : vector<16xf32> to vector<16x1xf32>
    %cst_88 = arith.constant 1.280000e+02 : f32
    %204 = vector.broadcast %cst_88 : f32 to vector<16x1xf32>
    %205 = arith.divf %203, %204 : vector<16x1xf32>
    %206 = vector.broadcast %205 : vector<16x1xf32> to vector<16x128xf32>
    %207 = arith.subf %197, %206 : vector<16x128xf32>
    %208 = arith.mulf %207, %207 : vector<16x128xf32>
    %cst_89 = arith.constant dense<0.000000e+00> : vector<16xf32>
    %209 = vector.multi_reduction <add>, %208, %cst_89 [1] : vector<16x128xf32> to vector<16xf32>
    %210 = vector.shape_cast %209 : vector<16xf32> to vector<16x1xf32>
    %cst_90 = arith.constant 1.280000e+02 : f32
    %211 = vector.broadcast %cst_90 : f32 to vector<16x1xf32>
    %212 = arith.divf %210, %211 : vector<16x1xf32>
    %213 = vector.broadcast %205 : vector<16x1xf32> to vector<16x128xf32>
    %214 = arith.subf %197, %213 : vector<16x128xf32>
    %cst_91 = arith.constant 9.99999974E-6 : f32
    %215 = vector.broadcast %cst_91 : f32 to vector<16x1xf32>
    %216 = arith.addf %212, %215 : vector<16x1xf32>
    %217 = math.rsqrt %216 : vector<16x1xf32>
    %218 = vector.broadcast %217 : vector<16x1xf32> to vector<16x128xf32>
    %219 = arith.mulf %214, %218 : vector<16x128xf32>
    %220 = vector.broadcast %199 : vector<1x128xf32> to vector<16x128xf32>
    %221 = arith.mulf %219, %220 : vector<16x128xf32>
    %222 = vector.broadcast %201 : vector<1x128xf32> to vector<16x128xf32>
    %223 = arith.addf %221, %222 : vector<16x128xf32>
    %224 = arith.addf %181, %223 : vector<16x128xf32>
    %c0_92 = arith.constant 0 : index
    %c0_93 = arith.constant 0 : index
    %225 = vector.load %arg17[%c0_92, %c0_93] : memref<16x128xf32, #tpu.memory_space<vmem>>, vector<16x128xf32>
    tpu.vector_store %arg17[%c0_92, %c0_93], %224 {strides = array<i32>} : memref<16x128xf32, #tpu.memory_space<vmem>>, vector<16x128xf32>,
    %c0_94 = arith.constant 0 : index
    %c0_95 = arith.constant 0 : index
    %c0_96 = arith.constant 0 : index
    %226 = vector.load %arg16[%c0_94, %c0_95, %c0_96] : memref<1x16x128xf32, #tpu.memory_space<vmem>>, vector<1x16x128xf32>
    %227 = vector.shape_cast %226 : vector<1x16x128xf32> to vector<16x128xf32>
    %228 = vector.shape_cast %224 : vector<16x128xf32> to vector<1x16x128xf32>
    tpu.vector_store %arg16[%c0_94, %c0_95, %c0_96], %228 {strides = array<i32>} : memref<1x16x128xf32, #tpu.memory_space<vmem>>, vector<1x16x128xf32>,
    return
  }
  func.func @transform_0(%arg0: i32, %arg1: i32) -> (i32, i32, i32) {
    %c0_i32 = arith.constant 0 : i32
    %c0_i32_0 = arith.constant 0 : i32
    %c0_i32_1 = arith.constant 0 : i32
    return %arg0, %c0_i32, %c0_i32_0 : i32, i32, i32
  }
  func.func @transform_1(%arg0: i32, %arg1: i32) -> (i32, i32, i32) {
    %c0_i32 = arith.constant 0 : i32
    %c0_i32_0 = arith.constant 0 : i32
    %c0_i32_1 = arith.constant 0 : i32
    return %arg0, %c0_i32, %c0_i32_0 : i32, i32, i32
  }
  func.func @transform_2(%arg0: i32, %arg1: i32) -> (i32, i32, i32) {
    %c0_i32 = arith.constant 0 : i32
    %c0_i32_0 = arith.constant 0 : i32
    %c0_i32_1 = arith.constant 0 : i32
    return %arg1, %c0_i32, %c0_i32_0 : i32, i32, i32
  }
  func.func @transform_3(%arg0: i32, %arg1: i32) -> (i32, i32, i32) {
    %c0_i32 = arith.constant 0 : i32
    %c0_i32_0 = arith.constant 0 : i32
    %c0_i32_1 = arith.constant 0 : i32
    return %arg1, %c0_i32, %c0_i32_0 : i32, i32, i32
  }
  func.func @transform_4(%arg0: i32, %arg1: i32) -> (i32, i32, i32) {
    %c0_i32 = arith.constant 0 : i32
    %c0_i32_0 = arith.constant 0 : i32
    %c0_i32_1 = arith.constant 0 : i32
    return %arg1, %c0_i32, %c0_i32_0 : i32, i32, i32
  }
  func.func @transform_5(%arg0: i32, %arg1: i32) -> (i32, i32, i32) {
    %c0_i32 = arith.constant 0 : i32
    %c0_i32_0 = arith.constant 0 : i32
    %c0_i32_1 = arith.constant 0 : i32
    return %arg1, %c0_i32, %c0_i32_0 : i32, i32, i32
  }
  func.func @transform_6(%arg0: i32, %arg1: i32) -> (i32, i32, i32) {
    %c0_i32 = arith.constant 0 : i32
    %c0_i32_0 = arith.constant 0 : i32
    %c0_i32_1 = arith.constant 0 : i32
    return %arg1, %c0_i32, %c0_i32_0 : i32, i32, i32
  }
  func.func @transform_7(%arg0: i32, %arg1: i32) -> (i32, i32, i32) {
    %c0_i32 = arith.constant 0 : i32
    %c0_i32_0 = arith.constant 0 : i32
    %c0_i32_1 = arith.constant 0 : i32
    return %arg1, %c0_i32, %c0_i32_0 : i32, i32, i32
  }
  func.func @transform_8(%arg0: i32, %arg1: i32) -> (i32, i32, i32) {
    %c0_i32 = arith.constant 0 : i32
    %c0_i32_0 = arith.constant 0 : i32
    %c0_i32_1 = arith.constant 0 : i32
    return %arg1, %c0_i32, %c0_i32_0 : i32, i32, i32
  }
  func.func @transform_9(%arg0: i32, %arg1: i32) -> (i32, i32, i32) {
    %c0_i32 = arith.constant 0 : i32
    %c0_i32_0 = arith.constant 0 : i32
    %c0_i32_1 = arith.constant 0 : i32
    return %arg1, %c0_i32, %c0_i32_0 : i32, i32, i32
  }
  func.func @transform_10(%arg0: i32, %arg1: i32) -> (i32, i32, i32) {
    %c0_i32 = arith.constant 0 : i32
    %c0_i32_0 = arith.constant 0 : i32
    %c0_i32_1 = arith.constant 0 : i32
    return %arg1, %c0_i32, %c0_i32_0 : i32, i32, i32
  }
  func.func @transform_11(%arg0: i32, %arg1: i32) -> (i32, i32, i32) {
    %c0_i32 = arith.constant 0 : i32
    %c0_i32_0 = arith.constant 0 : i32
    %c0_i32_1 = arith.constant 0 : i32
    return %arg1, %c0_i32, %c0_i32_0 : i32, i32, i32
  }
  func.func @transform_12(%arg0: i32, %arg1: i32) -> (i32, i32, i32) {
    %c0_i32 = arith.constant 0 : i32
    %c0_i32_0 = arith.constant 0 : i32
    %c0_i32_1 = arith.constant 0 : i32
    return %arg1, %c0_i32, %c0_i32_0 : i32, i32, i32
  }
  func.func @transform_13(%arg0: i32, %arg1: i32) -> (i32, i32, i32) {
    %c0_i32 = arith.constant 0 : i32
    %c0_i32_0 = arith.constant 0 : i32
    %c0_i32_1 = arith.constant 0 : i32
    return %arg1, %c0_i32, %c0_i32_0 : i32, i32, i32
  }
  func.func @transform_14(%arg0: i32, %arg1: i32) -> (i32, i32, i32) {
    %c0_i32 = arith.constant 0 : i32
    %c0_i32_0 = arith.constant 0 : i32
    %c0_i32_1 = arith.constant 0 : i32
    return %arg0, %c0_i32, %c0_i32_0 : i32, i32, i32
  }
}

</mosaic_0001>

<llo_original>
// kernel: encoder_forward.1
$region0: #{encoder_forward.1}
  #allocation0 [shape = 'u32[]', space=smem, size = 0x4, offset = 0x4, fixed_abs, tag = 'smem constant byte address 0x4 - core index']
  #allocation1 [shape = 'u32[144,128]{1,0:T(1,128)}', space=vmem, size = 0x12000, scoped, tag = 'internal scratch']
  #allocation2 [shape = 'f32[16,128]{1,0:T(8,128)}', space=vmem, size = 0x2000, scoped, tag = 'scratch operand']
  %s0 = inlined_call_operand.vmem [shape: f32[2,16,128], index: 0, kind: input, shape index: {}]
  %s1 = inlined_call_operand.vmem [shape: f32[2,1,128], index: 1, kind: input, shape index: {}]
  %s2 = inlined_call_operand.vmem [shape: f32[2,128,384], index: 2, kind: input, shape index: {}]
  %s3 = inlined_call_operand.vmem [shape: f32[2,1,384], index: 3, kind: input, shape index: {}]
  %s4 = inlined_call_operand.vmem [shape: f32[2,128,128], index: 4, kind: input, shape index: {}]
  %s5 = inlined_call_operand.vmem [shape: f32[2,1,128], index: 5, kind: input, shape index: {}]
  %s6 = inlined_call_operand.vmem [shape: f32[2,1,128], index: 6, kind: input, shape index: {}]
  %s7 = inlined_call_operand.vmem [shape: f32[2,1,128], index: 7, kind: input, shape index: {}]
  %s8 = inlined_call_operand.vmem [shape: f32[2,128,256], index: 8, kind: input, shape index: {}]
  %s9 = inlined_call_operand.vmem [shape: f32[2,1,256], index: 9, kind: input, shape index: {}]
  %s10 = inlined_call_operand.vmem [shape: f32[2,256,128], index: 10, kind: input, shape index: {}]
  %s11 = inlined_call_operand.vmem [shape: f32[2,1,128], index: 11, kind: input, shape index: {}]
  %s12 = inlined_call_operand.vmem [shape: f32[2,1,128], index: 12, kind: input, shape index: {}]
  %s13 = inlined_call_operand.vmem [shape: f32[2,1,128], index: 13, kind: input, shape index: {}]
  %s14 = inlined_call_operand.hbm [shape: f32[2,16,128], index: 14, kind: output, shape index: {}]
  %s15 = sld [smem:[#allocation0]]
  $region93: #{encoder_forward.1} parent=0
    _
  %s17 = ssub.s32 1, %s15
  %s18 = scalar_select 0, %s17, %s15
  $region1: #{encoder_forward.1} parent=0
    #allocation3 [shape = 'u8[16384]{0}', space=vmem, size = 0x4000, scoped, tag = 'output window, operand 0']
    #allocation4 [shape = 's32[2]{0}', space=sflag, size = 0x8, scoped, tag = 'scoped memory for encoder_forward.1']
    %19 = vsyncpa [#allocation4], 0
    %s20 = scalar_lea.sflag [#allocation4], 1
    %21 = vsyncpa %s20, 0
    loop: start=0, step=1, limit=6
    $region2: #{encoder_forward.1} parent=1 // loop_pre_header
      _
    $region3: #{encoder_forward.1} parent=1 // loop_header
      %s23 = sphi 0, %s27
      %p24 = scmp.ge.s32.totalorder %s23, 6
      %s30 = sphi 0, %s42
      %s31 = sphi 0, %s38
      %s32 = sphi 0, %s30
      %s33 = sphi 0, %s31
      %s34 = sphi 0, %s32
      %s35 = sphi 0, %s33
      %s45 = sphi 0, %s47
      %s48 = sphi 0, %s45
      %s49 = sphi 0, %s48
      %s65 = sphi 0, %s49
      %s71 = sphi 0, %s73
      %s74 = sphi 0, %s71
      %s75 = sphi 0, %s74
      %s91 = sphi 0, %s75
      %s97 = sphi 0, %s99
      %s100 = sphi 0, %s97
      %s101 = sphi 0, %s100
      %s117 = sphi 0, %s101
      %s123 = sphi 0, %s125
      %s126 = sphi 0, %s123
      %s127 = sphi 0, %s126
      %s143 = sphi 0, %s127
      %s149 = sphi 0, %s151
      %s152 = sphi 0, %s149
      %s153 = sphi 0, %s152
      %s169 = sphi 0, %s153
      %s175 = sphi 0, %s177
      %s178 = sphi 0, %s175
      %s179 = sphi 0, %s178
      %s195 = sphi 0, %s179
      %s201 = sphi 0, %s203
      %s204 = sphi 0, %s201
      %s205 = sphi 0, %s204
      %s221 = sphi 0, %s205
      %s227 = sphi 0, %s229
      %s230 = sphi 0, %s227
      %s231 = sphi 0, %s230
      %s247 = sphi 0, %s231
      %s253 = sphi 0, %s255
      %s256 = sphi 0, %s253
      %s257 = sphi 0, %s256
      %s273 = sphi 0, %s257
      %s279 = sphi 0, %s281
      %s282 = sphi 0, %s279
      %s283 = sphi 0, %s282
      %s299 = sphi 0, %s283
      %s305 = sphi 0, %s307
      %s308 = sphi 0, %s305
      %s309 = sphi 0, %s308
      %s325 = sphi 0, %s309
      %s331 = sphi 0, %s333
      %s334 = sphi 0, %s331
      %s335 = sphi 0, %s334
      %s351 = sphi 0, %s335
      %s357 = sphi 0, %s359
      %s360 = sphi 0, %s357
      %s361 = sphi 0, %s360
      %s377 = sphi 0, %s361
      %s383 = sphi 0, %s385
      %s386 = sphi 0, %s383
      %s387 = sphi 0, %s386
      %s403 = sphi 0, %s387
      %s409 = sphi 0, %s411
      %s412 = sphi 0, %s409
      %s413 = sphi 0, %s412
      %s429 = sphi 0, %s413
    $region4: #{encoder_forward.1} parent=1 // loop_header_branch
      %26 = sbr.rel (%p24) target = $region8
    $region5: #{encoder_forward.1} parent=1 // loop_body
      %s28 = ssub.s32 %s23, 1
      %s29 = ssub.s32 %s23, 2
      %s36 = sadd.s32 1, %s31
      %p37 = scmp.ge.s32.totalorder %s36, 2
      %s38 = scalar_select %p37, 0, %s36
      %s39 = sadd.s32 1, %s30
      %s40 = scalar_select %p37, %s39, %s30
      %p41 = scmp.ge.s32.totalorder %s40, 2
      %s42 = scalar_select %p41, 0, %s40
      %s43 = ssub.s32 %s30, %s42
      %p44 = scmp.eq.s32.totalorder %s43, 0
      %s46 = sadd.s32 %s45, 1
      %s47 = scalar_select %p44, %s45, %s46
      %p50 = pneg %p44
      %p51 = scmp.eq.s32.totalorder %s23, 3
      %p52 = por %p50, %p51
      %p53 = scmp.ne.s32.totalorder %s45, %s48
      %p54 = scmp.eq.s32.totalorder %s23, 0
      %p55 = por %p53, %p54
      %p56 = scmp.ne.s32.totalorder %s45, %s48
      %p57 = scmp.eq.s32.totalorder %s28, 3
      %p58 = por %p56, %p57
      %p59 = scmp.ne.s32.totalorder %s48, %s49
      %p60 = scmp.eq.s32.totalorder %s28, 0
      %p61 = por %p59, %p60
      %p62 = scmp.ne.s32.totalorder %s48, %s49
      %p63 = scmp.eq.s32.totalorder %s29, 3
      %p64 = por %p62, %p63
      %p66 = scmp.ne.s32.totalorder %s49, %s65
      %p67 = scmp.eq.s32.totalorder %s29, 0
      %p68 = por %p66, %p67
      %s69 = ssub.s32 %s30, %s42
      %p70 = scmp.eq.s32.totalorder %s69, 0
      %s72 = sadd.s32 %s71, 1
      %s73 = scalar_select %p70, %s71, %s72
      %p76 = pneg %p70
      %p77 = scmp.eq.s32.totalorder %s23, 3
      %p78 = por %p76, %p77
      %p79 = scmp.ne.s32.totalorder %s71, %s74
      %p80 = scmp.eq.s32.totalorder %s23, 0
      %p81 = por %p79, %p80
      %p82 = scmp.ne.s32.totalorder %s71, %s74
      %p83 = scmp.eq.s32.totalorder %s28, 3
      %p84 = por %p82, %p83
      %p85 = scmp.ne.s32.totalorder %s74, %s75
      %p86 = scmp.eq.s32.totalorder %s28, 0
      %p87 = por %p85, %p86
      %p88 = scmp.ne.s32.totalorder %s74, %s75
      %p89 = scmp.eq.s32.totalorder %s29, 3
      %p90 = por %p88, %p89
      %p92 = scmp.ne.s32.totalorder %s75, %s91
      %p93 = scmp.eq.s32.totalorder %s29, 0
      %p94 = por %p92, %p93
      %s95 = ssub.s32 %s31, %s38
      %p96 = scmp.eq.s32.totalorder %s95, 0
      %s98 = sadd.s32 %s97, 1
      %s99 = scalar_select %p96, %s97, %s98
      %p102 = pneg %p96
      %p103 = scmp.eq.s32.totalorder %s23, 3
      %p104 = por %p102, %p103
      %p105 = scmp.ne.s32.totalorder %s97, %s100
      %p106 = scmp.eq.s32.totalorder %s23, 0
      %p107 = por %p105, %p106
      %p108 = scmp.ne.s32.totalorder %s97, %s100
      %p109 = scmp.eq.s32.totalorder %s28, 3
      %p110 = por %p108, %p109
      %p111 = scmp.ne.s32.totalorder %s100, %s101
      %p112 = scmp.eq.s32.totalorder %s28, 0
      %p113 = por %p111, %p112
      %p114 = scmp.ne.s32.totalorder %s100, %s101
      %p115 = scmp.eq.s32.totalorder %s29, 3
      %p116 = por %p114, %p115
      %p118 = scmp.ne.s32.totalorder %s101, %s117
      %p119 = scmp.eq.s32.totalorder %s29, 0
      %p120 = por %p118, %p119
      %s121 = ssub.s32 %s31, %s38
      %p122 = scmp.eq.s32.totalorder %s121, 0
      %s124 = sadd.s32 %s123, 1
      %s125 = scalar_select %p122, %s123, %s124
      %p128 = pneg %p122
      %p129 = scmp.eq.s32.totalorder %s23, 3
      %p130 = por %p128, %p129
      %p131 = scmp.ne.s32.totalorder %s123, %s126
      %p132 = scmp.eq.s32.totalorder %s23, 0
      %p133 = por %p131, %p132
      %p134 = scmp.ne.s32.totalorder %s123, %s126
      %p135 = scmp.eq.s32.totalorder %s28, 3
      %p136 = por %p134, %p135
      %p137 = scmp.ne.s32.totalorder %s126, %s127
      %p138 = scmp.eq.s32.totalorder %s28, 0
      %p139 = por %p137, %p138
      %p140 = scmp.ne.s32.totalorder %s126, %s127
      %p141 = scmp.eq.s32.totalorder %s29, 3
      %p142 = por %p140, %p141
      %p144 = scmp.ne.s32.totalorder %s127, %s143
      %p145 = scmp.eq.s32.totalorder %s29, 0
      %p146 = por %p144, %p145
      %s147 = ssub.s32 %s31, %s38
      %p148 = scmp.eq.s32.totalorder %s147, 0
      %s150 = sadd.s32 %s149, 1
      %s151 = scalar_select %p148, %s149, %s150
      %p154 = pneg %p148
      %p155 = scmp.eq.s32.totalorder %s23, 3
      %p156 = por %p154, %p155
      %p157 = scmp.ne.s32.totalorder %s149, %s152
      %p158 = scmp.eq.s32.totalorder %s23, 0
      %p159 = por %p157, %p158
      %p160 = scmp.ne.s32.totalorder %s149, %s152
      %p161 = scmp.eq.s32.totalorder %s28, 3
      %p162 = por %p160, %p161
      %p163 = scmp.ne.s32.totalorder %s152, %s153
      %p164 = scmp.eq.s32.totalorder %s28, 0
      %p165 = por %p163, %p164
      %p166 = scmp.ne.s32.totalorder %s152, %s153
      %p167 = scmp.eq.s32.totalorder %s29, 3
      %p168 = por %p166, %p167
      %p170 = scmp.ne.s32.totalorder %s153, %s169
      %p171 = scmp.eq.s32.totalorder %s29, 0
      %p172 = por %p170, %p171
      %s173 = ssub.s32 %s31, %s38
      %p174 = scmp.eq.s32.totalorder %s173, 0
      %s176 = sadd.s32 %s175, 1
      %s177 = scalar_select %p174, %s175, %s176
      %p180 = pneg %p174
      %p181 = scmp.eq.s32.totalorder %s23, 3
      %p182 = por %p180, %p181
      %p183 = scmp.ne.s32.totalorder %s175, %s178
      %p184 = scmp.eq.s32.totalorder %s23, 0
      %p185 = por %p183, %p184
      %p186 = scmp.ne.s32.totalorder %s175, %s178
      %p187 = scmp.eq.s32.totalorder %s28, 3
      %p188 = por %p186, %p187
      %p189 = scmp.ne.s32.totalorder %s178, %s179
      %p190 = scmp.eq.s32.totalorder %s28, 0
      %p191 = por %p189, %p190
      %p192 = scmp.ne.s32.totalorder %s178, %s179
      %p193 = scmp.eq.s32.totalorder %s29, 3
      %p194 = por %p192, %p193
      %p196 = scmp.ne.s32.totalorder %s179, %s195
      %p197 = scmp.eq.s32.totalorder %s29, 0
      %p198 = por %p196, %p197
      %s199 = ssub.s32 %s31, %s38
      %p200 = scmp.eq.s32.totalorder %s199, 0
      %s202 = sadd.s32 %s201, 1
      %s203 = scalar_select %p200, %s201, %s202
      %p206 = pneg %p200
      %p207 = scmp.eq.s32.totalorder %s23, 3
      %p208 = por %p206, %p207
      %p209 = scmp.ne.s32.totalorder %s201, %s204
      %p210 = scmp.eq.s32.totalorder %s23, 0
      %p211 = por %p209, %p210
      %p212 = scmp.ne.s32.totalorder %s201, %s204
      %p213 = scmp.eq.s32.totalorder %s28, 3
      %p214 = por %p212, %p213
      %p215 = scmp.ne.s32.totalorder %s204, %s205
      %p216 = scmp.eq.s32.totalorder %s28, 0
      %p217 = por %p215, %p216
      %p218 = scmp.ne.s32.totalorder %s204, %s205
      %p219 = scmp.eq.s32.totalorder %s29, 3
      %p220 = por %p218, %p219
      %p222 = scmp.ne.s32.totalorder %s205, %s221
      %p223 = scmp.eq.s32.totalorder %s29, 0
      %p224 = por %p222, %p223
      %s225 = ssub.s32 %s31, %s38
      %p226 = scmp.eq.s32.totalorder %s225, 0
      %s228 = sadd.s32 %s227, 1
      %s229 = scalar_select %p226, %s227, %s228
      %p232 = pneg %p226
      %p233 = scmp.eq.s32.totalorder %s23, 3
      %p234 = por %p232, %p233
      %p235 = scmp.ne.s32.totalorder %s227, %s230
      %p236 = scmp.eq.s32.totalorder %s23, 0
      %p237 = por %p235, %p236
      %p238 = scmp.ne.s32.totalorder %s227, %s230
      %p239 = scmp.eq.s32.totalorder %s28, 3
      %p240 = por %p238, %p239
      %p241 = scmp.ne.s32.totalorder %s230, %s231
      %p242 = scmp.eq.s32.totalorder %s28, 0
      %p243 = por %p241, %p242
      %p244 = scmp.ne.s32.totalorder %s230, %s231
      %p245 = scmp.eq.s32.totalorder %s29, 3
      %p246 = por %p244, %p245
      %p248 = scmp.ne.s32.totalorder %s231, %s247
      %p249 = scmp.eq.s32.totalorder %s29, 0
      %p250 = por %p248, %p249
      %s251 = ssub.s32 %s31, %s38
      %p252 = scmp.eq.s32.totalorder %s251, 0
      %s254 = sadd.s32 %s253, 1
      %s255 = scalar_select %p252, %s253, %s254
      %p258 = pneg %p252
      %p259 = scmp.eq.s32.totalorder %s23, 3
      %p260 = por %p258, %p259
      %p261 = scmp.ne.s32.totalorder %s253, %s256
      %p262 = scmp.eq.s32.totalorder %s23, 0
      %p263 = por %p261, %p262
      %p264 = scmp.ne.s32.totalorder %s253, %s256
      %p265 = scmp.eq.s32.totalorder %s28, 3
      %p266 = por %p264, %p265
      %p267 = scmp.ne.s32.totalorder %s256, %s257
      %p268 = scmp.eq.s32.totalorder %s28, 0
      %p269 = por %p267, %p268
      %p270 = scmp.ne.s32.totalorder %s256, %s257
      %p271 = scmp.eq.s32.totalorder %s29, 3
      %p272 = por %p270, %p271
      %p274 = scmp.ne.s32.totalorder %s257, %s273
      %p275 = scmp.eq.s32.totalorder %s29, 0
      %p276 = por %p274, %p275
      %s277 = ssub.s32 %s31, %s38
      %p278 = scmp.eq.s32.totalorder %s277, 0
      %s280 = sadd.s32 %s279, 1
      %s281 = scalar_select %p278, %s279, %s280
      %p284 = pneg %p278
      %p285 = scmp.eq.s32.totalorder %s23, 3
      %p286 = por %p284, %p285
      %p287 = scmp.ne.s32.totalorder %s279, %s282
      %p288 = scmp.eq.s32.totalorder %s23, 0
      %p289 = por %p287, %p288
      %p290 = scmp.ne.s32.totalorder %s279, %s282
      %p291 = scmp.eq.s32.totalorder %s28, 3
      %p292 = por %p290, %p291
      %p293 = scmp.ne.s32.totalorder %s282, %s283
      %p294 = scmp.eq.s32.totalorder %s28, 0
      %p295 = por %p293, %p294
      %p296 = scmp.ne.s32.totalorder %s282, %s283
      %p297 = scmp.eq.s32.totalorder %s29, 3
      %p298 = por %p296, %p297
      %p300 = scmp.ne.s32.totalorder %s283, %s299
      %p301 = scmp.eq.s32.totalorder %s29, 0
      %p302 = por %p300, %p301
      %s303 = ssub.s32 %s31, %s38
      %p304 = scmp.eq.s32.totalorder %s303, 0
      %s306 = sadd.s32 %s305, 1
      %s307 = scalar_select %p304, %s305, %s306
      %p310 = pneg %p304
      %p311 = scmp.eq.s32.totalorder %s23, 3
      %p312 = por %p310, %p311
      %p313 = scmp.ne.s32.totalorder %s305, %s308
      %p314 = scmp.eq.s32.totalorder %s23, 0
      %p315 = por %p313, %p314
      %p316 = scmp.ne.s32.totalorder %s305, %s308
      %p317 = scmp.eq.s32.totalorder %s28, 3
      %p318 = por %p316, %p317
      %p319 = scmp.ne.s32.totalorder %s308, %s309
      %p320 = scmp.eq.s32.totalorder %s28, 0
      %p321 = por %p319, %p320
      %p322 = scmp.ne.s32.totalorder %s308, %s309
      %p323 = scmp.eq.s32.totalorder %s29, 3
      %p324 = por %p322, %p323
      %p326 = scmp.ne.s32.totalorder %s309, %s325
      %p327 = scmp.eq.s32.totalorder %s29, 0
      %p328 = por %p326, %p327
      %s329 = ssub.s32 %s31, %s38
      %p330 = scmp.eq.s32.totalorder %s329, 0
      %s332 = sadd.s32 %s331, 1
      %s333 = scalar_select %p330, %s331, %s332
      %p336 = pneg %p330
      %p337 = scmp.eq.s32.totalorder %s23, 3
      %p338 = por %p336, %p337
      %p339 = scmp.ne.s32.totalorder %s331, %s334
      %p340 = scmp.eq.s32.totalorder %s23, 0
      %p341 = por %p339, %p340
      %p342 = scmp.ne.s32.totalorder %s331, %s334
      %p343 = scmp.eq.s32.totalorder %s28, 3
      %p344 = por %p342, %p343
      %p345 = scmp.ne.s32.totalorder %s334, %s335
      %p346 = scmp.eq.s32.totalorder %s28, 0
      %p347 = por %p345, %p346
      %p348 = scmp.ne.s32.totalorder %s334, %s335
      %p349 = scmp.eq.s32.totalorder %s29, 3
      %p350 = por %p348, %p349
      %p352 = scmp.ne.s32.totalorder %s335, %s351
      %p353 = scmp.eq.s32.totalorder %s29, 0
      %p354 = por %p352, %p353
      %s355 = ssub.s32 %s31, %s38
      %p356 = scmp.eq.s32.totalorder %s355, 0
      %s358 = sadd.s32 %s357, 1
      %s359 = scalar_select %p356, %s357, %s358
      %p362 = pneg %p356
      %p363 = scmp.eq.s32.totalorder %s23, 3
      %p364 = por %p362, %p363
      %p365 = scmp.ne.s32.totalorder %s357, %s360
      %p366 = scmp.eq.s32.totalorder %s23, 0
      %p367 = por %p365, %p366
      %p368 = scmp.ne.s32.totalorder %s357, %s360
      %p369 = scmp.eq.s32.totalorder %s28, 3
      %p370 = por %p368, %p369
      %p371 = scmp.ne.s32.totalorder %s360, %s361
      %p372 = scmp.eq.s32.totalorder %s28, 0
      %p373 = por %p371, %p372
      %p374 = scmp.ne.s32.totalorder %s360, %s361
      %p375 = scmp.eq.s32.totalorder %s29, 3
      %p376 = por %p374, %p375
      %p378 = scmp.ne.s32.totalorder %s361, %s377
      %p379 = scmp.eq.s32.totalorder %s29, 0
      %p380 = por %p378, %p379
      %s381 = ssub.s32 %s31, %s38
      %p382 = scmp.eq.s32.totalorder %s381, 0
      %s384 = sadd.s32 %s383, 1
      %s385 = scalar_select %p382, %s383, %s384
      %p388 = pneg %p382
      %p389 = scmp.eq.s32.totalorder %s23, 3
      %p390 = por %p388, %p389
      %p391 = scmp.ne.s32.totalorder %s383, %s386
      %p392 = scmp.eq.s32.totalorder %s23, 0
      %p393 = por %p391, %p392
      %p394 = scmp.ne.s32.totalorder %s383, %s386
      %p395 = scmp.eq.s32.totalorder %s28, 3
      %p396 = por %p394, %p395
      %p397 = scmp.ne.s32.totalorder %s386, %s387
      %p398 = scmp.eq.s32.totalorder %s28, 0
      %p399 = por %p397, %p398
      %p400 = scmp.ne.s32.totalorder %s386, %s387
      %p401 = scmp.eq.s32.totalorder %s29, 3
      %p402 = por %p400, %p401
      %p404 = scmp.ne.s32.totalorder %s387, %s403
      %p405 = scmp.eq.s32.totalorder %s29, 0
      %p406 = por %p404, %p405
      %s407 = ssub.s32 %s30, %s42
      %p408 = scmp.eq.s32.totalorder %s407, 0
      %s410 = sadd.s32 %s409, 1
      %s411 = scalar_select %p408, %s409, %s410
      %p414 = pneg %p408
      %p415 = scmp.eq.s32.totalorder %s23, 3
      %p416 = por %p414, %p415
      %p417 = scmp.ne.s32.totalorder %s409, %s412
      %p418 = scmp.eq.s32.totalorder %s23, 0
      %p419 = por %p417, %p418
      %p420 = scmp.ne.s32.totalorder %s409, %s412
      %p421 = scmp.eq.s32.totalorder %s28, 3
      %p422 = por %p420, %p421
      %p423 = scmp.ne.s32.totalorder %s412, %s413
      %p424 = scmp.eq.s32.totalorder %s28, 0
      %p425 = por %p423, %p424
      %p426 = scmp.ne.s32.totalorder %s412, %s413
      %p427 = scmp.eq.s32.totalorder %s29, 3
      %p428 = por %p426, %p427
      %p430 = scmp.ne.s32.totalorder %s413, %s429
      %p431 = scmp.eq.s32.totalorder %s29, 0
      %p432 = por %p430, %p431
      %p433 = scmp.le.s32.totalorder 1, %s23
      %p434 = scmp.lt.s32.totalorder %s23, 5
      %p435 = pnand %p433, %p434
      %p436 = pneg %p435
      // Predicated region
      $region9: #{encoder_forward.1} parent=5 // pred_check
        _
      $region10: #{encoder_forward.1} parent=5 // pred_check_branch
        %438 = sbr.rel (%p435) target = $region12
      $region11: #{encoder_forward.1} parent=5 // pred_region
        %s439 = ssub.s32 %s23, 1
      $region12: #{encoder_forward.1} parent=5 // pred_fallthru
        _
      %p440 = scmp.lt.s32.totalorder %s23, 4
      // Predicated region
      $region13: #{encoder_forward.1} parent=5 // pred_check
        %p441 = pneg %p440
      $region14: #{encoder_forward.1} parent=5 // pred_check_branch
        %443 = sbr.rel (%p441) target = $region16
      $region15: #{encoder_forward.1} parent=5 // pred_region
        // Predicated region
        $region17: #{encoder_forward.1} parent=15 // pred_check
          %p444 = pneg %p55
        $region18: #{encoder_forward.1} parent=15 // pred_check_branch
          %446 = sbr.rel (%p444) target = $region20
        $region19: #{encoder_forward.1} parent=15 // pred_region
          %p447 = scmp.lt.s32.totalorder %s30, 1
          %s448 = scalar_select %p447, %s30, 1
          %s449 = smul.addr %s448, 2
          %s450 = smul.addr %s449, 8
          %s451 = scalar_lea.vmem %s0, %s450
        $region20: #{encoder_forward.1} parent=15 // pred_fallthru
          _
        // Predicated region
        $region21: #{encoder_forward.1} parent=15 // pred_check
          %p452 = pneg %p81
        $region22: #{encoder_forward.1} parent=15 // pred_check_branch
          %454 = sbr.rel (%p452) target = $region24
        $region23: #{encoder_forward.1} parent=15 // pred_region
          %p455 = scmp.lt.s32.totalorder %s30, 1
          %s456 = scalar_select %p455, %s30, 1
          %s457 = scalar_lea.vmem %s1, %s456
        $region24: #{encoder_forward.1} parent=15 // pred_fallthru
          _
        // Predicated region
        $region25: #{encoder_forward.1} parent=15 // pred_check
          %p458 = pneg %p107
        $region26: #{encoder_forward.1} parent=15 // pred_check_branch
          %460 = sbr.rel (%p458) target = $region28
        $region27: #{encoder_forward.1} parent=15 // pred_region
          %p461 = scmp.lt.s32.totalorder %s31, 1
          %s462 = scalar_select %p461, %s31, 1
          %s463 = smul.addr %s462, 48
          %s464 = smul.addr %s463, 8
          %s465 = scalar_lea.vmem %s2, %s464
        $region28: #{encoder_forward.1} parent=15 // pred_fallthru
          _
        // Predicated region
        $region29: #{encoder_forward.1} parent=15 // pred_check
          %p466 = pneg %p133
        $region30: #{encoder_forward.1} parent=15 // pred_check_branch
          %468 = sbr.rel (%p466) target = $region32
        $region31: #{encoder_forward.1} parent=15 // pred_region
          %p469 = scmp.lt.s32.totalorder %s31, 1
          %s470 = scalar_select %p469, %s31, 1
          %s471 = smul.addr %s470, 3
          %s472 = scalar_lea.vmem %s3, %s471
        $region32: #{encoder_forward.1} parent=15 // pred_fallthru
          _
        // Predicated region
        $region33: #{encoder_forward.1} parent=15 // pred_check
          %p473 = pneg %p159
        $region34: #{encoder_forward.1} parent=15 // pred_check_branch
          %475 = sbr.rel (%p473) target = $region36
        $region35: #{encoder_forward.1} parent=15 // pred_region
          %p476 = scmp.lt.s32.totalorder %s31, 1
          %s477 = scalar_select %p476, %s31, 1
          %s478 = smul.addr %s477, 16
          %s479 = smul.addr %s478, 8
          %s480 = scalar_lea.vmem %s4, %s479
        $region36: #{encoder_forward.1} parent=15 // pred_fallthru
          _
        // Predicated region
        $region37: #{encoder_forward.1} parent=15 // pred_check
          %p481 = pneg %p185
        $region38: #{encoder_forward.1} parent=15 // pred_check_branch
          %483 = sbr.rel (%p481) target = $region40
        $region39: #{encoder_forward.1} parent=15 // pred_region
          %p484 = scmp.lt.s32.totalorder %s31, 1
          %s485 = scalar_select %p484, %s31, 1
          %s486 = scalar_lea.vmem %s5, %s485
        $region40: #{encoder_forward.1} parent=15 // pred_fallthru
          _
        // Predicated region
        $region41: #{encoder_forward.1} parent=15 // pred_check
          %p487 = pneg %p211
        $region42: #{encoder_forward.1} parent=15 // pred_check_branch
          %489 = sbr.rel (%p487) target = $region44
        $region43: #{encoder_forward.1} parent=15 // pred_region
          %p490 = scmp.lt.s32.totalorder %s31, 1
          %s491 = scalar_select %p490, %s31, 1
          %s492 = scalar_lea.vmem %s6, %s491
        $region44: #{encoder_forward.1} parent=15 // pred_fallthru
          _
        // Predicated region
        $region45: #{encoder_forward.1} parent=15 // pred_check
          %p493 = pneg %p237
        $region46: #{encoder_forward.1} parent=15 // pred_check_branch
          %495 = sbr.rel (%p493) target = $region48
        $region47: #{encoder_forward.1} parent=15 // pred_region
          %p496 = scmp.lt.s32.totalorder %s31, 1
          %s497 = scalar_select %p496, %s31, 1
          %s498 = scalar_lea.vmem %s7, %s497
        $region48: #{encoder_forward.1} parent=15 // pred_fallthru
          _
        // Predicated region
        $region49: #{encoder_forward.1} parent=15 // pred_check
          %p499 = pneg %p263
        $region50: #{encoder_forward.1} parent=15 // pred_check_branch
          %501 = sbr.rel (%p499) target = $region52
        $region51: #{encoder_forward.1} parent=15 // pred_region
          %p502 = scmp.lt.s32.totalorder %s31, 1
          %s503 = scalar_select %p502, %s31, 1
          %s504 = smul.addr %s503, 32
          %s505 = smul.addr %s504, 8
          %s506 = scalar_lea.vmem %s8, %s505
        $region52: #{encoder_forward.1} parent=15 // pred_fallthru
          _
        // Predicated region
        $region53: #{encoder_forward.1} parent=15 // pred_check
          %p507 = pneg %p289
        $region54: #{encoder_forward.1} parent=15 // pred_check_branch
          %509 = sbr.rel (%p507) target = $region56
        $region55: #{encoder_forward.1} parent=15 // pred_region
          %p510 = scmp.lt.s32.totalorder %s31, 1
          %s511 = scalar_select %p510, %s31, 1
          %s512 = smul.addr %s511, 2
          %s513 = scalar_lea.vmem %s9, %s512
        $region56: #{encoder_forward.1} parent=15 // pred_fallthru
          _
        // Predicated region
        $region57: #{encoder_forward.1} parent=15 // pred_check
          %p514 = pneg %p315
        $region58: #{encoder_forward.1} parent=15 // pred_check_branch
          %516 = sbr.rel (%p514) target = $region60
        $region59: #{encoder_forward.1} parent=15 // pred_region
          %p517 = scmp.lt.s32.totalorder %s31, 1
          %s518 = scalar_select %p517, %s31, 1
          %s519 = smul.addr %s518, 32
          %s520 = smul.addr %s519, 8
          %s521 = scalar_lea.vmem %s10, %s520
        $region60: #{encoder_forward.1} parent=15 // pred_fallthru
          _
        // Predicated region
        $region61: #{encoder_forward.1} parent=15 // pred_check
          %p522 = pneg %p341
        $region62: #{encoder_forward.1} parent=15 // pred_check_branch
          %524 = sbr.rel (%p522) target = $region64
        $region63: #{encoder_forward.1} parent=15 // pred_region
          %p525 = scmp.lt.s32.totalorder %s31, 1
          %s526 = scalar_select %p525, %s31, 1
          %s527 = scalar_lea.vmem %s11, %s526
        $region64: #{encoder_forward.1} parent=15 // pred_fallthru
          _
        // Predicated region
        $region65: #{encoder_forward.1} parent=15 // pred_check
          %p528 = pneg %p367
        $region66: #{encoder_forward.1} parent=15 // pred_check_branch
          %530 = sbr.rel (%p528) target = $region68
        $region67: #{encoder_forward.1} parent=15 // pred_region
          %p531 = scmp.lt.s32.totalorder %s31, 1
          %s532 = scalar_select %p531, %s31, 1
          %s533 = scalar_lea.vmem %s12, %s532
        $region68: #{encoder_forward.1} parent=15 // pred_fallthru
          _
        // Predicated region
        $region69: #{encoder_forward.1} parent=15 // pred_check
          %p534 = pneg %p393
        $region70: #{encoder_forward.1} parent=15 // pred_check_branch
          %536 = sbr.rel (%p534) target = $region72
        $region71: #{encoder_forward.1} parent=15 // pred_region
          %p537 = scmp.lt.s32.totalorder %s31, 1
          %s538 = scalar_select %p537, %s31, 1
          %s539 = scalar_lea.vmem %s13, %s538
        $region72: #{encoder_forward.1} parent=15 // pred_fallthru
          _
      $region16: #{encoder_forward.1} parent=5 // pred_fallthru
        _
      %p540 = scmp.le.s32.totalorder 1, %s23
      %p541 = scmp.lt.s32.totalorder %s23, 5
      %p542 = pnand %p540, %p541
      %p543 = pneg %p542
      // Predicated region
      $region73: #{encoder_forward.1} parent=5 // pred_check
        _
      $region74: #{encoder_forward.1} parent=5 // pred_check_branch
        %545 = sbr.rel (%p542) target = $region76
      $region75: #{encoder_forward.1} parent=5 // pred_region
        %s546 = ssub.s32 %s23, 1
        %p547 = scmp.lt.s32.totalorder %s32, 1
        %s548 = scalar_select %p547, %s32, 1
        %s549 = smul.addr %s548, 2
        %s550 = smul.addr %s549, 8
        %s551 = scalar_lea.vmem %s0, %s550
        %p552 = pneg %p61
        %p553 = pneg %p58
        %p554 = scmp.lt.s32.totalorder %s32, 1
        %s555 = scalar_select %p554, %s32, 1
        %s556 = scalar_lea.vmem %s1, %s555
        %p557 = pneg %p87
        %p558 = pneg %p84
        %p559 = scmp.lt.s32.totalorder %s33, 1
        %s560 = scalar_select %p559, %s33, 1
        %s561 = smul.addr %s560, 48
        %s562 = smul.addr %s561, 8
        %s563 = scalar_lea.vmem %s2, %s562
        %p564 = pneg %p113
        %p565 = pneg %p110
        %p566 = scmp.lt.s32.totalorder %s33, 1
        %s567 = scalar_select %p566, %s33, 1
        %s568 = smul.addr %s567, 3
        %s569 = scalar_lea.vmem %s3, %s568
        %p570 = pneg %p139
        %p571 = pneg %p136
        %p572 = scmp.lt.s32.totalorder %s33, 1
        %s573 = scalar_select %p572, %s33, 1
        %s574 = smul.addr %s573, 16
        %s575 = smul.addr %s574, 8
        %s576 = scalar_lea.vmem %s4, %s575
        %p577 = pneg %p165
        %p578 = pneg %p162
        %p579 = scmp.lt.s32.totalorder %s33, 1
        %s580 = scalar_select %p579, %s33, 1
        %s581 = scalar_lea.vmem %s5, %s580
        %p582 = pneg %p191
        %p583 = pneg %p188
        %p584 = scmp.lt.s32.totalorder %s33, 1
        %s585 = scalar_select %p584, %s33, 1
        %s586 = scalar_lea.vmem %s6, %s585
        %p587 = pneg %p217
        %p588 = pneg %p214
        %p589 = scmp.lt.s32.totalorder %s33, 1
        %s590 = scalar_select %p589, %s33, 1
        %s591 = scalar_lea.vmem %s7, %s590
        %p592 = pneg %p243
        %p593 = pneg %p240
        %p594 = scmp.lt.s32.totalorder %s33, 1
        %s595 = scalar_select %p594, %s33, 1
        %s596 = smul.addr %s595, 32
        %s597 = smul.addr %s596, 8
        %s598 = scalar_lea.vmem %s8, %s597
        %p599 = pneg %p269
        %p600 = pneg %p266
        %p601 = scmp.lt.s32.totalorder %s33, 1
        %s602 = scalar_select %p601, %s33, 1
        %s603 = smul.addr %s602, 2
        %s604 = scalar_lea.vmem %s9, %s603
        %p605 = pneg %p295
        %p606 = pneg %p292
        %p607 = scmp.lt.s32.totalorder %s33, 1
        %s608 = scalar_select %p607, %s33, 1
        %s609 = smul.addr %s608, 32
        %s610 = smul.addr %s609, 8
        %s611 = scalar_lea.vmem %s10, %s610
        %p612 = pneg %p321
        %p613 = pneg %p318
        %p614 = scmp.lt.s32.totalorder %s33, 1
        %s615 = scalar_select %p614, %s33, 1
        %s616 = scalar_lea.vmem %s11, %s615
        %p617 = pneg %p347
        %p618 = pneg %p344
        %p619 = scmp.lt.s32.totalorder %s33, 1
        %s620 = scalar_select %p619, %s33, 1
        %s621 = scalar_lea.vmem %s12, %s620
        %p622 = pneg %p373
        %p623 = pneg %p370
        %p624 = scmp.lt.s32.totalorder %s33, 1
        %s625 = scalar_select %p624, %s33, 1
        %s626 = scalar_lea.vmem %s13, %s625
        %p627 = pneg %p399
        %p628 = pneg %p396
        %p629 = pneg %p425
        %p630 = pneg %p422
        %s631 = sand.u32 %s412, 1
        %s632 = scalar_lea.sflag [#allocation4], %s631
        %s633 = sand.u32 %s412, 1
        %s634 = smul.addr %s633, 16
        %s635 = scalar_lea.vmem [#allocation3], %s634
        %p636 = scmp.lt.s32.totalorder %s32, 1
        %s637 = scalar_select %p636, %s32, 1
        %s638 = smul.addr %s637, 2
        %s639 = smul.addr %s638, 8
        %s640 = scalar_lea.vmem %s0, %s639
        %p641 = scmp.lt.s32.totalorder %s32, 1
        %s642 = scalar_select %p641, %s32, 1
        %s643 = scalar_lea.vmem %s1, %s642
        %p644 = scmp.lt.s32.totalorder %s33, 1
        %s645 = scalar_select %p644, %s33, 1
        %s646 = smul.addr %s645, 48
        %s647 = smul.addr %s646, 8
        %s648 = scalar_lea.vmem %s2, %s647
        %p649 = scmp.lt.s32.totalorder %s33, 1
        %s650 = scalar_select %p649, %s33, 1
        %s651 = smul.addr %s650, 3
        %s652 = scalar_lea.vmem %s3, %s651
        %p653 = scmp.lt.s32.totalorder %s33, 1
        %s654 = scalar_select %p653, %s33, 1
        %s655 = smul.addr %s654, 16
        %s656 = smul.addr %s655, 8
        %s657 = scalar_lea.vmem %s4, %s656
        %p658 = scmp.lt.s32.totalorder %s33, 1
        %s659 = scalar_select %p658, %s33, 1
        %s660 = scalar_lea.vmem %s5, %s659
        %p661 = scmp.lt.s32.totalorder %s33, 1
        %s662 = scalar_select %p661, %s33, 1
        %s663 = scalar_lea.vmem %s6, %s662
        %p664 = scmp.lt.s32.totalorder %s33, 1
        %s665 = scalar_select %p664, %s33, 1
        %s666 = scalar_lea.vmem %s7, %s665
        %p667 = scmp.lt.s32.totalorder %s33, 1
        %s668 = scalar_select %p667, %s33, 1
        %s669 = smul.addr %s668, 32
        %s670 = smul.addr %s669, 8
        %s671 = scalar_lea.vmem %s8, %s670
        %p672 = scmp.lt.s32.totalorder %s33, 1
        %s673 = scalar_select %p672, %s33, 1
        %s674 = smul.addr %s673, 2
        %s675 = scalar_lea.vmem %s9, %s674
        %p676 = scmp.lt.s32.totalorder %s33, 1
        %s677 = scalar_select %p676, %s33, 1
        %s678 = smul.addr %s677, 32
        %s679 = smul.addr %s678, 8
        %s680 = scalar_lea.vmem %s10, %s679
        %p681 = scmp.lt.s32.totalorder %s33, 1
        %s682 = scalar_select %p681, %s33, 1
        %s683 = scalar_lea.vmem %s11, %s682
        %p684 = scmp.lt.s32.totalorder %s33, 1
        %s685 = scalar_select %p684, %s33, 1
        %s686 = scalar_lea.vmem %s12, %s685
        %p687 = scmp.lt.s32.totalorder %s33, 1
        %s688 = scalar_select %p687, %s33, 1
        %s689 = scalar_lea.vmem %s13, %s688
        %p690 = scmp.eq.s32.totalorder %s33, 0
        // Predicated region
        $region77: #{encoder_forward.1} parent=75 // pred_check
          %p691 = pneg %p690
        $region78: #{encoder_forward.1} parent=75 // pred_check_branch
          %693 = sbr.rel (%p691) target = $region80
        $region79: #{encoder_forward.1} parent=75 // pred_region
          %v694 = vld [vmem:[%s640] sm:$0xff]
          %v695 = vld [vmem:[%s640 + $0x8] sm:$0xff]
          %v696 = vmul.f32 %v694, 11.313708
          %v697 = vmul.f32 %v695, 11.313708
          %v698 = vld [vmem:[%s643] sm:$0x1]
          %v700 = vlaneseq
          %v701 = vshrl.u32 %v700, 7
          %v702 = vsub.s32 0, %v701
          %v703 = vrot.slane %v698, %v702
          %v705 = vadd.f32 %v696, %v703
          %v706 = vadd.f32 %v697, %v703
          %707 = vst [vmem:[#allocation2] sm:$0xff] %v705
          %708 = vst [vmem:[#allocation2 + $0x8] sm:$0xff] %v706
        $region80: #{encoder_forward.1} parent=75 // pred_fallthru
          _
        %v709 = vld [vmem:[#allocation2] sm:$0xff]
        %v710 = vld [vmem:[#allocation2 + $0x8] sm:$0xff]
        %v711 = vld [vmem:[%s648] sm:$0xff]
        %v712 = vld [vmem:[%s648 + $0x8] sm:$0xff]
        %v713 = vld [vmem:[%s648 + $0x10] sm:$0xff]
        %v714 = vld [vmem:[%s648 + $0x18] sm:$0xff]
        %v715 = vld [vmem:[%s648 + $0x20] sm:$0xff]
        %v716 = vld [vmem:[%s648 + $0x28] sm:$0xff]
        %v717 = vld [vmem:[%s648 + $0x30] sm:$0xff]
        %v718 = vld [vmem:[%s648 + $0x38] sm:$0xff]
        %v719 = vld [vmem:[%s648 + $0x40] sm:$0xff]
        %v720 = vld [vmem:[%s648 + $0x48] sm:$0xff]
        %v721 = vld [vmem:[%s648 + $0x50] sm:$0xff]
        %v722 = vld [vmem:[%s648 + $0x58] sm:$0xff]
        %v723 = vld [vmem:[%s648 + $0x60] sm:$0xff]
        %v724 = vld [vmem:[%s648 + $0x68] sm:$0xff]
        %v725 = vld [vmem:[%s648 + $0x70] sm:$0xff]
        %v726 = vld [vmem:[%s648 + $0x78] sm:$0xff]
        %v727 = vld [vmem:[%s648 + $0x80] sm:$0xff]
        %v728 = vld [vmem:[%s648 + $0x88] sm:$0xff]
        %v729 = vld [vmem:[%s648 + $0x90] sm:$0xff]
        %v730 = vld [vmem:[%s648 + $0x98] sm:$0xff]
        %v731 = vld [vmem:[%s648 + $0xa0] sm:$0xff]
        %v732 = vld [vmem:[%s648 + $0xa8] sm:$0xff]
        %v733 = vld [vmem:[%s648 + $0xb0] sm:$0xff]
        %v734 = vld [vmem:[%s648 + $0xb8] sm:$0xff]
        %v735 = vld [vmem:[%s648 + $0xc0] sm:$0xff]
        %v736 = vld [vmem:[%s648 + $0xc8] sm:$0xff]
        %v737 = vld [vmem:[%s648 + $0xd0] sm:$0xff]
        %v738 = vld [vmem:[%s648 + $0xd8] sm:$0xff]
        %v739 = vld [vmem:[%s648 + $0xe0] sm:$0xff]
        %v740 = vld [vmem:[%s648 + $0xe8] sm:$0xff]
        %v741 = vld [vmem:[%s648 + $0xf0] sm:$0xff]
        %v742 = vld [vmem:[%s648 + $0xf8] sm:$0xff]
        %v743 = vld [vmem:[%s648 + $0x100] sm:$0xff]
        %v744 = vld [vmem:[%s648 + $0x108] sm:$0xff]
        %v745 = vld [vmem:[%s648 + $0x110] sm:$0xff]
        %v746 = vld [vmem:[%s648 + $0x118] sm:$0xff]
        %v747 = vld [vmem:[%s648 + $0x120] sm:$0xff]
        %v748 = vld [vmem:[%s648 + $0x128] sm:$0xff]
        %v749 = vld [vmem:[%s648 + $0x130] sm:$0xff]
        %v750 = vld [vmem:[%s648 + $0x138] sm:$0xff]
        %v751 = vld [vmem:[%s648 + $0x140] sm:$0xff]
        %v752 = vld [vmem:[%s648 + $0x148] sm:$0xff]
        %v753 = vld [vmem:[%s648 + $0x150] sm:$0xff]
        %v754 = vld [vmem:[%s648 + $0x158] sm:$0xff]
        %v755 = vld [vmem:[%s648 + $0x160] sm:$0xff]
        %v756 = vld [vmem:[%s648 + $0x168] sm:$0xff]
        %v757 = vld [vmem:[%s648 + $0x170] sm:$0xff]
        %v758 = vld [vmem:[%s648 + $0x178] sm:$0xff]
        %v759 = vld [vmem:[%s652] sm:$0x7]
        %v761 = vlaneseq
        %v762 = vshrl.u32 %v761, 7
        %v763 = vsub.s32 0, %v762
        %v764 = vrot.slane %v759, %v763
        %v765 = vlaneseq
        %v766 = vshrl.u32 %v765, 7
        %v767 = vsub.s32 1, %v766
        %v768 = vrot.slane %v759, %v767
        %v769 = vlaneseq
        %v770 = vshrl.u32 %v769, 7
        %v771 = vsub.s32 2, %v770
        %v772 = vrot.slane %v759, %v771
        %776 = vmatprep.subr.mxu0 %v712
        %777 = vmatpush1.msra.mxu0 %v711
        %778 = vmatprep.subr.mxu0 %v715
        %779 = vmatpush1.msra.mxu0 %v714
        %780 = vmatprep.subr.mxu0 %v718
        %781 = vmatpush1.msra.mxu0 %v717
        %782 = vmatprep.subr.mxu0 %v721
        %783 = vmatpush1.msra.mxu0 %v720
        %784 = vmatprep.subr.mxu0 %v724
        %785 = vmatpush1.msra.mxu0 %v723
        %786 = vmatprep.subr.mxu0 %v727
        %787 = vmatpush1.msra.mxu0 %v726
        %788 = vmatprep.subr.mxu0 %v730
        %789 = vmatpush1.msra.mxu0 %v729
        %790 = vmatprep.subr.mxu0 %v733
        %791 = vmatpush1.msra.mxu0 %v732
        %792 = vmatprep.subr.mxu0 %v736
        %793 = vmatpush1.msra.mxu0 %v735
        %794 = vmatprep.subr.mxu0 %v739
        %795 = vmatpush1.msra.mxu0 %v738
        %796 = vmatprep.subr.mxu0 %v742
        %797 = vmatpush1.msra.mxu0 %v741
        %798 = vmatprep.subr.mxu0 %v745
        %799 = vmatpush1.msra.mxu0 %v744
        %800 = vmatprep.subr.mxu0 %v748
        %801 = vmatpush1.msra.mxu0 %v747
        %802 = vmatprep.subr.mxu0 %v751
        %803 = vmatpush1.msra.mxu0 %v750
        %804 = vmatprep.subr.mxu0 %v754
        %805 = vmatpush1.msra.mxu0 %v753
        %806 = vmatprep.subr.mxu0 %v757
        %807 = vmatpush1.msra.mxu0 %v756
        %808 = vmatprep.subr.mxu0 0.0
        %809 = vmatpush1.msra.mxu0 0.0
        %810 = vmatprep.subr.mxu0 0.0
        %811 = vmatpush1.msra.mxu0 0.0
        %812 = vmatprep.subr.mxu0 0.0
        %813 = vmatpush1.msra.mxu0 0.0
        %814 = vmatprep.subr.mxu0 0.0
        %815 = vmatpush1.msra.mxu0 0.0
        %816 = vmatprep.subr.mxu0 0.0
        %817 = vmatpush1.msra.mxu0 0.0
        %818 = vmatprep.subr.mxu0 0.0
        %819 = vmatpush1.msra.mxu0 0.0
        %820 = vmatprep.subr.mxu0 0.0
        %821 = vmatpush1.msra.mxu0 0.0
        %822 = vmatprep.subr.mxu0 0.0
        %823 = vmatpush1.msra.mxu0 0.0
        %824 = vmatprep.subr.mxu0 0.0
        %825 = vmatpush1.msra.mxu0 0.0
        %826 = vmatprep.subr.mxu0 0.0
        %827 = vmatpush1.msra.mxu0 0.0
        %828 = vmatprep.subr.mxu0 0.0
        %829 = vmatpush1.msra.mxu0 0.0
        %830 = vmatprep.subr.mxu0 0.0
        %831 = vmatpush1.msra.mxu0 0.0
        %832 = vmatprep.subr.mxu0 0.0
        %833 = vmatpush1.msra.mxu0 0.0
        %834 = vmatprep.subr.mxu0 0.0
        %835 = vmatpush1.msra.mxu0 0.0
        %836 = vmatprep.subr.mxu0 0.0
        %837 = vmatpush1.msra.mxu0 0.0
        %838 = vmatprep.subr.mxu0 0.0
        %839 = vmatpush1.msra.mxu0 0.0
        %840 = vmatprep.mubr.f32.mxu0 0.0
        %841 = vmatmul.mubr.f32.gmra.mrb[0].mxu0 %v709
        %v842 = vpop.f32.mrb[0].mxu0
        %v843 = vadd.f32 %v764, %v842
        %v844 = vpop.f32.mrb[0].mxu0
        %v845 = vadd.f32 %v768, %v844
        %846 = vmatprep.mubr.f32.mxu0 0.0
        %847 = vmatmul.mubr.f32.gmra.mrb[0].mxu0 %v710
        %v848 = vpop.f32.mrb[0].mxu0
        %v849 = vadd.f32 %v764, %v848
        %v850 = vpop.f32.mrb[0].mxu0
        %v851 = vadd.f32 %v768, %v850
        %852 = vdwg.mxu0
        %853 = vmatprep.subr.mxu0 0.0
        %854 = vmatpush1.msra.mxu0 %v713
        %855 = vmatprep.subr.mxu0 0.0
        %856 = vmatpush1.msra.mxu0 %v716
        %857 = vmatprep.subr.mxu0 0.0
        %858 = vmatpush1.msra.mxu0 %v719
        %859 = vmatprep.subr.mxu0 0.0
        %860 = vmatpush1.msra.mxu0 %v722
        %861 = vmatprep.subr.mxu0 0.0
        %862 = vmatpush1.msra.mxu0 %v725
        %863 = vmatprep.subr.mxu0 0.0
        %864 = vmatpush1.msra.mxu0 %v728
        %865 = vmatprep.subr.mxu0 0.0
        %866 = vmatpush1.msra.mxu0 %v731
        %867 = vmatprep.subr.mxu0 0.0
        %868 = vmatpush1.msra.mxu0 %v734
        %869 = vmatprep.subr.mxu0 0.0
        %870 = vmatpush1.msra.mxu0 %v737
        %871 = vmatprep.subr.mxu0 0.0
        %872 = vmatpush1.msra.mxu0 %v740
        %873 = vmatprep.subr.mxu0 0.0
        %874 = vmatpush1.msra.mxu0 %v743
        %875 = vmatprep.subr.mxu0 0.0
        %876 = vmatpush1.msra.mxu0 %v746
        %877 = vmatprep.subr.mxu0 0.0
        %878 = vmatpush1.msra.mxu0 %v749
        %879 = vmatprep.subr.mxu0 0.0
        %880 = vmatpush1.msra.mxu0 %v752
        %881 = vmatprep.subr.mxu0 0.0
        %882 = vmatpush1.msra.mxu0 %v755
        %883 = vmatprep.subr.mxu0 0.0
        %884 = vmatpush1.msra.mxu0 %v758
        %885 = vmatprep.subr.mxu0 0.0
        %886 = vmatpush1.msra.mxu0 0.0
        %887 = vmatprep.subr.mxu0 0.0
        %888 = vmatpush1.msra.mxu0 0.0
        %889 = vmatprep.subr.mxu0 0.0
        %890 = vmatpush1.msra.mxu0 0.0
        %891 = vmatprep.subr.mxu0 0.0
        %892 = vmatpush1.msra.mxu0 0.0
        %893 = vmatprep.subr.mxu0 0.0
        %894 = vmatpush1.msra.mxu0 0.0
        %895 = vmatprep.subr.mxu0 0.0
        %896 = vmatpush1.msra.mxu0 0.0
        %897 = vmatprep.subr.mxu0 0.0
        %898 = vmatpush1.msra.mxu0 0.0
        %899 = vmatprep.subr.mxu0 0.0
        %900 = vmatpush1.msra.mxu0 0.0
        %901 = vmatprep.subr.mxu0 0.0
        %902 = vmatpush1.msra.mxu0 0.0
        %903 = vmatprep.subr.mxu0 0.0
        %904 = vmatpush1.msra.mxu0 0.0
        %905 = vmatprep.subr.mxu0 0.0
        %906 = vmatpush1.msra.mxu0 0.0
        %907 = vmatprep.subr.mxu0 0.0
        %908 = vmatpush1.msra.mxu0 0.0
        %909 = vmatprep.subr.mxu0 0.0
        %910 = vmatpush1.msra.mxu0 0.0
        %911 = vmatprep.subr.mxu0 0.0
        %912 = vmatpush1.msra.mxu0 0.0
        %913 = vmatprep.subr.mxu0 0.0
        %914 = vmatpush1.msra.mxu0 0.0
        %915 = vmatprep.subr.mxu0 0.0
        %916 = vmatpush1.msra.mxu0 0.0
        %917 = vmatprep.mubr.f32.mxu0 0.0
        %918 = vmatmul.mubr.f32.gmra.mrb[0].mxu0 %v709
        %v919 = vpop.f32.mrb[0].mxu0
        %v920 = vadd.f32 %v772, %v919
        %v921 = vpop.f32.mrb[0].mxu0
        %922 = vmatprep.mubr.f32.mxu0 0.0
        %923 = vmatmul.mubr.f32.gmra.mrb[0].mxu0 %v710
        %v924 = vpop.f32.mrb[0].mxu0
        %v925 = vadd.f32 %v772, %v924
        %v926 = vpop.f32.mrb[0].mxu0
        %927 = vdwg.mxu0
        %vm928 = vcmask 130048
        %v930 = vsel %vm928, %v843, 0
        %v933 = vsel %vm928, %v849, 0
        %v936 = vsel %vm928, %v845, 0
        %v939 = vsel %vm928, %v851, 0
        %941 = vmatprep.subr.mxu0 0.0
        %942 = vmatpush1.xpose.msra.mxu0 %v936
        %943 = vmatprep.subr.mxu0 0.0
        %944 = vmatpush1.xpose.msra.mxu0 %v939
        %945 = vmatprep.subr.mxu0 0.0
        %946 = vmatpush1.xpose.msra.mxu0 0.0
        %947 = vmatprep.subr.mxu0 0.0
        %948 = vmatpush1.xpose.msra.mxu0 0.0
        %949 = vmatprep.subr.mxu0 0.0
        %950 = vmatpush1.xpose.msra.mxu0 0.0
        %951 = vmatprep.subr.mxu0 0.0
        %952 = vmatpush1.xpose.msra.mxu0 0.0
        %953 = vmatprep.subr.mxu0 0.0
        %954 = vmatpush1.xpose.msra.mxu0 0.0
        %955 = vmatprep.subr.mxu0 0.0
        %956 = vmatpush1.xpose.msra.mxu0 0.0
        %957 = vmatprep.subr.mxu0 0.0
        %958 = vmatpush1.xpose.msra.mxu0 0.0
        %959 = vmatprep.subr.mxu0 0.0
        %960 = vmatpush1.xpose.msra.mxu0 0.0
        %961 = vmatprep.subr.mxu0 0.0
        %962 = vmatpush1.xpose.msra.mxu0 0.0
        %963 = vmatprep.subr.mxu0 0.0
        %964 = vmatpush1.xpose.msra.mxu0 0.0
        %965 = vmatprep.subr.mxu0 0.0
        %966 = vmatpush1.xpose.msra.mxu0 0.0
        %967 = vmatprep.subr.mxu0 0.0
        %968 = vmatpush1.xpose.msra.mxu0 0.0
        %969 = vmatprep.subr.mxu0 0.0
        %970 = vmatpush1.xpose.msra.mxu0 0.0
        %971 = vmatprep.subr.mxu0 0.0
        %972 = vmatpush1.xpose.msra.mxu0 0.0
        %973 = vmatprep.subr.mxu0 0.0
        %974 = vmatpush1.xpose.msra.mxu0 0.0
        %975 = vmatprep.subr.mxu0 0.0
        %976 = vmatpush1.xpose.msra.mxu0 0.0
        %977 = vmatprep.subr.mxu0 0.0
        %978 = vmatpush1.xpose.msra.mxu0 0.0
        %979 = vmatprep.subr.mxu0 0.0
        %980 = vmatpush1.xpose.msra.mxu0 0.0
        %981 = vmatprep.subr.mxu0 0.0
        %982 = vmatpush1.xpose.msra.mxu0 0.0
        %983 = vmatprep.subr.mxu0 0.0
        %984 = vmatpush1.xpose.msra.mxu0 0.0
        %985 = vmatprep.subr.mxu0 0.0
        %986 = vmatpush1.xpose.msra.mxu0 0.0
        %987 = vmatprep.subr.mxu0 0.0
        %988 = vmatpush1.xpose.msra.mxu0 0.0
        %989 = vmatprep.subr.mxu0 0.0
        %990 = vmatpush1.xpose.msra.mxu0 0.0
        %991 = vmatprep.subr.mxu0 0.0
        %992 = vmatpush1.xpose.msra.mxu0 0.0
        %993 = vmatprep.subr.mxu0 0.0
        %994 = vmatpush1.xpose.msra.mxu0 0.0
        %995 = vmatprep.subr.mxu0 0.0
        %996 = vmatpush1.xpose.msra.mxu0 0.0
        %997 = vmatprep.subr.mxu0 0.0
        %998 = vmatpush1.xpose.msra.mxu0 0.0
        %999 = vmatprep.subr.mxu0 0.0
        %1000 = vmatpush1.xpose.msra.mxu0 0.0
        %1001 = vmatprep.subr.mxu0 0.0
        %1002 = vmatpush1.xpose.msra.mxu0 0.0
        %1003 = vmatprep.subr.mxu0 0.0
        %1004 = vmatpush1.xpose.msra.mxu0 0.0
        %1005 = vmatprep.mubr.f32.mxu0 0.0
        %1006 = vmatmul.mubr.f32.gmra.mrb[0].mxu0 %v930
        %v1007 = vpop.f32.mrb[0].mxu0
        %v1008 = vadd.f32 0.0, %v1007
        %v1009 = vpop.f32.mrb[0].mxu0
        %1010 = vmatprep.mubr.f32.mxu0 0.0
        %1011 = vmatmul.mubr.f32.gmra.mrb[0].mxu0 %v933
        %v1012 = vpop.f32.mrb[0].mxu0
        %v1013 = vadd.f32 0.0, %v1012
        %v1014 = vpop.f32.mrb[0].mxu0
        %1015 = vdwg.mxu0
        %v1016 = vmul.f32 %v1008, 0.25
        %v1017 = vmul.f32 %v1013, 0.25
        %v1018 = vsel %vm928, %v1016, -inf
        %1019 = vmax.xlane.f32.xlu0 %v1018
        %v1020 = vpop.xlane.xlu0 %1019
        %v1021 = vsel %vm928, %v1017, -inf
        %1022 = vmax.xlane.f32.xlu0 %v1021
        %v1023 = vpop.xlane.xlu0 %1022
        %v1024 = vsub.f32 %v1016, %v1020
        %v1025 = vsub.f32 %v1017, %v1023
        %v1026 = vmul.f32 %v1024, 1.442695
        %v1027 = vpow.pop %v1026
        %v1028 = vmul.f32 %v1025, 1.442695
        %v1029 = vpow.pop %v1028
        %v1030 = vsel %vm928, %v1027, 0.0
        %1031 = vadd.xlane.f32.xlu0 %v1030
        %v1032 = vpop.xlane.xlu0 %1031
        %v1033 = vsel %vm928, %v1029, 0.0
        %1034 = vadd.xlane.f32.xlu0 %v1033
        %v1035 = vpop.xlane.xlu0 %1034
        %v1036 = vrcp.pop %v1032
        %v1037 = vrcp.pop %v1035
        %v1038 = vmul.f32 %v1027, %v1036
        %v1039 = vmul.f32 %v1029, %v1037
        %v1041 = vsel %vm928, %v1038, 0
        %v1044 = vsel %vm928, %v1039, 0
        %1046 = vmatprep.subr.mxu0 0.0
        %1047 = vmatpush1.msra.mxu0 %v920
        %1048 = vmatprep.subr.mxu0 0.0
        %1049 = vmatpush1.msra.mxu0 %v925
        %1050 = vmatprep.subr.mxu0 0.0
        %1051 = vmatpush1.msra.mxu0 0.0
        %1052 = vmatprep.subr.mxu0 0.0
        %1053 = vmatpush1.msra.mxu0 0.0
        %1054 = vmatprep.subr.mxu0 0.0
        %1055 = vmatpush1.msra.mxu0 0.0
        %1056 = vmatprep.subr.mxu0 0.0
        %1057 = vmatpush1.msra.mxu0 0.0
        %1058 = vmatprep.subr.mxu0 0.0
        %1059 = vmatpush1.msra.mxu0 0.0
        %1060 = vmatprep.subr.mxu0 0.0
        %1061 = vmatpush1.msra.mxu0 0.0
        %1062 = vmatprep.subr.mxu0 0.0
        %1063 = vmatpush1.msra.mxu0 0.0
        %1064 = vmatprep.subr.mxu0 0.0
        %1065 = vmatpush1.msra.mxu0 0.0
        %1066 = vmatprep.subr.mxu0 0.0
        %1067 = vmatpush1.msra.mxu0 0.0
        %1068 = vmatprep.subr.mxu0 0.0
        %1069 = vmatpush1.msra.mxu0 0.0
        %1070 = vmatprep.subr.mxu0 0.0
        %1071 = vmatpush1.msra.mxu0 0.0
        %1072 = vmatprep.subr.mxu0 0.0
        %1073 = vmatpush1.msra.mxu0 0.0
        %1074 = vmatprep.subr.mxu0 0.0
        %1075 = vmatpush1.msra.mxu0 0.0
        %1076 = vmatprep.subr.mxu0 0.0
        %1077 = vmatpush1.msra.mxu0 0.0
        %1078 = vmatprep.subr.mxu0 0.0
        %1079 = vmatpush1.msra.mxu0 0.0
        %1080 = vmatprep.subr.mxu0 0.0
        %1081 = vmatpush1.msra.mxu0 0.0
        %1082 = vmatprep.subr.mxu0 0.0
        %1083 = vmatpush1.msra.mxu0 0.0
        %1084 = vmatprep.subr.mxu0 0.0
        %1085 = vmatpush1.msra.mxu0 0.0
        %1086 = vmatprep.subr.mxu0 0.0
        %1087 = vmatpush1.msra.mxu0 0.0
        %1088 = vmatprep.subr.mxu0 0.0
        %1089 = vmatpush1.msra.mxu0 0.0
        %1090 = vmatprep.subr.mxu0 0.0
        %1091 = vmatpush1.msra.mxu0 0.0
        %1092 = vmatprep.subr.mxu0 0.0
        %1093 = vmatpush1.msra.mxu0 0.0
        %1094 = vmatprep.subr.mxu0 0.0
        %1095 = vmatpush1.msra.mxu0 0.0
        %1096 = vmatprep.subr.mxu0 0.0
        %1097 = vmatpush1.msra.mxu0 0.0
        %1098 = vmatprep.subr.mxu0 0.0
        %1099 = vmatpush1.msra.mxu0 0.0
        %1100 = vmatprep.subr.mxu0 0.0
        %1101 = vmatpush1.msra.mxu0 0.0
        %1102 = vmatprep.subr.mxu0 0.0
        %1103 = vmatpush1.msra.mxu0 0.0
        %1104 = vmatprep.subr.mxu0 0.0
        %1105 = vmatpush1.msra.mxu0 0.0
        %1106 = vmatprep.subr.mxu0 0.0
        %1107 = vmatpush1.msra.mxu0 0.0
        %1108 = vmatprep.subr.mxu0 0.0
        %1109 = vmatpush1.msra.mxu0 0.0
        %1110 = vmatprep.mubr.f32.mxu0 0.0
        %1111 = vmatmul.mubr.f32.gmra.mrb[0].mxu0 %v1041
        %v1112 = vpop.f32.mrb[0].mxu0
        %v1113 = vadd.f32 0.0, %v1112
        %v1114 = vpop.f32.mrb[0].mxu0
        %1115 = vmatprep.mubr.f32.mxu0 0.0
        %1116 = vmatmul.mubr.f32.gmra.mrb[0].mxu0 %v1044
        %v1117 = vpop.f32.mrb[0].mxu0
        %v1118 = vadd.f32 0.0, %v1117
        %v1119 = vpop.f32.mrb[0].mxu0
        %1120 = vdwg.mxu0
        %1121 = vrot.lane.b32.xlu0 %v843, 112
        %v1122 = vpop.permute.xlu0 %1121
        %1123 = vrot.lane.b32.xlu0 %v849, 112
        %v1124 = vpop.permute.xlu0 %1123
        %1125 = vrot.lane.b32.xlu0 %v845, 112
        %v1126 = vpop.permute.xlu0 %1125
        %1127 = vrot.lane.b32.xlu0 %v851, 112
        %v1128 = vpop.permute.xlu0 %1127
        %v1129 = vsel %vm928, %v1122, 0
        %v1131 = vsel %vm928, %v1124, 0
        %v1133 = vsel %vm928, %v1126, 0
        %v1135 = vsel %vm928, %v1128, 0
        %1137 = vmatprep.subr.mxu0 0.0
        %1138 = vmatpush1.xpose.msra.mxu0 %v1133
        %1139 = vmatprep.subr.mxu0 0.0
        %1140 = vmatpush1.xpose.msra.mxu0 %v1135
        %1141 = vmatprep.subr.mxu0 0.0
        %1142 = vmatpush1.xpose.msra.mxu0 0.0
        %1143 = vmatprep.subr.mxu0 0.0
        %1144 = vmatpush1.xpose.msra.mxu0 0.0
        %1145 = vmatprep.subr.mxu0 0.0
        %1146 = vmatpush1.xpose.msra.mxu0 0.0
        %1147 = vmatprep.subr.mxu0 0.0
        %1148 = vmatpush1.xpose.msra.mxu0 0.0
        %1149 = vmatprep.subr.mxu0 0.0
        %1150 = vmatpush1.xpose.msra.mxu0 0.0
        %1151 = vmatprep.subr.mxu0 0.0
        %1152 = vmatpush1.xpose.msra.mxu0 0.0
        %1153 = vmatprep.subr.mxu0 0.0
        %1154 = vmatpush1.xpose.msra.mxu0 0.0
        %1155 = vmatprep.subr.mxu0 0.0
        %1156 = vmatpush1.xpose.msra.mxu0 0.0
        %1157 = vmatprep.subr.mxu0 0.0
        %1158 = vmatpush1.xpose.msra.mxu0 0.0
        %1159 = vmatprep.subr.mxu0 0.0
        %1160 = vmatpush1.xpose.msra.mxu0 0.0
        %1161 = vmatprep.subr.mxu0 0.0
        %1162 = vmatpush1.xpose.msra.mxu0 0.0
        %1163 = vmatprep.subr.mxu0 0.0
        %1164 = vmatpush1.xpose.msra.mxu0 0.0
        %1165 = vmatprep.subr.mxu0 0.0
        %1166 = vmatpush1.xpose.msra.mxu0 0.0
        %1167 = vmatprep.subr.mxu0 0.0
        %1168 = vmatpush1.xpose.msra.mxu0 0.0
        %1169 = vmatprep.subr.mxu0 0.0
        %1170 = vmatpush1.xpose.msra.mxu0 0.0
        %1171 = vmatprep.subr.mxu0 0.0
        %1172 = vmatpush1.xpose.msra.mxu0 0.0
        %1173 = vmatprep.subr.mxu0 0.0
        %1174 = vmatpush1.xpose.msra.mxu0 0.0
        %1175 = vmatprep.subr.mxu0 0.0
        %1176 = vmatpush1.xpose.msra.mxu0 0.0
        %1177 = vmatprep.subr.mxu0 0.0
        %1178 = vmatpush1.xpose.msra.mxu0 0.0
        %1179 = vmatprep.subr.mxu0 0.0
        %1180 = vmatpush1.xpose.msra.mxu0 0.0
        %1181 = vmatprep.subr.mxu0 0.0
        %1182 = vmatpush1.xpose.msra.mxu0 0.0
        %1183 = vmatprep.subr.mxu0 0.0
        %1184 = vmatpush1.xpose.msra.mxu0 0.0
        %1185 = vmatprep.subr.mxu0 0.0
        %1186 = vmatpush1.xpose.msra.mxu0 0.0
        %1187 = vmatprep.subr.mxu0 0.0
        %1188 = vmatpush1.xpose.msra.mxu0 0.0
        %1189 = vmatprep.subr.mxu0 0.0
        %1190 = vmatpush1.xpose.msra.mxu0 0.0
        %1191 = vmatprep.subr.mxu0 0.0
        %1192 = vmatpush1.xpose.msra.mxu0 0.0
        %1193 = vmatprep.subr.mxu0 0.0
        %1194 = vmatpush1.xpose.msra.mxu0 0.0
        %1195 = vmatprep.subr.mxu0 0.0
        %1196 = vmatpush1.xpose.msra.mxu0 0.0
        %1197 = vmatprep.subr.mxu0 0.0
        %1198 = vmatpush1.xpose.msra.mxu0 0.0
        %1199 = vmatprep.subr.mxu0 0.0
        %1200 = vmatpush1.xpose.msra.mxu0 0.0
        %1201 = vmatprep.mubr.f32.mxu0 0.0
        %1202 = vmatmul.mubr.f32.gmra.mrb[0].mxu0 %v1129
        %v1203 = vpop.f32.mrb[0].mxu0
        %v1204 = vadd.f32 0.0, %v1203
        %v1205 = vpop.f32.mrb[0].mxu0
        %1206 = vmatprep.mubr.f32.mxu0 0.0
        %1207 = vmatmul.mubr.f32.gmra.mrb[0].mxu0 %v1131
        %v1208 = vpop.f32.mrb[0].mxu0
        %v1209 = vadd.f32 0.0, %v1208
        %v1210 = vpop.f32.mrb[0].mxu0
        %1211 = vdwg.mxu0
        %v1212 = vmul.f32 %v1204, 0.25
        %v1213 = vmul.f32 %v1209, 0.25
        %v1214 = vsel %vm928, %v1212, -inf
        %1215 = vmax.xlane.f32.xlu0 %v1214
        %v1216 = vpop.xlane.xlu0 %1215
        %v1217 = vsel %vm928, %v1213, -inf
        %1218 = vmax.xlane.f32.xlu0 %v1217
        %v1219 = vpop.xlane.xlu0 %1218
        %v1220 = vsub.f32 %v1212, %v1216
        %v1221 = vsub.f32 %v1213, %v1219
        %v1222 = vmul.f32 %v1220, 1.442695
        %v1223 = vpow.pop %v1222
        %v1224 = vmul.f32 %v1221, 1.442695
        %v1225 = vpow.pop %v1224
        %v1226 = vsel %vm928, %v1223, 0.0
        %1227 = vadd.xlane.f32.xlu0 %v1226
        %v1228 = vpop.xlane.xlu0 %1227
        %v1229 = vsel %vm928, %v1225, 0.0
        %1230 = vadd.xlane.f32.xlu0 %v1229
        %v1231 = vpop.xlane.xlu0 %1230
        %v1232 = vrcp.pop %v1228
        %v1233 = vrcp.pop %v1231
        %v1234 = vmul.f32 %v1223, %v1232
        %v1235 = vmul.f32 %v1225, %v1233
        %1238 = vrot.lane.b32.xlu0 %v920, 112
        %v1239 = vpop.permute.xlu0 %1238
        %1240 = vrot.lane.b32.xlu0 %v925, 112
        %v1241 = vpop.permute.xlu0 %1240
        %v1245 = vsel %vm928, %v1234, 0
        %v1248 = vsel %vm928, %v1235, 0
        %1250 = vmatprep.subr.mxu0 0.0
        %1251 = vmatpush1.msra.mxu0 %v1239
        %1252 = vmatprep.subr.mxu0 0.0
        %1253 = vmatpush1.msra.mxu0 %v1241
        %1254 = vmatprep.subr.mxu0 0.0
        %1255 = vmatpush1.msra.mxu0 0.0
        %1256 = vmatprep.subr.mxu0 0.0
        %1257 = vmatpush1.msra.mxu0 0.0
        %1258 = vmatprep.subr.mxu0 0.0
        %1259 = vmatpush1.msra.mxu0 0.0
        %1260 = vmatprep.subr.mxu0 0.0
        %1261 = vmatpush1.msra.mxu0 0.0
        %1262 = vmatprep.subr.mxu0 0.0
        %1263 = vmatpush1.msra.mxu0 0.0
        %1264 = vmatprep.subr.mxu0 0.0
        %1265 = vmatpush1.msra.mxu0 0.0
        %1266 = vmatprep.subr.mxu0 0.0
        %1267 = vmatpush1.msra.mxu0 0.0
        %1268 = vmatprep.subr.mxu0 0.0
        %1269 = vmatpush1.msra.mxu0 0.0
        %1270 = vmatprep.subr.mxu0 0.0
        %1271 = vmatpush1.msra.mxu0 0.0
        %1272 = vmatprep.subr.mxu0 0.0
        %1273 = vmatpush1.msra.mxu0 0.0
        %1274 = vmatprep.subr.mxu0 0.0
        %1275 = vmatpush1.msra.mxu0 0.0
        %1276 = vmatprep.subr.mxu0 0.0
        %1277 = vmatpush1.msra.mxu0 0.0
        %1278 = vmatprep.subr.mxu0 0.0
        %1279 = vmatpush1.msra.mxu0 0.0
        %1280 = vmatprep.subr.mxu0 0.0
        %1281 = vmatpush1.msra.mxu0 0.0
        %1282 = vmatprep.subr.mxu0 0.0
        %1283 = vmatpush1.msra.mxu0 0.0
        %1284 = vmatprep.subr.mxu0 0.0
        %1285 = vmatpush1.msra.mxu0 0.0
        %1286 = vmatprep.subr.mxu0 0.0
        %1287 = vmatpush1.msra.mxu0 0.0
        %1288 = vmatprep.subr.mxu0 0.0
        %1289 = vmatpush1.msra.mxu0 0.0
        %1290 = vmatprep.subr.mxu0 0.0
        %1291 = vmatpush1.msra.mxu0 0.0
        %1292 = vmatprep.subr.mxu0 0.0
        %1293 = vmatpush1.msra.mxu0 0.0
        %1294 = vmatprep.subr.mxu0 0.0
        %1295 = vmatpush1.msra.mxu0 0.0
        %1296 = vmatprep.subr.mxu0 0.0
        %1297 = vmatpush1.msra.mxu0 0.0
        %1298 = vmatprep.subr.mxu0 0.0
        %1299 = vmatpush1.msra.mxu0 0.0
        %1300 = vmatprep.subr.mxu0 0.0
        %1301 = vmatpush1.msra.mxu0 0.0
        %1302 = vmatprep.subr.mxu0 0.0
        %1303 = vmatpush1.msra.mxu0 0.0
        %1304 = vmatprep.subr.mxu0 0.0
        %1305 = vmatpush1.msra.mxu0 0.0
        %1306 = vmatprep.subr.mxu0 0.0
        %1307 = vmatpush1.msra.mxu0 0.0
        %1308 = vmatprep.subr.mxu0 0.0
        %1309 = vmatpush1.msra.mxu0 0.0
        %1310 = vmatprep.subr.mxu0 0.0
        %1311 = vmatpush1.msra.mxu0 0.0
        %1312 = vmatprep.subr.mxu0 0.0
        %1313 = vmatpush1.msra.mxu0 0.0
        %1314 = vmatprep.mubr.f32.mxu0 0.0
        %1315 = vmatmul.mubr.f32.gmra.mrb[0].mxu0 %v1245
        %v1316 = vpop.f32.mrb[0].mxu0
        %v1317 = vadd.f32 0.0, %v1316
        %v1318 = vpop.f32.mrb[0].mxu0
        %1319 = vmatprep.mubr.f32.mxu0 0.0
        %1320 = vmatmul.mubr.f32.gmra.mrb[0].mxu0 %v1248
        %v1321 = vpop.f32.mrb[0].mxu0
        %v1322 = vadd.f32 0.0, %v1321
        %v1323 = vpop.f32.mrb[0].mxu0
        %1324 = vdwg.mxu0
        %1325 = vrot.lane.b32.xlu0 %v843, 96
        %v1326 = vpop.permute.xlu0 %1325
        %1327 = vrot.lane.b32.xlu0 %v849, 96
        %v1328 = vpop.permute.xlu0 %1327
        %1329 = vrot.lane.b32.xlu0 %v845, 96
        %v1330 = vpop.permute.xlu0 %1329
        %1331 = vrot.lane.b32.xlu0 %v851, 96
        %v1332 = vpop.permute.xlu0 %1331
        %v1333 = vsel %vm928, %v1326, 0
        %v1335 = vsel %vm928, %v1328, 0
        %v1337 = vsel %vm928, %v1330, 0
        %v1339 = vsel %vm928, %v1332, 0
        %1341 = vmatprep.subr.mxu0 0.0
        %1342 = vmatpush1.xpose.msra.mxu0 %v1337
        %1343 = vmatprep.subr.mxu0 0.0
        %1344 = vmatpush1.xpose.msra.mxu0 %v1339
        %1345 = vmatprep.subr.mxu0 0.0
        %1346 = vmatpush1.xpose.msra.mxu0 0.0
        %1347 = vmatprep.subr.mxu0 0.0
        %1348 = vmatpush1.xpose.msra.mxu0 0.0
        %1349 = vmatprep.subr.mxu0 0.0
        %1350 = vmatpush1.xpose.msra.mxu0 0.0
        %1351 = vmatprep.subr.mxu0 0.0
        %1352 = vmatpush1.xpose.msra.mxu0 0.0
        %1353 = vmatprep.subr.mxu0 0.0
        %1354 = vmatpush1.xpose.msra.mxu0 0.0
        %1355 = vmatprep.subr.mxu0 0.0
        %1356 = vmatpush1.xpose.msra.mxu0 0.0
        %1357 = vmatprep.subr.mxu0 0.0
        %1358 = vmatpush1.xpose.msra.mxu0 0.0
        %1359 = vmatprep.subr.mxu0 0.0
        %1360 = vmatpush1.xpose.msra.mxu0 0.0
        %1361 = vmatprep.subr.mxu0 0.0
        %1362 = vmatpush1.xpose.msra.mxu0 0.0
        %1363 = vmatprep.subr.mxu0 0.0
        %1364 = vmatpush1.xpose.msra.mxu0 0.0
        %1365 = vmatprep.subr.mxu0 0.0
        %1366 = vmatpush1.xpose.msra.mxu0 0.0
        %1367 = vmatprep.subr.mxu0 0.0
        %1368 = vmatpush1.xpose.msra.mxu0 0.0
        %1369 = vmatprep.subr.mxu0 0.0
        %1370 = vmatpush1.xpose.msra.mxu0 0.0
        %1371 = vmatprep.subr.mxu0 0.0
        %1372 = vmatpush1.xpose.msra.mxu0 0.0
        %1373 = vmatprep.subr.mxu0 0.0
        %1374 = vmatpush1.xpose.msra.mxu0 0.0
        %1375 = vmatprep.subr.mxu0 0.0
        %1376 = vmatpush1.xpose.msra.mxu0 0.0
        %1377 = vmatprep.subr.mxu0 0.0
        %1378 = vmatpush1.xpose.msra.mxu0 0.0
        %1379 = vmatprep.subr.mxu0 0.0
        %1380 = vmatpush1.xpose.msra.mxu0 0.0
        %1381 = vmatprep.subr.mxu0 0.0
        %1382 = vmatpush1.xpose.msra.mxu0 0.0
        %1383 = vmatprep.subr.mxu0 0.0
        %1384 = vmatpush1.xpose.msra.mxu0 0.0
        %1385 = vmatprep.subr.mxu0 0.0
        %1386 = vmatpush1.xpose.msra.mxu0 0.0
        %1387 = vmatprep.subr.mxu0 0.0
        %1388 = vmatpush1.xpose.msra.mxu0 0.0
        %1389 = vmatprep.subr.mxu0 0.0
        %1390 = vmatpush1.xpose.msra.mxu0 0.0
        %1391 = vmatprep.subr.mxu0 0.0
        %1392 = vmatpush1.xpose.msra.mxu0 0.0
        %1393 = vmatprep.subr.mxu0 0.0
        %1394 = vmatpush1.xpose.msra.mxu0 0.0
        %1395 = vmatprep.subr.mxu0 0.0
        %1396 = vmatpush1.xpose.msra.mxu0 0.0
        %1397 = vmatprep.subr.mxu0 0.0
        %1398 = vmatpush1.xpose.msra.mxu0 0.0
        %1399 = vmatprep.subr.mxu0 0.0
        %1400 = vmatpush1.xpose.msra.mxu0 0.0
        %1401 = vmatprep.subr.mxu0 0.0
        %1402 = vmatpush1.xpose.msra.mxu0 0.0
        %1403 = vmatprep.subr.mxu0 0.0
        %1404 = vmatpush1.xpose.msra.mxu0 0.0
        %1405 = vmatprep.mubr.f32.mxu0 0.0
        %1406 = vmatmul.mubr.f32.gmra.mrb[0].mxu0 %v1333
        %v1407 = vpop.f32.mrb[0].mxu0
        %v1408 = vadd.f32 0.0, %v1407
        %v1409 = vpop.f32.mrb[0].mxu0
        %1410 = vmatprep.mubr.f32.mxu0 0.0
        %1411 = vmatmul.mubr.f32.gmra.mrb[0].mxu0 %v1335
        %v1412 = vpop.f32.mrb[0].mxu0
        %v1413 = vadd.f32 0.0, %v1412
        %v1414 = vpop.f32.mrb[0].mxu0
        %1415 = vdwg.mxu0
        %v1416 = vmul.f32 %v1408, 0.25
        %v1417 = vmul.f32 %v1413, 0.25
        %v1418 = vsel %vm928, %v1416, -inf
        %1419 = vmax.xlane.f32.xlu0 %v1418
        %v1420 = vpop.xlane.xlu0 %1419
        %v1421 = vsel %vm928, %v1417, -inf
        %1422 = vmax.xlane.f32.xlu0 %v1421
        %v1423 = vpop.xlane.xlu0 %1422
        %v1424 = vsub.f32 %v1416, %v1420
        %v1425 = vsub.f32 %v1417, %v1423
        %v1426 = vmul.f32 %v1424, 1.442695
        %v1427 = vpow.pop %v1426
        %v1428 = vmul.f32 %v1425, 1.442695
        %v1429 = vpow.pop %v1428
        %v1430 = vsel %vm928, %v1427, 0.0
        %1431 = vadd.xlane.f32.xlu0 %v1430
        %v1432 = vpop.xlane.xlu0 %1431
        %v1433 = vsel %vm928, %v1429, 0.0
        %1434 = vadd.xlane.f32.xlu0 %v1433
        %v1435 = vpop.xlane.xlu0 %1434
        %v1436 = vrcp.pop %v1432
        %v1437 = vrcp.pop %v1435
        %v1438 = vmul.f32 %v1427, %v1436
        %v1439 = vmul.f32 %v1429, %v1437
        %1440 = vrot.lane.b32.xlu0 %v920, 96
        %v1441 = vpop.permute.xlu0 %1440
        %1442 = vrot.lane.b32.xlu0 %v925, 96
        %v1443 = vpop.permute.xlu0 %1442
        %v1447 = vsel %vm928, %v1438, 0
        %v1450 = vsel %vm928, %v1439, 0
        %1452 = vmatprep.subr.mxu0 0.0
        %1453 = vmatpush1.msra.mxu0 %v1441
        %1454 = vmatprep.subr.mxu0 0.0
        %1455 = vmatpush1.msra.mxu0 %v1443
        %1456 = vmatprep.subr.mxu0 0.0
        %1457 = vmatpush1.msra.mxu0 0.0
        %1458 = vmatprep.subr.mxu0 0.0
        %1459 = vmatpush1.msra.mxu0 0.0
        %1460 = vmatprep.subr.mxu0 0.0
        %1461 = vmatpush1.msra.mxu0 0.0
        %1462 = vmatprep.subr.mxu0 0.0
        %1463 = vmatpush1.msra.mxu0 0.0
        %1464 = vmatprep.subr.mxu0 0.0
        %1465 = vmatpush1.msra.mxu0 0.0
        %1466 = vmatprep.subr.mxu0 0.0
        %1467 = vmatpush1.msra.mxu0 0.0
        %1468 = vmatprep.subr.mxu0 0.0
        %1469 = vmatpush1.msra.mxu0 0.0
        %1470 = vmatprep.subr.mxu0 0.0
        %1471 = vmatpush1.msra.mxu0 0.0
        %1472 = vmatprep.subr.mxu0 0.0
        %1473 = vmatpush1.msra.mxu0 0.0
        %1474 = vmatprep.subr.mxu0 0.0
        %1475 = vmatpush1.msra.mxu0 0.0
        %1476 = vmatprep.subr.mxu0 0.0
        %1477 = vmatpush1.msra.mxu0 0.0
        %1478 = vmatprep.subr.mxu0 0.0
        %1479 = vmatpush1.msra.mxu0 0.0
        %1480 = vmatprep.subr.mxu0 0.0
        %1481 = vmatpush1.msra.mxu0 0.0
        %1482 = vmatprep.subr.mxu0 0.0
        %1483 = vmatpush1.msra.mxu0 0.0
        %1484 = vmatprep.subr.mxu0 0.0
        %1485 = vmatpush1.msra.mxu0 0.0
        %1486 = vmatprep.subr.mxu0 0.0
        %1487 = vmatpush1.msra.mxu0 0.0
        %1488 = vmatprep.subr.mxu0 0.0
        %1489 = vmatpush1.msra.mxu0 0.0
        %1490 = vmatprep.subr.mxu0 0.0
        %1491 = vmatpush1.msra.mxu0 0.0
        %1492 = vmatprep.subr.mxu0 0.0
        %1493 = vmatpush1.msra.mxu0 0.0
        %1494 = vmatprep.subr.mxu0 0.0
        %1495 = vmatpush1.msra.mxu0 0.0
        %1496 = vmatprep.subr.mxu0 0.0
        %1497 = vmatpush1.msra.mxu0 0.0
        %1498 = vmatprep.subr.mxu0 0.0
        %1499 = vmatpush1.msra.mxu0 0.0
        %1500 = vmatprep.subr.mxu0 0.0
        %1501 = vmatpush1.msra.mxu0 0.0
        %1502 = vmatprep.subr.mxu0 0.0
        %1503 = vmatpush1.msra.mxu0 0.0
        %1504 = vmatprep.subr.mxu0 0.0
        %1505 = vmatpush1.msra.mxu0 0.0
        %1506 = vmatprep.subr.mxu0 0.0
        %1507 = vmatpush1.msra.mxu0 0.0
        %1508 = vmatprep.subr.mxu0 0.0
        %1509 = vmatpush1.msra.mxu0 0.0
        %1510 = vmatprep.subr.mxu0 0.0
        %1511 = vmatpush1.msra.mxu0 0.0
        %1512 = vmatprep.subr.mxu0 0.0
        %1513 = vmatpush1.msra.mxu0 0.0
        %1514 = vmatprep.subr.mxu0 0.0
        %1515 = vmatpush1.msra.mxu0 0.0
        %1516 = vmatprep.mubr.f32.mxu0 0.0
        %1517 = vmatmul.mubr.f32.gmra.mrb[0].mxu0 %v1447
        %v1518 = vpop.f32.mrb[0].mxu0
        %v1519 = vadd.f32 0.0, %v1518
        %v1520 = vpop.f32.mrb[0].mxu0
        %1521 = vmatprep.mubr.f32.mxu0 0.0
        %1522 = vmatmul.mubr.f32.gmra.mrb[0].mxu0 %v1450
        %v1523 = vpop.f32.mrb[0].mxu0
        %v1524 = vadd.f32 0.0, %v1523
        %v1525 = vpop.f32.mrb[0].mxu0
        %1526 = vdwg.mxu0
        %1527 = vrot.lane.b32.xlu0 %v843, 80
        %v1528 = vpop.permute.xlu0 %1527
        %1529 = vrot.lane.b32.xlu0 %v849, 80
        %v1530 = vpop.permute.xlu0 %1529
        %1531 = vrot.lane.b32.xlu0 %v845, 80
        %v1532 = vpop.permute.xlu0 %1531
        %1533 = vrot.lane.b32.xlu0 %v851, 80
        %v1534 = vpop.permute.xlu0 %1533
        %v1535 = vsel %vm928, %v1528, 0
        %v1537 = vsel %vm928, %v1530, 0
        %v1539 = vsel %vm928, %v1532, 0
        %v1541 = vsel %vm928, %v1534, 0
        %1543 = vmatprep.subr.mxu0 0.0
        %1544 = vmatpush1.xpose.msra.mxu0 %v1539
        %1545 = vmatprep.subr.mxu0 0.0
        %1546 = vmatpush1.xpose.msra.mxu0 %v1541
        %1547 = vmatprep.subr.mxu0 0.0
        %1548 = vmatpush1.xpose.msra.mxu0 0.0
        %1549 = vmatprep.subr.mxu0 0.0
        %1550 = vmatpush1.xpose.msra.mxu0 0.0
        %1551 = vmatprep.subr.mxu0 0.0
        %1552 = vmatpush1.xpose.msra.mxu0 0.0
        %1553 = vmatprep.subr.mxu0 0.0
        %1554 = vmatpush1.xpose.msra.mxu0 0.0
        %1555 = vmatprep.subr.mxu0 0.0
        %1556 = vmatpush1.xpose.msra.mxu0 0.0
        %1557 = vmatprep.subr.mxu0 0.0
        %1558 = vmatpush1.xpose.msra.mxu0 0.0
        %1559 = vmatprep.subr.mxu0 0.0
        %1560 = vmatpush1.xpose.msra.mxu0 0.0
        %1561 = vmatprep.subr.mxu0 0.0
        %1562 = vmatpush1.xpose.msra.mxu0 0.0
        %1563 = vmatprep.subr.mxu0 0.0
        %1564 = vmatpush1.xpose.msra.mxu0 0.0
        %1565 = vmatprep.subr.mxu0 0.0
        %1566 = vmatpush1.xpose.msra.mxu0 0.0
        %1567 = vmatprep.subr.mxu0 0.0
        %1568 = vmatpush1.xpose.msra.mxu0 0.0
        %1569 = vmatprep.subr.mxu0 0.0
        %1570 = vmatpush1.xpose.msra.mxu0 0.0
        %1571 = vmatprep.subr.mxu0 0.0
        %1572 = vmatpush1.xpose.msra.mxu0 0.0
        %1573 = vmatprep.subr.mxu0 0.0
        %1574 = vmatpush1.xpose.msra.mxu0 0.0
        %1575 = vmatprep.subr.mxu0 0.0
        %1576 = vmatpush1.xpose.msra.mxu0 0.0
        %1577 = vmatprep.subr.mxu0 0.0
        %1578 = vmatpush1.xpose.msra.mxu0 0.0
        %1579 = vmatprep.subr.mxu0 0.0
        %1580 = vmatpush1.xpose.msra.mxu0 0.0
        %1581 = vmatprep.subr.mxu0 0.0
        %1582 = vmatpush1.xpose.msra.mxu0 0.0
        %1583 = vmatprep.subr.mxu0 0.0
        %1584 = vmatpush1.xpose.msra.mxu0 0.0
        %1585 = vmatprep.subr.mxu0 0.0
        %1586 = vmatpush1.xpose.msra.mxu0 0.0
        %1587 = vmatprep.subr.mxu0 0.0
        %1588 = vmatpush1.xpose.msra.mxu0 0.0
        %1589 = vmatprep.subr.mxu0 0.0
        %1590 = vmatpush1.xpose.msra.mxu0 0.0
        %1591 = vmatprep.subr.mxu0 0.0
        %1592 = vmatpush1.xpose.msra.mxu0 0.0
        %1593 = vmatprep.subr.mxu0 0.0
        %1594 = vmatpush1.xpose.msra.mxu0 0.0
        %1595 = vmatprep.subr.mxu0 0.0
        %1596 = vmatpush1.xpose.msra.mxu0 0.0
        %1597 = vmatprep.subr.mxu0 0.0
        %1598 = vmatpush1.xpose.msra.mxu0 0.0
        %1599 = vmatprep.subr.mxu0 0.0
        %1600 = vmatpush1.xpose.msra.mxu0 0.0
        %1601 = vmatprep.subr.mxu0 0.0
        %1602 = vmatpush1.xpose.msra.mxu0 0.0
        %1603 = vmatprep.subr.mxu0 0.0
        %1604 = vmatpush1.xpose.msra.mxu0 0.0
        %1605 = vmatprep.subr.mxu0 0.0
        %1606 = vmatpush1.xpose.msra.mxu0 0.0
        %1607 = vmatprep.mubr.f32.mxu0 0.0
        %1608 = vmatmul.mubr.f32.gmra.mrb[0].mxu0 %v1535
        %v1609 = vpop.f32.mrb[0].mxu0
        %v1610 = vadd.f32 0.0, %v1609
        %v1611 = vpop.f32.mrb[0].mxu0
        %1612 = vmatprep.mubr.f32.mxu0 0.0
        %1613 = vmatmul.mubr.f32.gmra.mrb[0].mxu0 %v1537
        %v1614 = vpop.f32.mrb[0].mxu0
        %v1615 = vadd.f32 0.0, %v1614
        %v1616 = vpop.f32.mrb[0].mxu0
        %1617 = vdwg.mxu0
        %v1618 = vmul.f32 %v1610, 0.25
        %v1619 = vmul.f32 %v1615, 0.25
        %v1620 = vsel %vm928, %v1618, -inf
        %1621 = vmax.xlane.f32.xlu0 %v1620
        %v1622 = vpop.xlane.xlu0 %1621
        %v1623 = vsel %vm928, %v1619, -inf
        %1624 = vmax.xlane.f32.xlu0 %v1623
        %v1625 = vpop.xlane.xlu0 %1624
        %v1626 = vsub.f32 %v1618, %v1622
        %v1627 = vsub.f32 %v1619, %v1625
        %v1628 = vmul.f32 %v1626, 1.442695
        %v1629 = vpow.pop %v1628
        %v1630 = vmul.f32 %v1627, 1.442695
        %v1631 = vpow.pop %v1630
        %v1632 = vsel %vm928, %v1629, 0.0
        %1633 = vadd.xlane.f32.xlu0 %v1632
        %v1634 = vpop.xlane.xlu0 %1633
        %v1635 = vsel %vm928, %v1631, 0.0
        %1636 = vadd.xlane.f32.xlu0 %v1635
        %v1637 = vpop.xlane.xlu0 %1636
        %v1638 = vrcp.pop %v1634
        %v1639 = vrcp.pop %v1637
        %v1640 = vmul.f32 %v1629, %v1638
        %v1641 = vmul.f32 %v1631, %v1639
        %1642 = vrot.lane.b32.xlu0 %v920, 80
        %v1643 = vpop.permute.xlu0 %1642
        %1644 = vrot.lane.b32.xlu0 %v925, 80
        %v1645 = vpop.permute.xlu0 %1644
        %v1649 = vsel %vm928, %v1640, 0
        %v1652 = vsel %vm928, %v1641, 0
        %1654 = vmatprep.subr.mxu0 0.0
        %1655 = vmatpush1.msra.mxu0 %v1643
        %1656 = vmatprep.subr.mxu0 0.0
        %1657 = vmatpush1.msra.mxu0 %v1645
        %1658 = vmatprep.subr.mxu0 0.0
        %1659 = vmatpush1.msra.mxu0 0.0
        %1660 = vmatprep.subr.mxu0 0.0
        %1661 = vmatpush1.msra.mxu0 0.0
        %1662 = vmatprep.subr.mxu0 0.0
        %1663 = vmatpush1.msra.mxu0 0.0
        %1664 = vmatprep.subr.mxu0 0.0
        %1665 = vmatpush1.msra.mxu0 0.0
        %1666 = vmatprep.subr.mxu0 0.0
        %1667 = vmatpush1.msra.mxu0 0.0
        %1668 = vmatprep.subr.mxu0 0.0
        %1669 = vmatpush1.msra.mxu0 0.0
        %1670 = vmatprep.subr.mxu0 0.0
        %1671 = vmatpush1.msra.mxu0 0.0
        %1672 = vmatprep.subr.mxu0 0.0
        %1673 = vmatpush1.msra.mxu0 0.0
        %1674 = vmatprep.subr.mxu0 0.0
        %1675 = vmatpush1.msra.mxu0 0.0
        %1676 = vmatprep.subr.mxu0 0.0
        %1677 = vmatpush1.msra.mxu0 0.0
        %1678 = vmatprep.subr.mxu0 0.0
        %1679 = vmatpush1.msra.mxu0 0.0
        %1680 = vmatprep.subr.mxu0 0.0
        %1681 = vmatpush1.msra.mxu0 0.0
        %1682 = vmatprep.subr.mxu0 0.0
        %1683 = vmatpush1.msra.mxu0 0.0
        %1684 = vmatprep.subr.mxu0 0.0
        %1685 = vmatpush1.msra.mxu0 0.0
        %1686 = vmatprep.subr.mxu0 0.0
        %1687 = vmatpush1.msra.mxu0 0.0
        %1688 = vmatprep.subr.mxu0 0.0
        %1689 = vmatpush1.msra.mxu0 0.0
        %1690 = vmatprep.subr.mxu0 0.0
        %1691 = vmatpush1.msra.mxu0 0.0
        %1692 = vmatprep.subr.mxu0 0.0
        %1693 = vmatpush1.msra.mxu0 0.0
        %1694 = vmatprep.subr.mxu0 0.0
        %1695 = vmatpush1.msra.mxu0 0.0
        %1696 = vmatprep.subr.mxu0 0.0
        %1697 = vmatpush1.msra.mxu0 0.0
        %1698 = vmatprep.subr.mxu0 0.0
        %1699 = vmatpush1.msra.mxu0 0.0
        %1700 = vmatprep.subr.mxu0 0.0
        %1701 = vmatpush1.msra.mxu0 0.0
        %1702 = vmatprep.subr.mxu0 0.0
        %1703 = vmatpush1.msra.mxu0 0.0
        %1704 = vmatprep.subr.mxu0 0.0
        %1705 = vmatpush1.msra.mxu0 0.0
        %1706 = vmatprep.subr.mxu0 0.0
        %1707 = vmatpush1.msra.mxu0 0.0
        %1708 = vmatprep.subr.mxu0 0.0
        %1709 = vmatpush1.msra.mxu0 0.0
        %1710 = vmatprep.subr.mxu0 0.0
        %1711 = vmatpush1.msra.mxu0 0.0
        %1712 = vmatprep.subr.mxu0 0.0
        %1713 = vmatpush1.msra.mxu0 0.0
        %1714 = vmatprep.subr.mxu0 0.0
        %1715 = vmatpush1.msra.mxu0 0.0
        %1716 = vmatprep.subr.mxu0 0.0
        %1717 = vmatpush1.msra.mxu0 0.0
        %1718 = vmatprep.mubr.f32.mxu0 0.0
        %1719 = vmatmul.mubr.f32.gmra.mrb[0].mxu0 %v1649
        %v1720 = vpop.f32.mrb[0].mxu0
        %v1721 = vadd.f32 0.0, %v1720
        %v1722 = vpop.f32.mrb[0].mxu0
        %1723 = vmatprep.mubr.f32.mxu0 0.0
        %1724 = vmatmul.mubr.f32.gmra.mrb[0].mxu0 %v1652
        %v1725 = vpop.f32.mrb[0].mxu0
        %v1726 = vadd.f32 0.0, %v1725
        %v1727 = vpop.f32.mrb[0].mxu0
        %1728 = vdwg.mxu0
        %1729 = vrot.lane.b32.xlu0 %v843, 64
        %v1730 = vpop.permute.xlu0 %1729
        %1731 = vrot.lane.b32.xlu0 %v849, 64
        %v1732 = vpop.permute.xlu0 %1731
        %1733 = vrot.lane.b32.xlu0 %v845, 64
        %v1734 = vpop.permute.xlu0 %1733
        %1735 = vrot.lane.b32.xlu0 %v851, 64
        %v1736 = vpop.permute.xlu0 %1735
        %v1737 = vsel %vm928, %v1730, 0
        %v1739 = vsel %vm928, %v1732, 0
        %v1741 = vsel %vm928, %v1734, 0
        %v1743 = vsel %vm928, %v1736, 0
        %1745 = vmatprep.subr.mxu0 0.0
        %1746 = vmatpush1.xpose.msra.mxu0 %v1741
        %1747 = vmatprep.subr.mxu0 0.0
        %1748 = vmatpush1.xpose.msra.mxu0 %v1743
        %1749 = vmatprep.subr.mxu0 0.0
        %1750 = vmatpush1.xpose.msra.mxu0 0.0
        %1751 = vmatprep.subr.mxu0 0.0
        %1752 = vmatpush1.xpose.msra.mxu0 0.0
        %1753 = vmatprep.subr.mxu0 0.0
        %1754 = vmatpush1.xpose.msra.mxu0 0.0
        %1755 = vmatprep.subr.mxu0 0.0
        %1756 = vmatpush1.xpose.msra.mxu0 0.0
        %1757 = vmatprep.subr.mxu0 0.0
        %1758 = vmatpush1.xpose.msra.mxu0 0.0
        %1759 = vmatprep.subr.mxu0 0.0
        %1760 = vmatpush1.xpose.msra.mxu0 0.0
        %1761 = vmatprep.subr.mxu0 0.0
        %1762 = vmatpush1.xpose.msra.mxu0 0.0
        %1763 = vmatprep.subr.mxu0 0.0
        %1764 = vmatpush1.xpose.msra.mxu0 0.0
        %1765 = vmatprep.subr.mxu0 0.0
        %1766 = vmatpush1.xpose.msra.mxu0 0.0
        %1767 = vmatprep.subr.mxu0 0.0
        %1768 = vmatpush1.xpose.msra.mxu0 0.0
        %1769 = vmatprep.subr.mxu0 0.0
        %1770 = vmatpush1.xpose.msra.mxu0 0.0
        %1771 = vmatprep.subr.mxu0 0.0
        %1772 = vmatpush1.xpose.msra.mxu0 0.0
        %1773 = vmatprep.subr.mxu0 0.0
        %1774 = vmatpush1.xpose.msra.mxu0 0.0
        %1775 = vmatprep.subr.mxu0 0.0
        %1776 = vmatpush1.xpose.msra.mxu0 0.0
        %1777 = vmatprep.subr.mxu0 0.0
        %1778 = vmatpush1.xpose.msra.mxu0 0.0
        %1779 = vmatprep.subr.mxu0 0.0
        %1780 = vmatpush1.xpose.msra.mxu0 0.0
        %1781 = vmatprep.subr.mxu0 0.0
        %1782 = vmatpush1.xpose.msra.mxu0 0.0
        %1783 = vmatprep.subr.mxu0 0.0
        %1784 = vmatpush1.xpose.msra.mxu0 0.0
        %1785 = vmatprep.subr.mxu0 0.0
        %1786 = vmatpush1.xpose.msra.mxu0 0.0
        %1787 = vmatprep.subr.mxu0 0.0
        %1788 = vmatpush1.xpose.msra.mxu0 0.0
        %1789 = vmatprep.subr.mxu0 0.0
        %1790 = vmatpush1.xpose.msra.mxu0 0.0
        %1791 = vmatprep.subr.mxu0 0.0
        %1792 = vmatpush1.xpose.msra.mxu0 0.0
        %1793 = vmatprep.subr.mxu0 0.0
        %1794 = vmatpush1.xpose.msra.mxu0 0.0
        %1795 = vmatprep.subr.mxu0 0.0
        %1796 = vmatpush1.xpose.msra.mxu0 0.0
        %1797 = vmatprep.subr.mxu0 0.0
        %1798 = vmatpush1.xpose.msra.mxu0 0.0
        %1799 = vmatprep.subr.mxu0 0.0
        %1800 = vmatpush1.xpose.msra.mxu0 0.0
        %1801 = vmatprep.subr.mxu0 0.0
        %1802 = vmatpush1.xpose.msra.mxu0 0.0
        %1803 = vmatprep.subr.mxu0 0.0
        %1804 = vmatpush1.xpose.msra.mxu0 0.0
        %1805 = vmatprep.subr.mxu0 0.0
        %1806 = vmatpush1.xpose.msra.mxu0 0.0
        %1807 = vmatprep.subr.mxu0 0.0
        %1808 = vmatpush1.xpose.msra.mxu0 0.0
        %1809 = vmatprep.mubr.f32.mxu0 0.0
        %1810 = vmatmul.mubr.f32.gmra.mrb[0].mxu0 %v1737
        %v1811 = vpop.f32.mrb[0].mxu0
        %v1812 = vadd.f32 0.0, %v1811
        %v1813 = vpop.f32.mrb[0].mxu0
        %1814 = vmatprep.mubr.f32.mxu0 0.0
        %1815 = vmatmul.mubr.f32.gmra.mrb[0].mxu0 %v1739
        %v1816 = vpop.f32.mrb[0].mxu0
        %v1817 = vadd.f32 0.0, %v1816
        %v1818 = vpop.f32.mrb[0].mxu0
        %1819 = vdwg.mxu0
        %v1820 = vmul.f32 %v1812, 0.25
        %v1821 = vmul.f32 %v1817, 0.25
        %v1822 = vsel %vm928, %v1820, -inf
        %1823 = vmax.xlane.f32.xlu0 %v1822
        %v1824 = vpop.xlane.xlu0 %1823
        %v1825 = vsel %vm928, %v1821, -inf
        %1826 = vmax.xlane.f32.xlu0 %v1825
        %v1827 = vpop.xlane.xlu0 %1826
        %v1828 = vsub.f32 %v1820, %v1824
        %v1829 = vsub.f32 %v1821, %v1827
        %v1830 = vmul.f32 %v1828, 1.442695
        %v1831 = vpow.pop %v1830
        %v1832 = vmul.f32 %v1829, 1.442695
        %v1833 = vpow.pop %v1832
        %v1834 = vsel %vm928, %v1831, 0.0
        %1835 = vadd.xlane.f32.xlu0 %v1834
        %v1836 = vpop.xlane.xlu0 %1835
        %v1837 = vsel %vm928, %v1833, 0.0
        %1838 = vadd.xlane.f32.xlu0 %v1837
        %v1839 = vpop.xlane.xlu0 %1838
        %v1840 = vrcp.pop %v1836
        %v1841 = vrcp.pop %v1839
        %v1842 = vmul.f32 %v1831, %v1840
        %v1843 = vmul.f32 %v1833, %v1841
        %1844 = vrot.lane.b32.xlu0 %v920, 64
        %v1845 = vpop.permute.xlu0 %1844
        %1846 = vrot.lane.b32.xlu0 %v925, 64
        %v1847 = vpop.permute.xlu0 %1846
        %v1851 = vsel %vm928, %v1842, 0
        %v1854 = vsel %vm928, %v1843, 0
        %1856 = vmatprep.subr.mxu0 0.0
        %1857 = vmatpush1.msra.mxu0 %v1845
        %1858 = vmatprep.subr.mxu0 0.0
        %1859 = vmatpush1.msra.mxu0 %v1847
        %1860 = vmatprep.subr.mxu0 0.0
        %1861 = vmatpush1.msra.mxu0 0.0
        %1862 = vmatprep.subr.mxu0 0.0
        %1863 = vmatpush1.msra.mxu0 0.0
        %1864 = vmatprep.subr.mxu0 0.0
        %1865 = vmatpush1.msra.mxu0 0.0
        %1866 = vmatprep.subr.mxu0 0.0
        %1867 = vmatpush1.msra.mxu0 0.0
        %1868 = vmatprep.subr.mxu0 0.0
        %1869 = vmatpush1.msra.mxu0 0.0
        %1870 = vmatprep.subr.mxu0 0.0
        %1871 = vmatpush1.msra.mxu0 0.0
        %1872 = vmatprep.subr.mxu0 0.0
        %1873 = vmatpush1.msra.mxu0 0.0
        %1874 = vmatprep.subr.mxu0 0.0
        %1875 = vmatpush1.msra.mxu0 0.0
        %1876 = vmatprep.subr.mxu0 0.0
        %1877 = vmatpush1.msra.mxu0 0.0
        %1878 = vmatprep.subr.mxu0 0.0
        %1879 = vmatpush1.msra.mxu0 0.0
        %1880 = vmatprep.subr.mxu0 0.0
        %1881 = vmatpush1.msra.mxu0 0.0
        %1882 = vmatprep.subr.mxu0 0.0
        %1883 = vmatpush1.msra.mxu0 0.0
        %1884 = vmatprep.subr.mxu0 0.0
        %1885 = vmatpush1.msra.mxu0 0.0
        %1886 = vmatprep.subr.mxu0 0.0
        %1887 = vmatpush1.msra.mxu0 0.0
        %1888 = vmatprep.subr.mxu0 0.0
        %1889 = vmatpush1.msra.mxu0 0.0
        %1890 = vmatprep.subr.mxu0 0.0
        %1891 = vmatpush1.msra.mxu0 0.0
        %1892 = vmatprep.subr.mxu0 0.0
        %1893 = vmatpush1.msra.mxu0 0.0
        %1894 = vmatprep.subr.mxu0 0.0
        %1895 = vmatpush1.msra.mxu0 0.0
        %1896 = vmatprep.subr.mxu0 0.0
        %1897 = vmatpush1.msra.mxu0 0.0
        %1898 = vmatprep.subr.mxu0 0.0
        %1899 = vmatpush1.msra.mxu0 0.0
        %1900 = vmatprep.subr.mxu0 0.0
        %1901 = vmatpush1.msra.mxu0 0.0
        %1902 = vmatprep.subr.mxu0 0.0
        %1903 = vmatpush1.msra.mxu0 0.0
        %1904 = vmatprep.subr.mxu0 0.0
        %1905 = vmatpush1.msra.mxu0 0.0
        %1906 = vmatprep.subr.mxu0 0.0
        %1907 = vmatpush1.msra.mxu0 0.0
        %1908 = vmatprep.subr.mxu0 0.0
        %1909 = vmatpush1.msra.mxu0 0.0
        %1910 = vmatprep.subr.mxu0 0.0
        %1911 = vmatpush1.msra.mxu0 0.0
        %1912 = vmatprep.subr.mxu0 0.0
        %1913 = vmatpush1.msra.mxu0 0.0
        %1914 = vmatprep.subr.mxu0 0.0
        %1915 = vmatpush1.msra.mxu0 0.0
        %1916 = vmatprep.subr.mxu0 0.0
        %1917 = vmatpush1.msra.mxu0 0.0
        %1918 = vmatprep.subr.mxu0 0.0
        %1919 = vmatpush1.msra.mxu0 0.0
        %1920 = vmatprep.mubr.f32.mxu0 0.0
        %1921 = vmatmul.mubr.f32.gmra.mrb[0].mxu0 %v1851
        %v1922 = vpop.f32.mrb[0].mxu0
        %v1923 = vadd.f32 0.0, %v1922
        %v1924 = vpop.f32.mrb[0].mxu0
        %1925 = vmatprep.mubr.f32.mxu0 0.0
        %1926 = vmatmul.mubr.f32.gmra.mrb[0].mxu0 %v1854
        %v1927 = vpop.f32.mrb[0].mxu0
        %v1928 = vadd.f32 0.0, %v1927
        %v1929 = vpop.f32.mrb[0].mxu0
        %1930 = vdwg.mxu0
        %1931 = vrot.lane.b32.xlu0 %v843, 48
        %v1932 = vpop.permute.xlu0 %1931
        %1933 = vrot.lane.b32.xlu0 %v849, 48
        %v1934 = vpop.permute.xlu0 %1933
        %1935 = vrot.lane.b32.xlu0 %v845, 48
        %v1936 = vpop.permute.xlu0 %1935
        %1937 = vrot.lane.b32.xlu0 %v851, 48
        %v1938 = vpop.permute.xlu0 %1937
        %v1939 = vsel %vm928, %v1932, 0
        %v1941 = vsel %vm928, %v1934, 0
        %v1943 = vsel %vm928, %v1936, 0
        %v1945 = vsel %vm928, %v1938, 0
        %1947 = vmatprep.subr.mxu0 0.0
        %1948 = vmatpush1.xpose.msra.mxu0 %v1943
        %1949 = vmatprep.subr.mxu0 0.0
        %1950 = vmatpush1.xpose.msra.mxu0 %v1945
        %1951 = vmatprep.subr.mxu0 0.0
        %1952 = vmatpush1.xpose.msra.mxu0 0.0
        %1953 = vmatprep.subr.mxu0 0.0
        %1954 = vmatpush1.xpose.msra.mxu0 0.0
        %1955 = vmatprep.subr.mxu0 0.0
        %1956 = vmatpush1.xpose.msra.mxu0 0.0
        %1957 = vmatprep.subr.mxu0 0.0
        %1958 = vmatpush1.xpose.msra.mxu0 0.0
        %1959 = vmatprep.subr.mxu0 0.0
        %1960 = vmatpush1.xpose.msra.mxu0 0.0
        %1961 = vmatprep.subr.mxu0 0.0
        %1962 = vmatpush1.xpose.msra.mxu0 0.0
        %1963 = vmatprep.subr.mxu0 0.0
        %1964 = vmatpush1.xpose.msra.mxu0 0.0
        %1965 = vmatprep.subr.mxu0 0.0
        %1966 = vmatpush1.xpose.msra.mxu0 0.0
        %1967 = vmatprep.subr.mxu0 0.0
        %1968 = vmatpush1.xpose.msra.mxu0 0.0
        %1969 = vmatprep.subr.mxu0 0.0
        %1970 = vmatpush1.xpose.msra.mxu0 0.0
        %1971 = vmatprep.subr.mxu0 0.0
        %1972 = vmatpush1.xpose.msra.mxu0 0.0
        %1973 = vmatprep.subr.mxu0 0.0
        %1974 = vmatpush1.xpose.msra.mxu0 0.0
        %1975 = vmatprep.subr.mxu0 0.0
        %1976 = vmatpush1.xpose.msra.mxu0 0.0
        %1977 = vmatprep.subr.mxu0 0.0
        %1978 = vmatpush1.xpose.msra.mxu0 0.0
        %1979 = vmatprep.subr.mxu0 0.0
        %1980 = vmatpush1.xpose.msra.mxu0 0.0
        %1981 = vmatprep.subr.mxu0 0.0
        %1982 = vmatpush1.xpose.msra.mxu0 0.0
        %1983 = vmatprep.subr.mxu0 0.0
        %1984 = vmatpush1.xpose.msra.mxu0 0.0
        %1985 = vmatprep.subr.mxu0 0.0
        %1986 = vmatpush1.xpose.msra.mxu0 0.0
        %1987 = vmatprep.subr.mxu0 0.0
        %1988 = vmatpush1.xpose.msra.mxu0 0.0
        %1989 = vmatprep.subr.mxu0 0.0
        %1990 = vmatpush1.xpose.msra.mxu0 0.0
        %1991 = vmatprep.subr.mxu0 0.0
        %1992 = vmatpush1.xpose.msra.mxu0 0.0
        %1993 = vmatprep.subr.mxu0 0.0
        %1994 = vmatpush1.xpose.msra.mxu0 0.0
        %1995 = vmatprep.subr.mxu0 0.0
        %1996 = vmatpush1.xpose.msra.mxu0 0.0
        %1997 = vmatprep.subr.mxu0 0.0
        %1998 = vmatpush1.xpose.msra.mxu0 0.0
        %1999 = vmatprep.subr.mxu0 0.0
        %2000 = vmatpush1.xpose.msra.mxu0 0.0
        %2001 = vmatprep.subr.mxu0 0.0
        %2002 = vmatpush1.xpose.msra.mxu0 0.0
        %2003 = vmatprep.subr.mxu0 0.0
        %2004 = vmatpush1.xpose.msra.mxu0 0.0
        %2005 = vmatprep.subr.mxu0 0.0
        %2006 = vmatpush1.xpose.msra.mxu0 0.0
        %2007 = vmatprep.subr.mxu0 0.0
        %2008 = vmatpush1.xpose.msra.mxu0 0.0
        %2009 = vmatprep.subr.mxu0 0.0
        %2010 = vmatpush1.xpose.msra.mxu0 0.0
        %2011 = vmatprep.mubr.f32.mxu0 0.0
        %2012 = vmatmul.mubr.f32.gmra.mrb[0].mxu0 %v1939
        %v2013 = vpop.f32.mrb[0].mxu0
        %v2014 = vadd.f32 0.0, %v2013
        %v2015 = vpop.f32.mrb[0].mxu0
        %2016 = vmatprep.mubr.f32.mxu0 0.0
        %2017 = vmatmul.mubr.f32.gmra.mrb[0].mxu0 %v1941
        %v2018 = vpop.f32.mrb[0].mxu0
        %v2019 = vadd.f32 0.0, %v2018
        %v2020 = vpop.f32.mrb[0].mxu0
        %2021 = vdwg.mxu0
        %v2022 = vmul.f32 %v2014, 0.25
        %v2023 = vmul.f32 %v2019, 0.25
        %v2024 = vsel %vm928, %v2022, -inf
        %2025 = vmax.xlane.f32.xlu0 %v2024
        %v2026 = vpop.xlane.xlu0 %2025
        %v2027 = vsel %vm928, %v2023, -inf
        %2028 = vmax.xlane.f32.xlu0 %v2027
        %v2029 = vpop.xlane.xlu0 %2028
        %v2030 = vsub.f32 %v2022, %v2026
        %v2031 = vsub.f32 %v2023, %v2029
        %v2032 = vmul.f32 %v2030, 1.442695
        %v2033 = vpow.pop %v2032
        %v2034 = vmul.f32 %v2031, 1.442695
        %v2035 = vpow.pop %v2034
        %v2036 = vsel %vm928, %v2033, 0.0
        %2037 = vadd.xlane.f32.xlu0 %v2036
        %v2038 = vpop.xlane.xlu0 %2037
        %v2039 = vsel %vm928, %v2035, 0.0
        %2040 = vadd.xlane.f32.xlu0 %v2039
        %v2041 = vpop.xlane.xlu0 %2040
        %v2042 = vrcp.pop %v2038
        %v2043 = vrcp.pop %v2041
        %v2044 = vmul.f32 %v2033, %v2042
        %v2045 = vmul.f32 %v2035, %v2043
        %2046 = vrot.lane.b32.xlu0 %v920, 48
        %v2047 = vpop.permute.xlu0 %2046
        %2048 = vrot.lane.b32.xlu0 %v925, 48
        %v2049 = vpop.permute.xlu0 %2048
        %v2053 = vsel %vm928, %v2044, 0
        %v2056 = vsel %vm928, %v2045, 0
        %2058 = vmatprep.subr.mxu0 0.0
        %2059 = vmatpush1.msra.mxu0 %v2047
        %2060 = vmatprep.subr.mxu0 0.0
        %2061 = vmatpush1.msra.mxu0 %v2049
        %2062 = vmatprep.subr.mxu0 0.0
        %2063 = vmatpush1.msra.mxu0 0.0
        %2064 = vmatprep.subr.mxu0 0.0
        %2065 = vmatpush1.msra.mxu0 0.0
        %2066 = vmatprep.subr.mxu0 0.0
        %2067 = vmatpush1.msra.mxu0 0.0
        %2068 = vmatprep.subr.mxu0 0.0
        %2069 = vmatpush1.msra.mxu0 0.0
        %2070 = vmatprep.subr.mxu0 0.0
        %2071 = vmatpush1.msra.mxu0 0.0
        %2072 = vmatprep.subr.mxu0 0.0
        %2073 = vmatpush1.msra.mxu0 0.0
        %2074 = vmatprep.subr.mxu0 0.0
        %2075 = vmatpush1.msra.mxu0 0.0
        %2076 = vmatprep.subr.mxu0 0.0
        %2077 = vmatpush1.msra.mxu0 0.0
        %2078 = vmatprep.subr.mxu0 0.0
        %2079 = vmatpush1.msra.mxu0 0.0
        %2080 = vmatprep.subr.mxu0 0.0
        %2081 = vmatpush1.msra.mxu0 0.0
        %2082 = vmatprep.subr.mxu0 0.0
        %2083 = vmatpush1.msra.mxu0 0.0
        %2084 = vmatprep.subr.mxu0 0.0
        %2085 = vmatpush1.msra.mxu0 0.0
        %2086 = vmatprep.subr.mxu0 0.0
        %2087 = vmatpush1.msra.mxu0 0.0
        %2088 = vmatprep.subr.mxu0 0.0
        %2089 = vmatpush1.msra.mxu0 0.0
        %2090 = vmatprep.subr.mxu0 0.0
        %2091 = vmatpush1.msra.mxu0 0.0
        %2092 = vmatprep.subr.mxu0 0.0
        %2093 = vmatpush1.msra.mxu0 0.0
        %2094 = vmatprep.subr.mxu0 0.0
        %2095 = vmatpush1.msra.mxu0 0.0
        %2096 = vmatprep.subr.mxu0 0.0
        %2097 = vmatpush1.msra.mxu0 0.0
        %2098 = vmatprep.subr.mxu0 0.0
        %2099 = vmatpush1.msra.mxu0 0.0
        %2100 = vmatprep.subr.mxu0 0.0
        %2101 = vmatpush1.msra.mxu0 0.0
        %2102 = vmatprep.subr.mxu0 0.0
        %2103 = vmatpush1.msra.mxu0 0.0
        %2104 = vmatprep.subr.mxu0 0.0
        %2105 = vmatpush1.msra.mxu0 0.0
        %2106 = vmatprep.subr.mxu0 0.0
        %2107 = vmatpush1.msra.mxu0 0.0
        %2108 = vmatprep.subr.mxu0 0.0
        %2109 = vmatpush1.msra.mxu0 0.0
        %2110 = vmatprep.subr.mxu0 0.0
        %2111 = vmatpush1.msra.mxu0 0.0
        %2112 = vmatprep.subr.mxu0 0.0
        %2113 = vmatpush1.msra.mxu0 0.0
        %2114 = vmatprep.subr.mxu0 0.0
        %2115 = vmatpush1.msra.mxu0 0.0
        %2116 = vmatprep.subr.mxu0 0.0
        %2117 = vmatpush1.msra.mxu0 0.0
        %2118 = vmatprep.subr.mxu0 0.0
        %2119 = vmatpush1.msra.mxu0 0.0
        %2120 = vmatprep.subr.mxu0 0.0
        %2121 = vmatpush1.msra.mxu0 0.0
        %2122 = vmatprep.mubr.f32.mxu0 0.0
        %2123 = vmatmul.mubr.f32.gmra.mrb[0].mxu0 %v2053
        %v2124 = vpop.f32.mrb[0].mxu0
        %v2125 = vadd.f32 0.0, %v2124
        %v2126 = vpop.f32.mrb[0].mxu0
        %2127 = vmatprep.mubr.f32.mxu0 0.0
        %2128 = vmatmul.mubr.f32.gmra.mrb[0].mxu0 %v2056
        %v2129 = vpop.f32.mrb[0].mxu0
        %v2130 = vadd.f32 0.0, %v2129
        %v2131 = vpop.f32.mrb[0].mxu0
        %2132 = vdwg.mxu0
        %2133 = vrot.lane.b32.xlu0 %v843, 32
        %v2134 = vpop.permute.xlu0 %2133
        %2135 = vrot.lane.b32.xlu0 %v849, 32
        %v2136 = vpop.permute.xlu0 %2135
        %2137 = vrot.lane.b32.xlu0 %v845, 32
        %v2138 = vpop.permute.xlu0 %2137
        %2139 = vrot.lane.b32.xlu0 %v851, 32
        %v2140 = vpop.permute.xlu0 %2139
        %v2141 = vsel %vm928, %v2134, 0
        %v2143 = vsel %vm928, %v2136, 0
        %v2145 = vsel %vm928, %v2138, 0
        %v2147 = vsel %vm928, %v2140, 0
        %2149 = vmatprep.subr.mxu0 0.0
        %2150 = vmatpush1.xpose.msra.mxu0 %v2145
        %2151 = vmatprep.subr.mxu0 0.0
        %2152 = vmatpush1.xpose.msra.mxu0 %v2147
        %2153 = vmatprep.subr.mxu0 0.0
        %2154 = vmatpush1.xpose.msra.mxu0 0.0
        %2155 = vmatprep.subr.mxu0 0.0
        %2156 = vmatpush1.xpose.msra.mxu0 0.0
        %2157 = vmatprep.subr.mxu0 0.0
        %2158 = vmatpush1.xpose.msra.mxu0 0.0
        %2159 = vmatprep.subr.mxu0 0.0
        %2160 = vmatpush1.xpose.msra.mxu0 0.0
        %2161 = vmatprep.subr.mxu0 0.0
        %2162 = vmatpush1.xpose.msra.mxu0 0.0
        %2163 = vmatprep.subr.mxu0 0.0
        %2164 = vmatpush1.xpose.msra.mxu0 0.0
        %2165 = vmatprep.subr.mxu0 0.0
        %2166 = vmatpush1.xpose.msra.mxu0 0.0
        %2167 = vmatprep.subr.mxu0 0.0
        %2168 = vmatpush1.xpose.msra.mxu0 0.0
        %2169 = vmatprep.subr.mxu0 0.0
        %2170 = vmatpush1.xpose.msra.mxu0 0.0
        %2171 = vmatprep.subr.mxu0 0.0
        %2172 = vmatpush1.xpose.msra.mxu0 0.0
        %2173 = vmatprep.subr.mxu0 0.0
        %2174 = vmatpush1.xpose.msra.mxu0 0.0
        %2175 = vmatprep.subr.mxu0 0.0
        %2176 = vmatpush1.xpose.msra.mxu0 0.0
        %2177 = vmatprep.subr.mxu0 0.0
        %2178 = vmatpush1.xpose.msra.mxu0 0.0
        %2179 = vmatprep.subr.mxu0 0.0
        %2180 = vmatpush1.xpose.msra.mxu0 0.0
        %2181 = vmatprep.subr.mxu0 0.0
        %2182 = vmatpush1.xpose.msra.mxu0 0.0
        %2183 = vmatprep.subr.mxu0 0.0
        %2184 = vmatpush1.xpose.msra.mxu0 0.0
        %2185 = vmatprep.subr.mxu0 0.0
        %2186 = vmatpush1.xpose.msra.mxu0 0.0
        %2187 = vmatprep.subr.mxu0 0.0
        %2188 = vmatpush1.xpose.msra.mxu0 0.0
        %2189 = vmatprep.subr.mxu0 0.0
        %2190 = vmatpush1.xpose.msra.mxu0 0.0
        %2191 = vmatprep.subr.mxu0 0.0
        %2192 = vmatpush1.xpose.msra.mxu0 0.0
        %2193 = vmatprep.subr.mxu0 0.0
        %2194 = vmatpush1.xpose.msra.mxu0 0.0
        %2195 = vmatprep.subr.mxu0 0.0
        %2196 = vmatpush1.xpose.msra.mxu0 0.0
        %2197 = vmatprep.subr.mxu0 0.0
        %2198 = vmatpush1.xpose.msra.mxu0 0.0
        %2199 = vmatprep.subr.mxu0 0.0
        %2200 = vmatpush1.xpose.msra.mxu0 0.0
        %2201 = vmatprep.subr.mxu0 0.0
        %2202 = vmatpush1.xpose.msra.mxu0 0.0
        %2203 = vmatprep.subr.mxu0 0.0
        %2204 = vmatpush1.xpose.msra.mxu0 0.0
        %2205 = vmatprep.subr.mxu0 0.0
        %2206 = vmatpush1.xpose.msra.mxu0 0.0
        %2207 = vmatprep.subr.mxu0 0.0
        %2208 = vmatpush1.xpose.msra.mxu0 0.0
        %2209 = vmatprep.subr.mxu0 0.0
        %2210 = vmatpush1.xpose.msra.mxu0 0.0
        %2211 = vmatprep.subr.mxu0 0.0
        %2212 = vmatpush1.xpose.msra.mxu0 0.0
        %2213 = vmatprep.mubr.f32.mxu0 0.0
        %2214 = vmatmul.mubr.f32.gmra.mrb[0].mxu0 %v2141
        %v2215 = vpop.f32.mrb[0].mxu0
        %v2216 = vadd.f32 0.0, %v2215
        %v2217 = vpop.f32.mrb[0].mxu0
        %2218 = vmatprep.mubr.f32.mxu0 0.0
        %2219 = vmatmul.mubr.f32.gmra.mrb[0].mxu0 %v2143
        %v2220 = vpop.f32.mrb[0].mxu0
        %v2221 = vadd.f32 0.0, %v2220
        %v2222 = vpop.f32.mrb[0].mxu0
        %2223 = vdwg.mxu0
        %v2224 = vmul.f32 %v2216, 0.25
        %v2225 = vmul.f32 %v2221, 0.25
        %v2226 = vsel %vm928, %v2224, -inf
        %2227 = vmax.xlane.f32.xlu0 %v2226
        %v2228 = vpop.xlane.xlu0 %2227
        %v2229 = vsel %vm928, %v2225, -inf
        %2230 = vmax.xlane.f32.xlu0 %v2229
        %v2231 = vpop.xlane.xlu0 %2230
        %v2232 = vsub.f32 %v2224, %v2228
        %v2233 = vsub.f32 %v2225, %v2231
        %v2234 = vmul.f32 %v2232, 1.442695
        %v2235 = vpow.pop %v2234
        %v2236 = vmul.f32 %v2233, 1.442695
        %v2237 = vpow.pop %v2236
        %v2238 = vsel %vm928, %v2235, 0.0
        %2239 = vadd.xlane.f32.xlu0 %v2238
        %v2240 = vpop.xlane.xlu0 %2239
        %v2241 = vsel %vm928, %v2237, 0.0
        %2242 = vadd.xlane.f32.xlu0 %v2241
        %v2243 = vpop.xlane.xlu0 %2242
        %v2244 = vrcp.pop %v2240
        %v2245 = vrcp.pop %v2243
        %v2246 = vmul.f32 %v2235, %v2244
        %v2247 = vmul.f32 %v2237, %v2245
        %2248 = vrot.lane.b32.xlu0 %v920, 32
        %v2249 = vpop.permute.xlu0 %2248
        %2250 = vrot.lane.b32.xlu0 %v925, 32
        %v2251 = vpop.permute.xlu0 %2250
        %v2255 = vsel %vm928, %v2246, 0
        %v2258 = vsel %vm928, %v2247, 0
        %2260 = vmatprep.subr.mxu0 0.0
        %2261 = vmatpush1.msra.mxu0 %v2249
        %2262 = vmatprep.subr.mxu0 0.0
        %2263 = vmatpush1.msra.mxu0 %v2251
        %2264 = vmatprep.subr.mxu0 0.0
        %2265 = vmatpush1.msra.mxu0 0.0
        %2266 = vmatprep.subr.mxu0 0.0
        %2267 = vmatpush1.msra.mxu0 0.0
        %2268 = vmatprep.subr.mxu0 0.0
        %2269 = vmatpush1.msra.mxu0 0.0
        %2270 = vmatprep.subr.mxu0 0.0
        %2271 = vmatpush1.msra.mxu0 0.0
        %2272 = vmatprep.subr.mxu0 0.0
        %2273 = vmatpush1.msra.mxu0 0.0
        %2274 = vmatprep.subr.mxu0 0.0
        %2275 = vmatpush1.msra.mxu0 0.0
        %2276 = vmatprep.subr.mxu0 0.0
        %2277 = vmatpush1.msra.mxu0 0.0
        %2278 = vmatprep.subr.mxu0 0.0
        %2279 = vmatpush1.msra.mxu0 0.0
        %2280 = vmatprep.subr.mxu0 0.0
        %2281 = vmatpush1.msra.mxu0 0.0
        %2282 = vmatprep.subr.mxu0 0.0
        %2283 = vmatpush1.msra.mxu0 0.0
        %2284 = vmatprep.subr.mxu0 0.0
        %2285 = vmatpush1.msra.mxu0 0.0
        %2286 = vmatprep.subr.mxu0 0.0
        %2287 = vmatpush1.msra.mxu0 0.0
        %2288 = vmatprep.subr.mxu0 0.0
        %2289 = vmatpush1.msra.mxu0 0.0
        %2290 = vmatprep.subr.mxu0 0.0
        %2291 = vmatpush1.msra.mxu0 0.0
        %2292 = vmatprep.subr.mxu0 0.0
        %2293 = vmatpush1.msra.mxu0 0.0
        %2294 = vmatprep.subr.mxu0 0.0
        %2295 = vmatpush1.msra.mxu0 0.0
        %2296 = vmatprep.subr.mxu0 0.0
        %2297 = vmatpush1.msra.mxu0 0.0
        %2298 = vmatprep.subr.mxu0 0.0
        %2299 = vmatpush1.msra.mxu0 0.0
        %2300 = vmatprep.subr.mxu0 0.0
        %2301 = vmatpush1.msra.mxu0 0.0
        %2302 = vmatprep.subr.mxu0 0.0
        %2303 = vmatpush1.msra.mxu0 0.0
        %2304 = vmatprep.subr.mxu0 0.0
        %2305 = vmatpush1.msra.mxu0 0.0
        %2306 = vmatprep.subr.mxu0 0.0
        %2307 = vmatpush1.msra.mxu0 0.0
        %2308 = vmatprep.subr.mxu0 0.0
        %2309 = vmatpush1.msra.mxu0 0.0
        %2310 = vmatprep.subr.mxu0 0.0
        %2311 = vmatpush1.msra.mxu0 0.0
        %2312 = vmatprep.subr.mxu0 0.0
        %2313 = vmatpush1.msra.mxu0 0.0
        %2314 = vmatprep.subr.mxu0 0.0
        %2315 = vmatpush1.msra.mxu0 0.0
        %2316 = vmatprep.subr.mxu0 0.0
        %2317 = vmatpush1.msra.mxu0 0.0
        %2318 = vmatprep.subr.mxu0 0.0
        %2319 = vmatpush1.msra.mxu0 0.0
        %2320 = vmatprep.subr.mxu0 0.0
        %2321 = vmatpush1.msra.mxu0 0.0
        %2322 = vmatprep.subr.mxu0 0.0
        %2323 = vmatpush1.msra.mxu0 0.0
        %2324 = vmatprep.mubr.f32.mxu0 0.0
        %2325 = vmatmul.mubr.f32.gmra.mrb[0].mxu0 %v2255
        %v2326 = vpop.f32.mrb[0].mxu0
        %v2327 = vadd.f32 0.0, %v2326
        %v2328 = vpop.f32.mrb[0].mxu0
        %2329 = vmatprep.mubr.f32.mxu0 0.0
        %2330 = vmatmul.mubr.f32.gmra.mrb[0].mxu0 %v2258
        %v2331 = vpop.f32.mrb[0].mxu0
        %v2332 = vadd.f32 0.0, %v2331
        %v2333 = vpop.f32.mrb[0].mxu0
        %2334 = vdwg.mxu0
        %2335 = vrot.lane.b32.xlu0 %v843, 16
        %v2336 = vpop.permute.xlu0 %2335
        %2337 = vrot.lane.b32.xlu0 %v849, 16
        %v2338 = vpop.permute.xlu0 %2337
        %2339 = vrot.lane.b32.xlu0 %v845, 16
        %v2340 = vpop.permute.xlu0 %2339
        %2341 = vrot.lane.b32.xlu0 %v851, 16
        %v2342 = vpop.permute.xlu0 %2341
        %v2343 = vsel %vm928, %v2336, 0
        %v2345 = vsel %vm928, %v2338, 0
        %v2347 = vsel %vm928, %v2340, 0
        %v2349 = vsel %vm928, %v2342, 0
        %2351 = vmatprep.subr.mxu0 0.0
        %2352 = vmatpush1.xpose.msra.mxu0 %v2347
        %2353 = vmatprep.subr.mxu0 0.0
        %2354 = vmatpush1.xpose.msra.mxu0 %v2349
        %2355 = vmatprep.subr.mxu0 0.0
        %2356 = vmatpush1.xpose.msra.mxu0 0.0
        %2357 = vmatprep.subr.mxu0 0.0
        %2358 = vmatpush1.xpose.msra.mxu0 0.0
        %2359 = vmatprep.subr.mxu0 0.0
        %2360 = vmatpush1.xpose.msra.mxu0 0.0
        %2361 = vmatprep.subr.mxu0 0.0
        %2362 = vmatpush1.xpose.msra.mxu0 0.0
        %2363 = vmatprep.subr.mxu0 0.0
        %2364 = vmatpush1.xpose.msra.mxu0 0.0
        %2365 = vmatprep.subr.mxu0 0.0
        %2366 = vmatpush1.xpose.msra.mxu0 0.0
        %2367 = vmatprep.subr.mxu0 0.0
        %2368 = vmatpush1.xpose.msra.mxu0 0.0
        %2369 = vmatprep.subr.mxu0 0.0
        %2370 = vmatpush1.xpose.msra.mxu0 0.0
        %2371 = vmatprep.subr.mxu0 0.0
        %2372 = vmatpush1.xpose.msra.mxu0 0.0
        %2373 = vmatprep.subr.mxu0 0.0
        %2374 = vmatpush1.xpose.msra.mxu0 0.0
        %2375 = vmatprep.subr.mxu0 0.0
        %2376 = vmatpush1.xpose.msra.mxu0 0.0
        %2377 = vmatprep.subr.mxu0 0.0
        %2378 = vmatpush1.xpose.msra.mxu0 0.0
        %2379 = vmatprep.subr.mxu0 0.0
        %2380 = vmatpush1.xpose.msra.mxu0 0.0
        %2381 = vmatprep.subr.mxu0 0.0
        %2382 = vmatpush1.xpose.msra.mxu0 0.0
        %2383 = vmatprep.subr.mxu0 0.0
        %2384 = vmatpush1.xpose.msra.mxu0 0.0
        %2385 = vmatprep.subr.mxu0 0.0
        %2386 = vmatpush1.xpose.msra.mxu0 0.0
        %2387 = vmatprep.subr.mxu0 0.0
        %2388 = vmatpush1.xpose.msra.mxu0 0.0
        %2389 = vmatprep.subr.mxu0 0.0
        %2390 = vmatpush1.xpose.msra.mxu0 0.0
        %2391 = vmatprep.subr.mxu0 0.0
        %2392 = vmatpush1.xpose.msra.mxu0 0.0
        %2393 = vmatprep.subr.mxu0 0.0
        %2394 = vmatpush1.xpose.msra.mxu0 0.0
        %2395 = vmatprep.subr.mxu0 0.0
        %2396 = vmatpush1.xpose.msra.mxu0 0.0
        %2397 = vmatprep.subr.mxu0 0.0
        %2398 = vmatpush1.xpose.msra.mxu0 0.0
        %2399 = vmatprep.subr.mxu0 0.0
        %2400 = vmatpush1.xpose.msra.mxu0 0.0
        %2401 = vmatprep.subr.mxu0 0.0
        %2402 = vmatpush1.xpose.msra.mxu0 0.0
        %2403 = vmatprep.subr.mxu0 0.0
        %2404 = vmatpush1.xpose.msra.mxu0 0.0
        %2405 = vmatprep.subr.mxu0 0.0
        %2406 = vmatpush1.xpose.msra.mxu0 0.0
        %2407 = vmatprep.subr.mxu0 0.0
        %2408 = vmatpush1.xpose.msra.mxu0 0.0
        %2409 = vmatprep.subr.mxu0 0.0
        %2410 = vmatpush1.xpose.msra.mxu0 0.0
        %2411 = vmatprep.subr.mxu0 0.0
        %2412 = vmatpush1.xpose.msra.mxu0 0.0
        %2413 = vmatprep.subr.mxu0 0.0
        %2414 = vmatpush1.xpose.msra.mxu0 0.0
        %2415 = vmatprep.mubr.f32.mxu0 0.0
        %2416 = vmatmul.mubr.f32.gmra.mrb[0].mxu0 %v2343
        %v2417 = vpop.f32.mrb[0].mxu0
        %v2418 = vadd.f32 0.0, %v2417
        %v2419 = vpop.f32.mrb[0].mxu0
        %2420 = vmatprep.mubr.f32.mxu0 0.0
        %2421 = vmatmul.mubr.f32.gmra.mrb[0].mxu0 %v2345
        %v2422 = vpop.f32.mrb[0].mxu0
        %v2423 = vadd.f32 0.0, %v2422
        %v2424 = vpop.f32.mrb[0].mxu0
        %2425 = vdwg.mxu0
        %v2426 = vmul.f32 %v2418, 0.25
        %v2427 = vmul.f32 %v2423, 0.25
        %v2428 = vsel %vm928, %v2426, -inf
        %2429 = vmax.xlane.f32.xlu0 %v2428
        %v2430 = vpop.xlane.xlu0 %2429
        %v2431 = vsel %vm928, %v2427, -inf
        %2432 = vmax.xlane.f32.xlu0 %v2431
        %v2433 = vpop.xlane.xlu0 %2432
        %v2434 = vsub.f32 %v2426, %v2430
        %v2435 = vsub.f32 %v2427, %v2433
        %v2436 = vmul.f32 %v2434, 1.442695
        %v2437 = vpow.pop %v2436
        %v2438 = vmul.f32 %v2435, 1.442695
        %v2439 = vpow.pop %v2438
        %v2440 = vsel %vm928, %v2437, 0.0
        %2441 = vadd.xlane.f32.xlu0 %v2440
        %v2442 = vpop.xlane.xlu0 %2441
        %v2443 = vsel %vm928, %v2439, 0.0
        %2444 = vadd.xlane.f32.xlu0 %v2443
        %v2445 = vpop.xlane.xlu0 %2444
        %v2446 = vrcp.pop %v2442
        %v2447 = vrcp.pop %v2445
        %v2448 = vmul.f32 %v2437, %v2446
        %v2449 = vmul.f32 %v2439, %v2447
        %2450 = vrot.lane.b32.xlu0 %v920, 16
        %v2451 = vpop.permute.xlu0 %2450
        %2452 = vrot.lane.b32.xlu0 %v925, 16
        %v2453 = vpop.permute.xlu0 %2452
        %v2457 = vsel %vm928, %v2448, 0
        %v2460 = vsel %vm928, %v2449, 0
        %2462 = vmatprep.subr.mxu0 0.0
        %2463 = vmatpush1.msra.mxu0 %v2451
        %2464 = vmatprep.subr.mxu0 0.0
        %2465 = vmatpush1.msra.mxu0 %v2453
        %2466 = vmatprep.subr.mxu0 0.0
        %2467 = vmatpush1.msra.mxu0 0.0
        %2468 = vmatprep.subr.mxu0 0.0
        %2469 = vmatpush1.msra.mxu0 0.0
        %2470 = vmatprep.subr.mxu0 0.0
        %2471 = vmatpush1.msra.mxu0 0.0
        %2472 = vmatprep.subr.mxu0 0.0
        %2473 = vmatpush1.msra.mxu0 0.0
        %2474 = vmatprep.subr.mxu0 0.0
        %2475 = vmatpush1.msra.mxu0 0.0
        %2476 = vmatprep.subr.mxu0 0.0
        %2477 = vmatpush1.msra.mxu0 0.0
        %2478 = vmatprep.subr.mxu0 0.0
        %2479 = vmatpush1.msra.mxu0 0.0
        %2480 = vmatprep.subr.mxu0 0.0
        %2481 = vmatpush1.msra.mxu0 0.0
        %2482 = vmatprep.subr.mxu0 0.0
        %2483 = vmatpush1.msra.mxu0 0.0
        %2484 = vmatprep.subr.mxu0 0.0
        %2485 = vmatpush1.msra.mxu0 0.0
        %2486 = vmatprep.subr.mxu0 0.0
        %2487 = vmatpush1.msra.mxu0 0.0
        %2488 = vmatprep.subr.mxu0 0.0
        %2489 = vmatpush1.msra.mxu0 0.0
        %2490 = vmatprep.subr.mxu0 0.0
        %2491 = vmatpush1.msra.mxu0 0.0
        %2492 = vmatprep.subr.mxu0 0.0
        %2493 = vmatpush1.msra.mxu0 0.0
        %2494 = vmatprep.subr.mxu0 0.0
        %2495 = vmatpush1.msra.mxu0 0.0
        %2496 = vmatprep.subr.mxu0 0.0
        %2497 = vmatpush1.msra.mxu0 0.0
        %2498 = vmatprep.subr.mxu0 0.0
        %2499 = vmatpush1.msra.mxu0 0.0
        %2500 = vmatprep.subr.mxu0 0.0
        %2501 = vmatpush1.msra.mxu0 0.0
        %2502 = vmatprep.subr.mxu0 0.0
        %2503 = vmatpush1.msra.mxu0 0.0
        %2504 = vmatprep.subr.mxu0 0.0
        %2505 = vmatpush1.msra.mxu0 0.0
        %2506 = vmatprep.subr.mxu0 0.0
        %2507 = vmatpush1.msra.mxu0 0.0
        %2508 = vmatprep.subr.mxu0 0.0
        %2509 = vmatpush1.msra.mxu0 0.0
        %2510 = vmatprep.subr.mxu0 0.0
        %2511 = vmatpush1.msra.mxu0 0.0
        %2512 = vmatprep.subr.mxu0 0.0
        %2513 = vmatpush1.msra.mxu0 0.0
        %2514 = vmatprep.subr.mxu0 0.0
        %2515 = vmatpush1.msra.mxu0 0.0
        %2516 = vmatprep.subr.mxu0 0.0
        %2517 = vmatpush1.msra.mxu0 0.0
        %2518 = vmatprep.subr.mxu0 0.0
        %2519 = vmatpush1.msra.mxu0 0.0
        %2520 = vmatprep.subr.mxu0 0.0
        %2521 = vmatpush1.msra.mxu0 0.0
        %2522 = vmatprep.subr.mxu0 0.0
        %2523 = vmatpush1.msra.mxu0 0.0
        %2524 = vmatprep.subr.mxu0 0.0
        %2525 = vmatpush1.msra.mxu0 0.0
        %2526 = vmatprep.mubr.f32.mxu0 0.0
        %2527 = vmatmul.mubr.f32.gmra.mrb[0].mxu0 %v2457
        %v2528 = vpop.f32.mrb[0].mxu0
        %v2529 = vadd.f32 0.0, %v2528
        %v2530 = vpop.f32.mrb[0].mxu0
        %2531 = vmatprep.mubr.f32.mxu0 0.0
        %2532 = vmatmul.mubr.f32.gmra.mrb[0].mxu0 %v2460
        %v2533 = vpop.f32.mrb[0].mxu0
        %v2534 = vadd.f32 0.0, %v2533
        %v2535 = vpop.f32.mrb[0].mxu0
        %2536 = vdwg.mxu0
        %2539 = vrot.lane.b32.xlu0 %v1317, 16
        %v2540 = vpop.permute.xlu0 %2539
        %2541 = vrot.lane.b32.xlu0 %v1322, 16
        %v2542 = vpop.permute.xlu0 %2541
        %2547 = vrot.lane.b32.xlu0 %v1519, 32
        %v2548 = vpop.permute.xlu0 %2547
        %2549 = vrot.lane.b32.xlu0 %v1524, 32
        %v2550 = vpop.permute.xlu0 %2549
        %2555 = vrot.lane.b32.xlu0 %v1721, 48
        %v2556 = vpop.permute.xlu0 %2555
        %2557 = vrot.lane.b32.xlu0 %v1726, 48
        %v2558 = vpop.permute.xlu0 %2557
        %2563 = vrot.lane.b32.xlu0 %v1923, 64
        %v2564 = vpop.permute.xlu0 %2563
        %2565 = vrot.lane.b32.xlu0 %v1928, 64
        %v2566 = vpop.permute.xlu0 %2565
        %2571 = vrot.lane.b32.xlu0 %v2125, 80
        %v2572 = vpop.permute.xlu0 %2571
        %2573 = vrot.lane.b32.xlu0 %v2130, 80
        %v2574 = vpop.permute.xlu0 %2573
        %2579 = vrot.lane.b32.xlu0 %v2327, 96
        %v2580 = vpop.permute.xlu0 %2579
        %2581 = vrot.lane.b32.xlu0 %v2332, 96
        %v2582 = vpop.permute.xlu0 %2581
        %2587 = vrot.lane.b32.xlu0 %v2529, 112
        %v2588 = vpop.permute.xlu0 %2587
        %2589 = vrot.lane.b32.xlu0 %v2534, 112
        %v2590 = vpop.permute.xlu0 %2589
        %v2593 = vsel %vm928, %v1113, %v2540
        %v2594 = vsel %vm928, %v1118, %v2542
        %vm2595 = vcmask 261120
        %v2596 = vsel %vm2595, %v2593, %v2548
        %v2597 = vsel %vm2595, %v2594, %v2550
        %vm2598 = vcmask 392192
        %v2599 = vsel %vm2598, %v2596, %v2556
        %v2600 = vsel %vm2598, %v2597, %v2558
        %vm2601 = vcmask 523264
        %v2602 = vsel %vm2601, %v2599, %v2564
        %v2603 = vsel %vm2601, %v2600, %v2566
        %vm2604 = vcmask 654336
        %v2605 = vsel %vm2604, %v2602, %v2572
        %v2606 = vsel %vm2604, %v2603, %v2574
        %vm2607 = vcmask 785408
        %v2608 = vsel %vm2607, %v2605, %v2580
        %v2609 = vsel %vm2607, %v2606, %v2582
        %vm2610 = vcmask 916480
        %v2611 = vsel %vm2610, %v2608, %v2588
        %v2612 = vsel %vm2610, %v2609, %v2590
        %v2613 = vld [vmem:[%s657] sm:$0xff]
        %v2614 = vld [vmem:[%s657 + $0x8] sm:$0xff]
        %v2615 = vld [vmem:[%s657 + $0x10] sm:$0xff]
        %v2616 = vld [vmem:[%s657 + $0x18] sm:$0xff]
        %v2617 = vld [vmem:[%s657 + $0x20] sm:$0xff]
        %v2618 = vld [vmem:[%s657 + $0x28] sm:$0xff]
        %v2619 = vld [vmem:[%s657 + $0x30] sm:$0xff]
        %v2620 = vld [vmem:[%s657 + $0x38] sm:$0xff]
        %v2621 = vld [vmem:[%s657 + $0x40] sm:$0xff]
        %v2622 = vld [vmem:[%s657 + $0x48] sm:$0xff]
        %v2623 = vld [vmem:[%s657 + $0x50] sm:$0xff]
        %v2624 = vld [vmem:[%s657 + $0x58] sm:$0xff]
        %v2625 = vld [vmem:[%s657 + $0x60] sm:$0xff]
        %v2626 = vld [vmem:[%s657 + $0x68] sm:$0xff]
        %v2627 = vld [vmem:[%s657 + $0x70] sm:$0xff]
        %v2628 = vld [vmem:[%s657 + $0x78] sm:$0xff]
        %v2629 = vld [vmem:[%s660] sm:$0x1]
        %v2631 = vlaneseq
        %v2632 = vshrl.u32 %v2631, 7
        %v2633 = vsub.s32 0, %v2632
        %v2634 = vrot.slane %v2629, %v2633
        %2636 = vmatprep.subr.mxu0 0.0
        %2637 = vmatpush1.msra.mxu0 %v2613
        %2638 = vmatprep.subr.mxu0 0.0
        %2639 = vmatpush1.msra.mxu0 %v2614
        %2640 = vmatprep.subr.mxu0 0.0
        %2641 = vmatpush1.msra.mxu0 %v2615
        %2642 = vmatprep.subr.mxu0 0.0
        %2643 = vmatpush1.msra.mxu0 %v2616
        %2644 = vmatprep.subr.mxu0 0.0
        %2645 = vmatpush1.msra.mxu0 %v2617
        %2646 = vmatprep.subr.mxu0 0.0
        %2647 = vmatpush1.msra.mxu0 %v2618
        %2648 = vmatprep.subr.mxu0 0.0
        %2649 = vmatpush1.msra.mxu0 %v2619
        %2650 = vmatprep.subr.mxu0 0.0
        %2651 = vmatpush1.msra.mxu0 %v2620
        %2652 = vmatprep.subr.mxu0 0.0
        %2653 = vmatpush1.msra.mxu0 %v2621
        %2654 = vmatprep.subr.mxu0 0.0
        %2655 = vmatpush1.msra.mxu0 %v2622
        %2656 = vmatprep.subr.mxu0 0.0
        %2657 = vmatpush1.msra.mxu0 %v2623
        %2658 = vmatprep.subr.mxu0 0.0
        %2659 = vmatpush1.msra.mxu0 %v2624
        %2660 = vmatprep.subr.mxu0 0.0
        %2661 = vmatpush1.msra.mxu0 %v2625
        %2662 = vmatprep.subr.mxu0 0.0
        %2663 = vmatpush1.msra.mxu0 %v2626
        %2664 = vmatprep.subr.mxu0 0.0
        %2665 = vmatpush1.msra.mxu0 %v2627
        %2666 = vmatprep.subr.mxu0 0.0
        %2667 = vmatpush1.msra.mxu0 %v2628
        %2668 = vmatprep.subr.mxu0 0.0
        %2669 = vmatpush1.msra.mxu0 0.0
        %2670 = vmatprep.subr.mxu0 0.0
        %2671 = vmatpush1.msra.mxu0 0.0
        %2672 = vmatprep.subr.mxu0 0.0
        %2673 = vmatpush1.msra.mxu0 0.0
        %2674 = vmatprep.subr.mxu0 0.0
        %2675 = vmatpush1.msra.mxu0 0.0
        %2676 = vmatprep.subr.mxu0 0.0
        %2677 = vmatpush1.msra.mxu0 0.0
        %2678 = vmatprep.subr.mxu0 0.0
        %2679 = vmatpush1.msra.mxu0 0.0
        %2680 = vmatprep.subr.mxu0 0.0
        %2681 = vmatpush1.msra.mxu0 0.0
        %2682 = vmatprep.subr.mxu0 0.0
        %2683 = vmatpush1.msra.mxu0 0.0
        %2684 = vmatprep.subr.mxu0 0.0
        %2685 = vmatpush1.msra.mxu0 0.0
        %2686 = vmatprep.subr.mxu0 0.0
        %2687 = vmatpush1.msra.mxu0 0.0
        %2688 = vmatprep.subr.mxu0 0.0
        %2689 = vmatpush1.msra.mxu0 0.0
        %2690 = vmatprep.subr.mxu0 0.0
        %2691 = vmatpush1.msra.mxu0 0.0
        %2692 = vmatprep.subr.mxu0 0.0
        %2693 = vmatpush1.msra.mxu0 0.0
        %2694 = vmatprep.subr.mxu0 0.0
        %2695 = vmatpush1.msra.mxu0 0.0
        %2696 = vmatprep.subr.mxu0 0.0
        %2697 = vmatpush1.msra.mxu0 0.0
        %2698 = vmatprep.subr.mxu0 0.0
        %2699 = vmatpush1.msra.mxu0 0.0
        %2700 = vmatprep.mubr.f32.mxu0 0.0
        %2701 = vmatmul.mubr.f32.gmra.mrb[0].mxu0 %v2611
        %v2702 = vpop.f32.mrb[0].mxu0
        %v2703 = vadd.f32 %v2634, %v2702
        %v2704 = vpop.f32.mrb[0].mxu0
        %2705 = vmatprep.mubr.f32.mxu0 0.0
        %2706 = vmatmul.mubr.f32.gmra.mrb[0].mxu0 %v2612
        %v2707 = vpop.f32.mrb[0].mxu0
        %v2708 = vadd.f32 %v2634, %v2707
        %v2709 = vpop.f32.mrb[0].mxu0
        %2710 = vdwg.mxu0
        %v2711 = vld [vmem:[%s663] sm:$0x1]
        %v2712 = vld [vmem:[%s666] sm:$0x1]
        %2713 = vadd.xlane.f32.xlu0 %v2703
        %v2714 = vpop.xlane.xlu0 %2713
        %2715 = vadd.xlane.f32.xlu0 %v2708
        %v2716 = vpop.xlane.xlu0 %2715
        %v2717 = vrcp.pop 128.0
        %v2718 = vmul.f32 %v2714, %v2717
        %v2719 = vmul.f32 %v2716, %v2717
        %v2720 = vsub.f32 %v2703, %v2718
        %v2721 = vsub.f32 %v2708, %v2719
        %v2722 = vmul.f32 %v2720, %v2720
        %v2723 = vmul.f32 %v2721, %v2721
        %2724 = vadd.xlane.f32.xlu0 %v2722
        %v2725 = vpop.xlane.xlu0 %2724
        %2726 = vadd.xlane.f32.xlu0 %v2723
        %v2727 = vpop.xlane.xlu0 %2726
        %v2728 = vmul.f32 %v2725, %v2717
        %v2729 = vmul.f32 %v2727, %v2717
        %v2730 = vadd.f32 %v2728, 1e-05
        %v2731 = vadd.f32 %v2729, 1e-05
        %v2732 = vrsqrt.pop %v2730
        %v2733 = vrsqrt.pop %v2731
        %v2734 = vmul.f32 %v2720, %v2732
        %v2735 = vmul.f32 %v2721, %v2733
        %v2737 = vlaneseq
        %v2738 = vshrl.u32 %v2737, 7
        %v2739 = vsub.s32 0, %v2738
        %v2740 = vrot.slane %v2711, %v2739
        %v2742 = vmul.f32 %v2734, %v2740
        %v2743 = vmul.f32 %v2735, %v2740
        %v2745 = vlaneseq
        %v2746 = vshrl.u32 %v2745, 7
        %v2747 = vsub.s32 0, %v2746
        %v2748 = vrot.slane %v2712, %v2747
        %v2750 = vadd.f32 %v2742, %v2748
        %v2751 = vadd.f32 %v2743, %v2748
        %v2752 = vadd.f32 %v709, %v2750
        %v2753 = vadd.f32 %v710, %v2751
        %v2754 = vld [vmem:[%s671] sm:$0xff]
        %v2755 = vld [vmem:[%s671 + $0x8] sm:$0xff]
        %v2756 = vld [vmem:[%s671 + $0x10] sm:$0xff]
        %v2757 = vld [vmem:[%s671 + $0x18] sm:$0xff]
        %v2758 = vld [vmem:[%s671 + $0x20] sm:$0xff]
        %v2759 = vld [vmem:[%s671 + $0x28] sm:$0xff]
        %v2760 = vld [vmem:[%s671 + $0x30] sm:$0xff]
        %v2761 = vld [vmem:[%s671 + $0x38] sm:$0xff]
        %v2762 = vld [vmem:[%s671 + $0x40] sm:$0xff]
        %v2763 = vld [vmem:[%s671 + $0x48] sm:$0xff]
        %v2764 = vld [vmem:[%s671 + $0x50] sm:$0xff]
        %v2765 = vld [vmem:[%s671 + $0x58] sm:$0xff]
        %v2766 = vld [vmem:[%s671 + $0x60] sm:$0xff]
        %v2767 = vld [vmem:[%s671 + $0x68] sm:$0xff]
        %v2768 = vld [vmem:[%s671 + $0x70] sm:$0xff]
        %v2769 = vld [vmem:[%s671 + $0x78] sm:$0xff]
        %v2770 = vld [vmem:[%s671 + $0x80] sm:$0xff]
        %v2771 = vld [vmem:[%s671 + $0x88] sm:$0xff]
        %v2772 = vld [vmem:[%s671 + $0x90] sm:$0xff]
        %v2773 = vld [vmem:[%s671 + $0x98] sm:$0xff]
        %v2774 = vld [vmem:[%s671 + $0xa0] sm:$0xff]
        %v2775 = vld [vmem:[%s671 + $0xa8] sm:$0xff]
        %v2776 = vld [vmem:[%s671 + $0xb0] sm:$0xff]
        %v2777 = vld [vmem:[%s671 + $0xb8] sm:$0xff]
        %v2778 = vld [vmem:[%s671 + $0xc0] sm:$0xff]
        %v2779 = vld [vmem:[%s671 + $0xc8] sm:$0xff]
        %v2780 = vld [vmem:[%s671 + $0xd0] sm:$0xff]
        %v2781 = vld [vmem:[%s671 + $0xd8] sm:$0xff]
        %v2782 = vld [vmem:[%s671 + $0xe0] sm:$0xff]
        %v2783 = vld [vmem:[%s671 + $0xe8] sm:$0xff]
        %v2784 = vld [vmem:[%s671 + $0xf0] sm:$0xff]
        %v2785 = vld [vmem:[%s671 + $0xf8] sm:$0xff]
        %v2786 = vld [vmem:[%s675] sm:$0x3]
        %v2788 = vlaneseq
        %v2789 = vshrl.u32 %v2788, 7
        %v2790 = vsub.s32 0, %v2789
        %v2791 = vrot.slane %v2786, %v2790
        %v2792 = vlaneseq
        %v2793 = vshrl.u32 %v2792, 7
        %v2794 = vsub.s32 1, %v2793
        %v2795 = vrot.slane %v2786, %v2794
        %2798 = vmatprep.subr.mxu0 %v2755
        %2799 = vmatpush1.msra.mxu0 %v2754
        %2800 = vmatprep.subr.mxu0 %v2757
        %2801 = vmatpush1.msra.mxu0 %v2756
        %2802 = vmatprep.subr.mxu0 %v2759
        %2803 = vmatpush1.msra.mxu0 %v2758
        %2804 = vmatprep.subr.mxu0 %v2761
        %2805 = vmatpush1.msra.mxu0 %v2760
        %2806 = vmatprep.subr.mxu0 %v2763
        %2807 = vmatpush1.msra.mxu0 %v2762
        %2808 = vmatprep.subr.mxu0 %v2765
        %2809 = vmatpush1.msra.mxu0 %v2764
        %2810 = vmatprep.subr.mxu0 %v2767
        %2811 = vmatpush1.msra.mxu0 %v2766
        %2812 = vmatprep.subr.mxu0 %v2769
        %2813 = vmatpush1.msra.mxu0 %v2768
        %2814 = vmatprep.subr.mxu0 %v2771
        %2815 = vmatpush1.msra.mxu0 %v2770
        %2816 = vmatprep.subr.mxu0 %v2773
        %2817 = vmatpush1.msra.mxu0 %v2772
        %2818 = vmatprep.subr.mxu0 %v2775
        %2819 = vmatpush1.msra.mxu0 %v2774
        %2820 = vmatprep.subr.mxu0 %v2777
        %2821 = vmatpush1.msra.mxu0 %v2776
        %2822 = vmatprep.subr.mxu0 %v2779
        %2823 = vmatpush1.msra.mxu0 %v2778
        %2824 = vmatprep.subr.mxu0 %v2781
        %2825 = vmatpush1.msra.mxu0 %v2780
        %2826 = vmatprep.subr.mxu0 %v2783
        %2827 = vmatpush1.msra.mxu0 %v2782
        %2828 = vmatprep.subr.mxu0 %v2785
        %2829 = vmatpush1.msra.mxu0 %v2784
        %2830 = vmatprep.subr.mxu0 0.0
        %2831 = vmatpush1.msra.mxu0 0.0
        %2832 = vmatprep.subr.mxu0 0.0
        %2833 = vmatpush1.msra.mxu0 0.0
        %2834 = vmatprep.subr.mxu0 0.0
        %2835 = vmatpush1.msra.mxu0 0.0
        %2836 = vmatprep.subr.mxu0 0.0
        %2837 = vmatpush1.msra.mxu0 0.0
        %2838 = vmatprep.subr.mxu0 0.0
        %2839 = vmatpush1.msra.mxu0 0.0
        %2840 = vmatprep.subr.mxu0 0.0
        %2841 = vmatpush1.msra.mxu0 0.0
        %2842 = vmatprep.subr.mxu0 0.0
        %2843 = vmatpush1.msra.mxu0 0.0
        %2844 = vmatprep.subr.mxu0 0.0
        %2845 = vmatpush1.msra.mxu0 0.0
        %2846 = vmatprep.subr.mxu0 0.0
        %2847 = vmatpush1.msra.mxu0 0.0
        %2848 = vmatprep.subr.mxu0 0.0
        %2849 = vmatpush1.msra.mxu0 0.0
        %2850 = vmatprep.subr.mxu0 0.0
        %2851 = vmatpush1.msra.mxu0 0.0
        %2852 = vmatprep.subr.mxu0 0.0
        %2853 = vmatpush1.msra.mxu0 0.0
        %2854 = vmatprep.subr.mxu0 0.0
        %2855 = vmatpush1.msra.mxu0 0.0
        %2856 = vmatprep.subr.mxu0 0.0
        %2857 = vmatpush1.msra.mxu0 0.0
        %2858 = vmatprep.subr.mxu0 0.0
        %2859 = vmatpush1.msra.mxu0 0.0
        %2860 = vmatprep.subr.mxu0 0.0
        %2861 = vmatpush1.msra.mxu0 0.0
        %2862 = vmatprep.mubr.f32.mxu0 0.0
        %2863 = vmatmul.mubr.f32.gmra.mrb[0].mxu0 %v2752
        %v2864 = vpop.f32.mrb[0].mxu0
        %v2865 = vadd.f32 %v2791, %v2864
        %v2866 = vpop.f32.mrb[0].mxu0
        %v2867 = vadd.f32 %v2795, %v2866
        %2868 = vmatprep.mubr.f32.mxu0 0.0
        %2869 = vmatmul.mubr.f32.gmra.mrb[0].mxu0 %v2753
        %v2870 = vpop.f32.mrb[0].mxu0
        %v2871 = vadd.f32 %v2791, %v2870
        %v2872 = vpop.f32.mrb[0].mxu0
        %v2873 = vadd.f32 %v2795, %v2872
        %2874 = vdwg.mxu0
        %v2875 = vmax.f32 %v2865, 0.0
        %v2876 = vmax.f32 %v2867, 0.0
        %v2877 = vmax.f32 %v2871, 0.0
        %v2878 = vmax.f32 %v2873, 0.0
        %v2879 = vld [vmem:[%s680] sm:$0xff]
        %v2880 = vld [vmem:[%s680 + $0x8] sm:$0xff]
        %v2881 = vld [vmem:[%s680 + $0x10] sm:$0xff]
        %v2882 = vld [vmem:[%s680 + $0x18] sm:$0xff]
        %v2883 = vld [vmem:[%s680 + $0x20] sm:$0xff]
        %v2884 = vld [vmem:[%s680 + $0x28] sm:$0xff]
        %v2885 = vld [vmem:[%s680 + $0x30] sm:$0xff]
        %v2886 = vld [vmem:[%s680 + $0x38] sm:$0xff]
        %v2887 = vld [vmem:[%s680 + $0x40] sm:$0xff]
        %v2888 = vld [vmem:[%s680 + $0x48] sm:$0xff]
        %v2889 = vld [vmem:[%s680 + $0x50] sm:$0xff]
        %v2890 = vld [vmem:[%s680 + $0x58] sm:$0xff]
        %v2891 = vld [vmem:[%s680 + $0x60] sm:$0xff]
        %v2892 = vld [vmem:[%s680 + $0x68] sm:$0xff]
        %v2893 = vld [vmem:[%s680 + $0x70] sm:$0xff]
        %v2894 = vld [vmem:[%s680 + $0x78] sm:$0xff]
        %v2895 = vld [vmem:[%s680 + $0x80] sm:$0xff]
        %v2896 = vld [vmem:[%s680 + $0x88] sm:$0xff]
        %v2897 = vld [vmem:[%s680 + $0x90] sm:$0xff]
        %v2898 = vld [vmem:[%s680 + $0x98] sm:$0xff]
        %v2899 = vld [vmem:[%s680 + $0xa0] sm:$0xff]
        %v2900 = vld [vmem:[%s680 + $0xa8] sm:$0xff]
        %v2901 = vld [vmem:[%s680 + $0xb0] sm:$0xff]
        %v2902 = vld [vmem:[%s680 + $0xb8] sm:$0xff]
        %v2903 = vld [vmem:[%s680 + $0xc0] sm:$0xff]
        %v2904 = vld [vmem:[%s680 + $0xc8] sm:$0xff]
        %v2905 = vld [vmem:[%s680 + $0xd0] sm:$0xff]
        %v2906 = vld [vmem:[%s680 + $0xd8] sm:$0xff]
        %v2907 = vld [vmem:[%s680 + $0xe0] sm:$0xff]
        %v2908 = vld [vmem:[%s680 + $0xe8] sm:$0xff]
        %v2909 = vld [vmem:[%s680 + $0xf0] sm:$0xff]
        %v2910 = vld [vmem:[%s680 + $0xf8] sm:$0xff]
        %v2911 = vld [vmem:[%s683] sm:$0x1]
        %v2913 = vlaneseq
        %v2914 = vshrl.u32 %v2913, 7
        %v2915 = vsub.s32 0, %v2914
        %v2916 = vrot.slane %v2911, %v2915
        %2918 = vmatprep.subr.mxu0 0.0
        %2919 = vmatpush1.msra.mxu0 %v2879
        %2920 = vmatprep.subr.mxu0 0.0
        %2921 = vmatpush1.msra.mxu0 %v2880
        %2922 = vmatprep.subr.mxu0 0.0
        %2923 = vmatpush1.msra.mxu0 %v2881
        %2924 = vmatprep.subr.mxu0 0.0
        %2925 = vmatpush1.msra.mxu0 %v2882
        %2926 = vmatprep.subr.mxu0 0.0
        %2927 = vmatpush1.msra.mxu0 %v2883
        %2928 = vmatprep.subr.mxu0 0.0
        %2929 = vmatpush1.msra.mxu0 %v2884
        %2930 = vmatprep.subr.mxu0 0.0
        %2931 = vmatpush1.msra.mxu0 %v2885
        %2932 = vmatprep.subr.mxu0 0.0
        %2933 = vmatpush1.msra.mxu0 %v2886
        %2934 = vmatprep.subr.mxu0 0.0
        %2935 = vmatpush1.msra.mxu0 %v2887
        %2936 = vmatprep.subr.mxu0 0.0
        %2937 = vmatpush1.msra.mxu0 %v2888
        %2938 = vmatprep.subr.mxu0 0.0
        %2939 = vmatpush1.msra.mxu0 %v2889
        %2940 = vmatprep.subr.mxu0 0.0
        %2941 = vmatpush1.msra.mxu0 %v2890
        %2942 = vmatprep.subr.mxu0 0.0
        %2943 = vmatpush1.msra.mxu0 %v2891
        %2944 = vmatprep.subr.mxu0 0.0
        %2945 = vmatpush1.msra.mxu0 %v2892
        %2946 = vmatprep.subr.mxu0 0.0
        %2947 = vmatpush1.msra.mxu0 %v2893
        %2948 = vmatprep.subr.mxu0 0.0
        %2949 = vmatpush1.msra.mxu0 %v2894
        %2950 = vmatprep.subr.mxu0 0.0
        %2951 = vmatpush1.msra.mxu0 %v2895
        %2952 = vmatprep.subr.mxu0 0.0
        %2953 = vmatpush1.msra.mxu0 %v2896
        %2954 = vmatprep.subr.mxu0 0.0
        %2955 = vmatpush1.msra.mxu0 %v2897
        %2956 = vmatprep.subr.mxu0 0.0
        %2957 = vmatpush1.msra.mxu0 %v2898
        %2958 = vmatprep.subr.mxu0 0.0
        %2959 = vmatpush1.msra.mxu0 %v2899
        %2960 = vmatprep.subr.mxu0 0.0
        %2961 = vmatpush1.msra.mxu0 %v2900
        %2962 = vmatprep.subr.mxu0 0.0
        %2963 = vmatpush1.msra.mxu0 %v2901
        %2964 = vmatprep.subr.mxu0 0.0
        %2965 = vmatpush1.msra.mxu0 %v2902
        %2966 = vmatprep.subr.mxu0 0.0
        %2967 = vmatpush1.msra.mxu0 %v2903
        %2968 = vmatprep.subr.mxu0 0.0
        %2969 = vmatpush1.msra.mxu0 %v2904
        %2970 = vmatprep.subr.mxu0 0.0
        %2971 = vmatpush1.msra.mxu0 %v2905
        %2972 = vmatprep.subr.mxu0 0.0
        %2973 = vmatpush1.msra.mxu0 %v2906
        %2974 = vmatprep.subr.mxu0 0.0
        %2975 = vmatpush1.msra.mxu0 %v2907
        %2976 = vmatprep.subr.mxu0 0.0
        %2977 = vmatpush1.msra.mxu0 %v2908
        %2978 = vmatprep.subr.mxu0 0.0
        %2979 = vmatpush1.msra.mxu0 %v2909
        %2980 = vmatprep.subr.mxu0 0.0
        %2981 = vmatpush1.msra.mxu0 %v2910
        %2982 = vmatprep.mubr.f32.mxu0 %v2876
        %2983 = vmatmul.mubr.f32.gmra.mrb[0].mxu0 %v2875
        %v2984 = vpop.f32.mrb[0].mxu0
        %v2985 = vadd.f32 %v2916, %v2984
        %v2986 = vpop.f32.mrb[0].mxu0
        %2987 = vmatprep.mubr.f32.mxu0 %v2878
        %2988 = vmatmul.mubr.f32.gmra.mrb[0].mxu0 %v2877
        %v2989 = vpop.f32.mrb[0].mxu0
        %v2990 = vadd.f32 %v2916, %v2989
        %v2991 = vpop.f32.mrb[0].mxu0
        %2992 = vdwg.mxu0
        %v2993 = vld [vmem:[%s686] sm:$0x1]
        %v2994 = vld [vmem:[%s689] sm:$0x1]
        %2995 = vadd.xlane.f32.xlu0 %v2985
        %v2996 = vpop.xlane.xlu0 %2995
        %2997 = vadd.xlane.f32.xlu0 %v2990
        %v2998 = vpop.xlane.xlu0 %2997
        %v2999 = vmul.f32 %v2996, %v2717
        %v3000 = vmul.f32 %v2998, %v2717
        %v3001 = vsub.f32 %v2985, %v2999
        %v3002 = vsub.f32 %v2990, %v3000
        %v3003 = vmul.f32 %v3001, %v3001
        %v3004 = vmul.f32 %v3002, %v3002
        %3005 = vadd.xlane.f32.xlu0 %v3003
        %v3006 = vpop.xlane.xlu0 %3005
        %3007 = vadd.xlane.f32.xlu0 %v3004
        %v3008 = vpop.xlane.xlu0 %3007
        %v3009 = vmul.f32 %v3006, %v2717
        %v3010 = vmul.f32 %v3008, %v2717
        %v3011 = vadd.f32 %v3009, 1e-05
        %v3012 = vadd.f32 %v3010, 1e-05
        %v3013 = vrsqrt.pop %v3011
        %v3014 = vrsqrt.pop %v3012
        %v3015 = vmul.f32 %v3001, %v3013
        %v3016 = vmul.f32 %v3002, %v3014
        %v3018 = vlaneseq
        %v3019 = vshrl.u32 %v3018, 7
        %v3020 = vsub.s32 0, %v3019
        %v3021 = vrot.slane %v2993, %v3020
        %v3023 = vmul.f32 %v3015, %v3021
        %v3024 = vmul.f32 %v3016, %v3021
        %v3026 = vlaneseq
        %v3027 = vshrl.u32 %v3026, 7
        %v3028 = vsub.s32 0, %v3027
        %v3029 = vrot.slane %v2994, %v3028
        %v3031 = vadd.f32 %v3023, %v3029
        %v3032 = vadd.f32 %v3024, %v3029
        %v3033 = vadd.f32 %v2752, %v3031
        %v3034 = vadd.f32 %v2753, %v3032
        %3035 = vst [vmem:[#allocation2] sm:$0xff] %v3033
        %3036 = vst [vmem:[#allocation2 + $0x8] sm:$0xff] %v3034
        %3037 = vst [vmem:[%s635] sm:$0xff] %v3033
        %3038 = vst [vmem:[%s635 + $0x8] sm:$0xff] %v3034
        %s3039 = sand.u32 %s412, 1
        %s3040 = scalar_lea.sflag [#allocation4], %s3039
        %s3041 = sand.u32 %s412, 1
        %s3042 = smul.addr %s3041, 16
        %s3043 = scalar_lea.vmem [#allocation3], %s3042
        // Predicated region
        $region81: #{encoder_forward.1} parent=75 // pred_check
          %p3044 = pneg %p422
        $region82: #{encoder_forward.1} parent=75 // pred_check_branch
          %3046 = sbr.rel (%p3044) target = $region84
        $region83: #{encoder_forward.1} parent=75 // pred_region
          %s3048 = ssub.s32 256, 256
          %3049 = vsyncadd %s3040, %s3048
          %s3050 = smul.addr %s32, 2
          %s3051 = smul.addr %s3050, 128
          %s3052 = scalar_lea.hbm %s14, %s3051
          %s3053 = sshll.u32 %s3043, 4
          %s3054 = int_to_ptr.vmem [resolvable:$true] %s3053
          %3059 = dma.vmem_to_hbm [thread:$0]  %s3054, 256, %s3052, %s3040, 128, 128, 8
        $region84: #{encoder_forward.1} parent=75 // pred_fallthru
          _
      $region76: #{encoder_forward.1} parent=5 // pred_fallthru
        _
      %p3060 = scmp.le.s32.totalorder 2, %s23
      // Predicated region
      $region85: #{encoder_forward.1} parent=5 // pred_check
        %p3061 = pneg %p3060
      $region86: #{encoder_forward.1} parent=5 // pred_check_branch
        %3063 = sbr.rel (%p3061) target = $region88
      $region87: #{encoder_forward.1} parent=5 // pred_region
        %s3064 = ssub.s32 %s23, 2
        // Predicated region
        $region89: #{encoder_forward.1} parent=87 // pred_check
          %p3065 = pneg %p428
        $region90: #{encoder_forward.1} parent=87 // pred_check_branch
          %3067 = sbr.rel (%p3065) target = $region92
        $region91: #{encoder_forward.1} parent=87 // pred_region
          %s3068 = sand.u32 %s413, 1
          %s3069 = scalar_lea.sflag [#allocation4], %s3068
          %s3070 = sand.u32 %s413, 1
          %s3071 = smul.addr %s3070, 16
          %s3072 = scalar_lea.vmem [#allocation3], %s3071
          %3073 = dma.done %s3069, 256
        $region92: #{encoder_forward.1} parent=87 // pred_fallthru
          _
      $region88: #{encoder_forward.1} parent=5 // pred_fallthru
        _
    $region6: #{encoder_forward.1} parent=1 // loop_footer
      %s27 = sadd.s32 1, %s23
    $region7: #{encoder_forward.1} parent=1 // loop_footer_branch
      %22 = sbr.rel target = $region3
    $region8: #{encoder_forward.1} parent=1 // loop_exit
      _
    %3074 = vsyncpa [#allocation4], 1
    %s3075 = scalar_lea.sflag [#allocation4], 1
    %3076 = vsyncpa %s3075, 1

</llo_original>
